<compile_context>
chip_gen: v7x
topology: tpu7x:2x2x1
jax: 0.10.0
libtpu: 0.0.40
codegen_flags: <defaults>
</compile_context>

<pallas_src>
import functools
import math

import numpy as np

import jax
import jax.numpy as jnp
from jax.experimental import pallas as pl
from jax.experimental.pallas import tpu as pltpu

LANE = 128  # channel padding target (one vreg lane width)
VMEM_LIMIT = 32 * 1024 * 1024


def _round_up(x, m):
    return ((x + m - 1) // m) * m


# ----------------------------------------------------------------------------
# Pallas kernel 1: fused im2col conv (tap-outer, row-batched matmuls) with
#   bias + activation epilogue and a single selection/upsample matmul + store.
#   grid = (batch,); whole (flattened, padded) image + weights live in VMEM.
# ----------------------------------------------------------------------------
def _conv_kernel(x_ref, w_ref, b_ref, r_ref, o_ref, acc_ref, *, kh, kw, wp, m_in, act):
    # x_ref : (Hp_alloc*Wp, CinP) bf16    w_ref : (kh*kw, CinP, CoutP) bf16
    # b_ref : (1, CoutP) f32              r_ref : (M_out, M_in) bf16 (0/1 select)
    # o_ref : (M_out, CoutP)              acc_ref: VMEM scratch (M_in, CoutP) f32
    for i in range(kh):
        for j in range(kw):
            lhs = x_ref[pl.ds(i * wp + j, m_in), :]            # (M_in, CinP) bf16
            t = jnp.dot(lhs, w_ref[i * kw + j],
                        preferred_element_type=jnp.float32)
            if i == 0 and j == 0:
                acc_ref[...] = t
            else:
                acc_ref[...] += t

    acc = acc_ref[...] + b_ref[...]                            # one bias add / tile
    if act == "swish":
        acc = acc * jax.nn.sigmoid(acc)
    elif act == "lrelu":
        acc = jnp.where(acc > 0, acc, 0.2 * acc)
    elif act == "tanh":
        acc = jnp.tanh(acc)

    # Valid-column compaction (and optional fused 2x nearest upsample) as one
    # 0/1 selection matmul -> exactly one lane-dense store per tile.
    sel = acc.astype(o_ref.dtype)
    out = jnp.dot(r_ref[...].astype(o_ref.dtype), sel,
                  preferred_element_type=jnp.float32)
    o_ref[...] = out.astype(o_ref.dtype)


def _make_select_matrix(ho, wo, wp, up):
    """0/1 matrix mapping the flat (Ho*Wp) conv grid (with garbage columns) to the
    flat valid (and optionally 2x-upsampled) output grid."""
    upf = 2 if up else 1
    m_out, m_in = (upf * ho) * (upf * wo), ho * wp
    r = np.zeros((m_out, m_in), np.float32)
    yy, xx = np.meshgrid(np.arange(upf * ho), np.arange(upf * wo), indexing="ij")
    rows = (yy * (upf * wo) + xx).reshape(-1)
    cols = ((yy // upf) * wp + (xx // upf)).reshape(-1)
    r[rows, cols] = 1.0
    return jnp.asarray(r, jnp.bfloat16), upf


def _space_to_depth2(x):
    """(B, H, W, C) with H, W even -> (B, H/2, W/2, 4C); channel = (p*2+q)*C + c."""
    B, H, W, C = x.shape
    assert H % 2 == 0 and W % 2 == 0
    x = x.reshape(B, H // 2, 2, W // 2, 2, C)
    x = jnp.transpose(x, (0, 1, 3, 2, 4, 5))
    return x.reshape(B, H // 2, W // 2, 4 * C)


def conv2d(x, lp, *, act, up=False, out_dtype=jnp.bfloat16):
    """x: (B, H, W, C) -> (B, Ho', Wo', cout_p) out_dtype (lane-padded channels)."""
    x = x.astype(jnp.bfloat16)
    pad = lp["pad"]
    kh, kw, cin_p = lp["kh"], lp["kw"], lp["cin_p"]

    if lp["s2d"]:
        # stride-2 conv = stride-1 conv over a 2x2 space-to-depth of the REAL
        # channels (no lane-padding blow-up of the K dimension).
        x = x[..., :lp["cin_real"]]
        x = jnp.pad(x, ((0, 0), (pad, pad), (pad, pad), (0, 0)))
        x = _space_to_depth2(x)
        # one extra zero row keeps the in-kernel flat tap slices in bounds
        x = jnp.pad(x, ((0, 0), (0, 1), (0, 0), (0, cin_p - x.shape[-1])))
    else:
        assert x.shape[-1] <= cin_p
        x = jnp.pad(x, ((0, 0), (pad, pad + 1), (pad, pad), (0, cin_p - x.shape[-1])))

    B, hp1, wp, _ = x.shape
    hp = hp1 - 1                       # logical padded height (last row is slack)
    ho, wo = hp - kh + 1, wp - kw + 1
    m_in = ho * wp
    x_flat = x.reshape(B, hp1 * wp, cin_p)

    r_mat, upf = _make_select_matrix(ho, wo, wp, up)
    m_out = r_mat.shape[0]
    cout_p = lp["cout_p"]

    kernel = functools.partial(_conv_kernel, kh=kh, kw=kw, wp=wp, m_in=m_in, act=act)
    out_flat = pl.pallas_call(
        kernel,
        out_shape=jax.ShapeDtypeStruct((B, m_out, cout_p), out_dtype),
        grid=(B,),
        in_specs=[
            pl.BlockSpec((None, hp1 * wp, cin_p), lambda b: (b, 0, 0)),
            pl.BlockSpec(lp["w"].shape, lambda b: (0, 0, 0)),
            pl.BlockSpec(lp["b"].shape, lambda b: (0, 0)),
            pl.BlockSpec(r_mat.shape, lambda b: (0, 0)),
        ],
        out_specs=pl.BlockSpec((None, m_out, cout_p), lambda b: (b, 0, 0)),
        scratch_shapes=[pltpu.VMEM((m_in, cout_p), jnp.float32)],
        compiler_params=pltpu.CompilerParams(
            dimension_semantics=("parallel",),
            vmem_limit_bytes=VMEM_LIMIT),
    )(x_flat, lp["w"], lp["b"], r_mat)

    return out_flat.reshape(B, ho * upf, wo * upf, cout_p)


# ----------------------------------------------------------------------------
# Pallas kernel 2: fused quant_conv (1x1) -> vector quantizer -> post_quant_conv.
# ----------------------------------------------------------------------------
def _vq_fused_kernel(z_ref, wq_ref, bq_ref, et_ref, e2_ref, e_ref,
                     wpq_ref, bpq_ref, z_out_ref, zq_out_ref):
    zin = z_ref[...].astype(jnp.float32)                              # (tm, CP)
    # quant_conv (1x1)
    z = jnp.dot(zin, wq_ref[...], preferred_element_type=jnp.float32) + bq_ref[...]
    z_out_ref[...] = z
    # nearest codebook vector: argmin_k ||z - e_k||^2 (||z||^2 dropped: constant/row)
    cross = jnp.dot(z, et_ref[...], preferred_element_type=jnp.float32)  # (tm, Kc)
    d = e2_ref[...] - 2.0 * cross
    kc = d.shape[1]
    dmin = jnp.min(d, axis=1, keepdims=True)
    iota = jax.lax.broadcasted_iota(jnp.int32, d.shape, 1)
    idx = jnp.min(jnp.where(d <= dmin, iota, kc), axis=1, keepdims=True)
    one_hot = (iota == idx).astype(jnp.float32)
    zq = jnp.dot(one_hot, e_ref[...], preferred_element_type=jnp.float32)  # gather
    # post_quant_conv (1x1)
    zq = jnp.dot(zq, wpq_ref[...], preferred_element_type=jnp.float32) + bpq_ref[...]
    zq_out_ref[...] = zq


def vq_fused(z_flat, prep, *, tm=256):
    """z_flat: (M, LANE) -> (z, z_q) both (M, LANE) f32."""
    M, CP = z_flat.shape
    tm = min(tm, M)
    zspec = pl.BlockSpec((tm, CP), lambda i: (i, 0))

    def full(a):
        nd = a.ndim
        return pl.BlockSpec(a.shape, lambda i: (0,) * nd)

    return pl.pallas_call(
        _vq_fused_kernel,
        out_shape=(jax.ShapeDtypeStruct((M, CP), jnp.float32),
                   jax.ShapeDtypeStruct((M, CP), jnp.float32)),
        grid=(pl.cdiv(M, tm),),
        in_specs=[zspec, full(prep["wq"]), full(prep["bq"]), full(prep["et"]),
                  full(prep["e2"]), full(prep["e"]), full(prep["wpq"]),
                  full(prep["bpq"])],
        out_specs=(zspec, zspec),
        compiler_params=pltpu.CompilerParams(
            dimension_semantics=("parallel",),
            vmem_limit_bytes=VMEM_LIMIT),
    )(z_flat, prep["wq"], prep["bq"], prep["et"], prep["e2"], prep["e"],
      prep["wpq"], prep["bpq"])


# ----------------------------------------------------------------------------
# Deterministic parameter construction (synthetic weights) + kernel-side prep
# ----------------------------------------------------------------------------
def _conv_init(key, cout, cin, kh, kw):
    k1, k2 = jax.random.split(key)
    fan_in = cin * kh * kw
    w = jax.random.normal(k1, (cout, cin, kh, kw), jnp.float32) / jnp.sqrt(fan_in)
    b = 0.01 * jax.random.normal(k2, (cout,), jnp.float32)
    return w, b


def init_vqgan_params(key, *, in_channels, f, latent_dim, num_codebook_vectors):
    n_down = int(round(math.log2(f)))
    keys = iter(jax.random.split(key, 32))
    p = {}

    enc = []
    ch = 32
    enc.append(_conv_init(next(keys), ch, in_channels, 3, 3))
    cin = ch
    for _ in range(n_down):
        cout = min(2 * cin, 64)
        enc.append(_conv_init(next(keys), cout, cin, 3, 3))
        cin = cout
    enc.append(_conv_init(next(keys), latent_dim, cin, 3, 3))
    p["encoder"] = enc
    bottleneck_ch = cin

    dec = []
    dec.append(_conv_init(next(keys), bottleneck_ch, latent_dim, 3, 3))
    c = bottleneck_ch
    for _ in range(n_down):
        cout = max(c // 2, 32)
        dec.append(_conv_init(next(keys), cout, c, 3, 3))
        c = cout
    dec.append(_conv_init(next(keys), in_channels, c, 3, 3))
    p["decoder"] = dec

    p["quant_conv"] = _conv_init(next(keys), latent_dim, latent_dim, 1, 1)
    p["post_quant_conv"] = _conv_init(next(keys), latent_dim, latent_dim, 1, 1)

    lim = 1.0 / num_codebook_vectors
    p["codebook"] = jax.random.uniform(
        next(keys), (num_codebook_vectors, latent_dim), jnp.float32, -lim, lim)

    p["discriminator"] = [
        _conv_init(next(keys), 32, in_channels, 4, 4),   # stride 2
        _conv_init(next(keys), 64, 32, 4, 4),            # stride 2
        _conv_init(next(keys), 1, 64, 4, 4),             # stride 1
    ]
    return p


def _prep_conv(w_oihw, b, *, pad, stride=1):
    """-> layer dict: bf16 (kh*kw, CinP, CoutP) weights, f32 bias, static meta."""
    cout, cin, kh, kw = w_oihw.shape
    cout_p = _round_up(cout, LANE)
    if stride == 1:
        cin_p = _round_up(cin, LANE)
        w = jnp.transpose(w_oihw, (2, 3, 1, 0))                   # (kh,kw,cin,cout)
        w = jnp.pad(w, ((0, 0), (0, 0), (0, cin_p - cin), (0, cout_p - cout)))
        w = w.reshape(kh * kw, cin_p, cout_p).astype(jnp.bfloat16)
        meta = dict(kh=kh, kw=kw, s2d=False)
    else:
        assert stride == 2
        # stride-2 kxk conv rewritten as a stride-1 ceil(k/2)^2 conv over a 2x2
        # space-to-depth of the REAL channels (group stride = cin, not cin_p).
        kh2, kw2 = (kh + 1) // 2, (kw + 1) // 2
        cin_p = _round_up(4 * cin, LANE)
        wt = jnp.transpose(w_oihw, (2, 3, 1, 0))                  # (kh,kw,cin,cout)
        w_new = jnp.zeros((kh2, kw2, cin_p, cout_p), jnp.float32)
        for i in range(kh):
            for j in range(kw):
                g = (i % 2) * 2 + (j % 2)
                w_new = w_new.at[i // 2, j // 2, g * cin:(g + 1) * cin, :cout].set(wt[i, j])
        w = w_new.reshape(kh2 * kw2, cin_p, cout_p).astype(jnp.bfloat16)
        meta = dict(kh=kh2, kw=kw2, s2d=True)
    bp = jnp.pad(b, (0, cout_p - cout)).reshape(1, cout_p).astype(jnp.float32)
    return dict(w=w, b=bp, pad=pad, cin_real=cin, cin_p=cin_p,
                cout_real=cout, cout_p=cout_p, **meta)


def _prep_1x1(w_oihw, b):
    cout, cin = w_oihw.shape[0], w_oihw.shape[1]
    m = jnp.transpose(w_oihw[:, :, 0, 0], (1, 0))                 # (cin, cout)
    m = jnp.pad(m, ((0, LANE - cin), (0, LANE - cout))).astype(jnp.float32)
    bp = jnp.pad(b, (0, LANE - cout)).reshape(1, LANE).astype(jnp.float32)
    return m, bp


def _prep_vq(quant_conv, post_quant_conv, codebook):
    wq, bq = _prep_1x1(*quant_conv)
    wpq, bpq = _prep_1x1(*post_quant_conv)
    e = codebook.astype(jnp.float32)                              # (Kc, D)
    d_lat = e.shape[1]
    e_pad = jnp.pad(e, ((0, 0), (0, LANE - d_lat)))               # (Kc, LANE)
    return dict(wq=wq, bq=bq, wpq=wpq, bpq=bpq, e=e_pad,
                et=jnp.transpose(e_pad, (1, 0)),                  # (LANE, Kc)
                e2=jnp.sum(e * e, axis=1).reshape(1, -1))         # (1, Kc)


def prepare_params(p):
    enc = p["encoder"]
    enc_prep = [_prep_conv(*enc[0], pad=1, stride=1)]
    enc_prep += [_prep_conv(w, b, pad=1, stride=2) for (w, b) in enc[1:-1]]
    enc_prep += [_prep_conv(*enc[-1], pad=1, stride=1)]
    dec_prep = [_prep_conv(w, b, pad=1, stride=1) for (w, b) in p["decoder"]]
    disc_prep = [_prep_conv(*p["discriminator"][0], pad=1, stride=2),
                 _prep_conv(*p["discriminator"][1], pad=1, stride=2),
                 _prep_conv(*p["discriminator"][2], pad=1, stride=1)]
    return {"enc": enc_prep, "dec": dec_prep, "disc": disc_prep,
            "vq": _prep_vq(p["quant_conv"], p["post_quant_conv"], p["codebook"])}


# ----------------------------------------------------------------------------
# Full VQGAN forward (mirrors the PyTorch VQGAN.forward)
# ----------------------------------------------------------------------------
def vqgan_forward(prep, x_nchw, *, latent_dim, in_channels):
    B = x_nchw.shape[0]
    x = jnp.transpose(x_nchw, (0, 2, 3, 1)).astype(jnp.bfloat16)      # NCHW -> NHWC

    # ----- encoder -----------------------------------------------------------
    h = conv2d(x, prep["enc"][0], act="swish")
    for lp in prep["enc"][1:-1]:
        h = conv2d(h, lp, act="swish")
    z_enc = conv2d(h, prep["enc"][-1], act="none", out_dtype=jnp.float32)

    # ----- quant_conv + quantizer + post_quant_conv (single fused kernel) -----
    Bz, Hl, Wl, CP = z_enc.shape
    z_flat, zq_flat = vq_fused(z_enc.reshape(Bz * Hl * Wl, CP), prep["vq"])
    z = z_flat.reshape(Bz, Hl, Wl, CP)
    z_q = zq_flat.reshape(Bz, Hl, Wl, CP)

    # ----- decoder (2x nearest upsample fused into the preceding conv store) --
    dec = prep["dec"]
    n_up = len(dec) - 2
    h = z_q
    for k_i in range(len(dec) - 1):
        h = conv2d(h, dec[k_i], act="swish", up=(k_i < n_up))
    x_hat = conv2d(h, dec[-1], act="tanh")                            # (B, H, W, 128)

    # ----- discriminator on fake + real in one batched bf16 pass --------------
    # TODO(synk): could alias x_hat into a preallocated (2B,...) buffer via
    # input_output_aliases on the final decoder conv to skip this concat.
    d_in = jnp.concatenate([x_hat[..., :in_channels], x[..., :in_channels]], axis=0)
    dh = conv2d(d_in, prep["disc"][0], act="lrelu")
    dh = conv2d(dh, prep["disc"][1], act="lrelu")
    d_all = conv2d(dh, prep["disc"][2], act="none")
    d_fake, d_real = d_all[:B], d_all[B:]

    def to_nchw(t, c):
        return jnp.transpose(t[..., :c], (0, 3, 1, 2)).astype(jnp.float32)

    # VQData(x_hat, FeaturesData(z, z_q), DiscrminatedData(d_fake, d_real))
    return {
        "x_hat": to_nchw(x_hat, in_channels),
        "features": {"z": to_nchw(z, latent_dim), "z_q": to_nchw(z_q, latent_dim)},
        "discriminated": {"d_fake": to_nchw(d_fake, 1), "d_real": to_nchw(d_real, 1)},
    }


# ----------------------------------------------------------------------------
# Pure-JAX references (for correctness checks only)
# ----------------------------------------------------------------------------
def _act_ref(y, act):
    if act == "swish":
        return y * jax.nn.sigmoid(y)
    if act == "lrelu":
        return jnp.where(y > 0, y, 0.2 * y)
    if act == "tanh":
        return jnp.tanh(y)
    return y


def _conv_ref(x_nhwc, w_oihw, b, *, stride, pad, act, up=False):
    w_hwio = jnp.transpose(w_oihw, (2, 3, 1, 0))
    y = jax.lax.conv_general_dilated(
        x_nhwc, w_hwio, (stride, stride), ((pad, pad), (pad, pad)),
        dimension_numbers=("NHWC", "HWIO", "NHWC"))
    y = _act_ref(y + b, act)
    if up:
        y = jnp.repeat(jnp.repeat(y, 2, axis=1), 2, axis=2)
    return y


def vqgan_reference(params, x_nchw, *, latent_dim):
    x = jnp.transpose(x_nchw, (0, 2, 3, 1)).astype(jnp.float32)
    enc = params["encoder"]
    h = _conv_ref(x, *enc[0], stride=1, pad=1, act="swish")
    for (w, b) in enc[1:-1]:
        h = _conv_ref(h, w, b, stride=2, pad=1, act="swish")
    z = _conv_ref(h, *enc[-1], stride=1, pad=1, act="none")
    wq, bq = params["quant_conv"]
    z = _conv_ref(z, wq, bq, stride=1, pad=0, act="none")
    e = params["codebook"]
    zf = z.reshape(-1, latent_dim)
    d = (jnp.sum(zf * zf, 1, keepdims=True) - 2.0 * zf @ e.T + jnp.sum(e * e, 1)[None])
    z_q = e[jnp.argmin(d, axis=1)].reshape(z.shape)
    wpq, bpq = params["post_quant_conv"]
    z_q = _conv_ref(z_q, wpq, bpq, stride=1, pad=0, act="none")
    dec = params["decoder"]
    n_up = len(dec) - 2
    h = z_q
    for k_i in range(len(dec) - 1):
        h = _conv_ref(h, *dec[k_i], stride=1, pad=1, act="swish", up=(k_i < n_up))
    x_hat = _conv_ref(h, *dec[-1], stride=1, pad=1, act="tanh")

    def disc(t):
        dh = _conv_ref(t, *params["discriminator"][0], stride=2, pad=1, act="lrelu")
        dh = _conv_ref(dh, *params["discriminator"][1], stride=2, pad=1, act="lrelu")
        return _conv_ref(dh, *params["discriminator"][2], stride=1, pad=1, act="none")

    def to_nchw(t):
        return jnp.transpose(t, (0, 3, 1, 2))

    return {
        "x_hat": to_nchw(x_hat),
        "features": {"z": to_nchw(z), "z_q": to_nchw(z_q)},
        "discriminated": {"d_fake": to_nchw(disc(x_hat)), "d_real": to_nchw(disc(x))},
    }


def _rel_err(got, want):
    got = jnp.asarray(got, jnp.float32)
    want = jnp.asarray(want, jnp.float32)
    return float(jnp.linalg.norm(got - want) / (jnp.linalg.norm(want) + 1e-12))


def _check(name, got, want, tol):
    err = _rel_err(got, want)
    assert err < tol, f"{name}: relative error {err:.4g} >= {tol}"


def _unit_checks(key):
    """Tight checks (f32 outputs, bf16-rounded operands) of the risky mappings."""
    ks = jax.random.split(key, 12)

    def rb(k, shape, scale=1.0):  # bf16-representable values, kept in f32
        v = scale * jax.random.normal(k, shape, jnp.float32)
        return v.astype(jnp.bfloat16).astype(jnp.float32)

    # (a) stride-1 3x3 conv + swish  (flat tap matmuls + selection store)
    x = rb(ks[0], (2, 10, 12, 5))
    w, b = rb(ks[1], (7, 5, 3, 3), 0.2), rb(ks[2], (7,), 0.1)
    lp = _prep_conv(w, b, pad=1, stride=1)
    got = conv2d(x, lp, act="swish", out_dtype=jnp.float32)[..., :7]
    _check("conv_s1", got, _conv_ref(x, w, b, stride=1, pad=1, act="swish"), 1e-3)

    # (b) stride-2 4x4 conv + lrelu  (space-to-depth weight rearrangement)
    x = rb(ks[3], (2, 16, 16, 3))
    w, b = rb(ks[4], (6, 3, 4, 4), 0.2), rb(ks[5], (6,), 0.1)
    lp = _prep_conv(w, b, pad=1, stride=2)
    got = conv2d(x, lp, act="lrelu", out_dtype=jnp.float32)[..., :6]
    _check("conv_s2_s2d", got, _conv_ref(x, w, b, stride=2, pad=1, act="lrelu"), 1e-3)

    # (c) stride-1 3x3 conv + swish + fused 2x nearest upsample
    x = rb(ks[6], (2, 8, 8, 4))
    w, b = rb(ks[7], (5, 4, 3, 3), 0.2), rb(ks[8], (5,), 0.1)
    lp = _prep_conv(w, b, pad=1, stride=1)
    got = conv2d(x, lp, act="swish", up=True, out_dtype=jnp.float32)[..., :5]
    _check("conv_up2", got,
           _conv_ref(x, w, b, stride=1, pad=1, act="swish", up=True), 1e-3)

    # (d) fused quant_conv -> VQ -> post_quant_conv (well-separated codebook)
    dl = 3
    z3 = jax.random.normal(ks[9], (2, 4, 4, dl), jnp.float32)
    wq = _conv_init(ks[10], dl, dl, 1, 1)
    wpq = _conv_init(ks[11], dl, dl, 1, 1)
    cb = jax.random.normal(jax.random.fold_in(key, 99), (64, dl), jnp.float32)
    vq_prep = _prep_vq(wq, wpq, cb)
    z_pad = jnp.pad(z3, ((0, 0), (0, 0), (0, 0), (0, LANE - dl)))
    zf, zqf = vq_fused(z_pad.reshape(-1, LANE), vq_prep)
    zf_ref = (z3.reshape(-1, dl) @ wq[0][:, :, 0, 0].T) + wq[1]
    dist = (jnp.sum(zf_ref * zf_ref, 1, keepdims=True)
            - 2.0 * zf_ref @ cb.T + jnp.sum(cb * cb, 1)[None])
    zq_ref = cb[jnp.argmin(dist, axis=1)] @ wpq[0][:, :, 0, 0].T + wpq[1]
    _check("vq_fused_z", zf[:, :dl], zf_ref, 1e-4)
    _check("vq_fused_zq", zqf[:, :dl], zq_ref, 1e-4)


if __name__ == "__main__":
    key = jax.random.PRNGKey(0)
    k_params, k_x, k_unit = jax.random.split(key, 3)

    IN_CHANNELS = 3
    F = 4                      # downsampling factor (16x16 image -> 4x4 latent)
    LATENT_DIM = 3
    NUM_CODEBOOK = 1024

    # unit checks of the index-mapping-heavy pieces (tight tolerances)
    _unit_checks(k_unit)

    params = init_vqgan_params(
        k_params, in_channels=IN_CHANNELS, f=F,
        latent_dim=LATENT_DIM, num_codebook_vectors=NUM_CODEBOOK)
    prep = prepare_params(params)

    x = jax.random.normal(k_x, (2, IN_CHANNELS, 16, 16), jnp.float32)

    fwd = jax.jit(lambda inp: vqgan_forward(prep, inp, latent_dim=LATENT_DIM,
                                            in_channels=IN_CHANNELS))
    out = jax.block_until_ready(fwd(x))

    # shape / finiteness sanity checks
    assert out["x_hat"].shape == (2, IN_CHANNELS, 16, 16)
    assert out["features"]["z"].shape == (2, LATENT_DIM, 4, 4)
    assert out["features"]["z_q"].shape == (2, LATENT_DIM, 4, 4)
    assert out["discriminated"]["d_fake"].shape == (2, 1, 3, 3)
    assert out["discriminated"]["d_real"].shape == (2, 1, 3, 3)
    for leaf in jax.tree_util.tree_leaves(out):
        assert bool(jnp.all(jnp.isfinite(leaf)))

    # loose end-to-end check vs. a pure-JAX f32 reference (activations are bf16;
    # z_q is extra-loose because the spec codebook spans only ~2/1024, so bf16
    # perturbations legitimately flip near-tie code selections).
    ref = vqgan_reference(params, x, latent_dim=LATENT_DIM)
    _check("x_hat", out["x_hat"], ref["x_hat"], 0.25)
    _check("z", out["features"]["z"], ref["features"]["z"], 0.25)
    _check("z_q", out["features"]["z_q"], ref["features"]["z_q"], 0.6)
    _check("d_fake", out["discriminated"]["d_fake"], ref["discriminated"]["d_fake"], 0.3)
    _check("d_real", out["discriminated"]["d_real"], ref["discriminated"]["d_real"], 0.3)

    print("KERNEL_OK")
</pallas_src>

<mosaic_0001>
module attributes {stable_mosaic.version = 11 : i64} {
  func.func @_conv_kernel(%arg0: i32, %arg1: memref<1x182x128xbf16, #tpu.memory_space<vmem>>, %arg2: memref<9x128x128xbf16, #tpu.memory_space<vmem>>, %arg3: memref<1x128xf32, #tpu.memory_space<vmem>>, %arg4: memref<120x140xbf16, #tpu.memory_space<vmem>>, %arg5: memref<1x120x128xf32, #tpu.memory_space<vmem>>, %arg6: memref<140x128xf32, #tpu.memory_space<vmem>>) attributes {dimension_semantics = [#tpu.dimension_semantics<parallel>], iteration_bounds = array<i64: 2>, scalar_prefetch = 0 : i64, scratch_operands = 1 : i64, tpu.core_type = #tpu.core_type<tc>, window_params = [{transform_indices = @transform_0, window_bounds = array<i64: 1, 182, 128>}, {pipeline_mode = #tpu.pipeline_mode<synchronous>, transform_indices = @transform_1, window_bounds = array<i64: 9, 128, 128>}, {pipeline_mode = #tpu.pipeline_mode<synchronous>, transform_indices = @transform_2, window_bounds = array<i64: 1, 128>}, {pipeline_mode = #tpu.pipeline_mode<synchronous>, transform_indices = @transform_3, window_bounds = array<i64: 120, 140>}, {transform_indices = @transform_4, window_bounds = array<i64: 1, 120, 128>}]} {
    %c0 = arith.constant 0 : index
    %c0_0 = arith.constant 0 : index
    %c0_1 = arith.constant 0 : index
    %0 = vector.load %arg1[%c0, %c0_0, %c0_1] : memref<1x182x128xbf16, #tpu.memory_space<vmem>>, vector<1x140x128xbf16>
    %1 = vector.shape_cast %0 : vector<1x140x128xbf16> to vector<140x128xbf16>
    %c0_2 = arith.constant 0 : index
    %c0_3 = arith.constant 0 : index
    %c0_4 = arith.constant 0 : index
    %2 = vector.load %arg2[%c0_2, %c0_3, %c0_4] : memref<9x128x128xbf16, #tpu.memory_space<vmem>>, vector<1x128x128xbf16>
    %3 = vector.shape_cast %2 : vector<1x128x128xbf16> to vector<128x128xbf16>
    %cst = arith.constant dense<0.000000e+00> : vector<140x128xf32>
    %4 = tpu.matmul %1, %3, %cst {dimension_numbers = #tpu.dot_dimension_numbers<[1], [0], [0], [1], [0, 0, 1, 1], [], []>} : vector<140x128xbf16>, vector<128x128xbf16>, vector<140x128xf32> -> vector<140x128xf32>
    %c0_5 = arith.constant 0 : index
    %c0_6 = arith.constant 0 : index
    %5 = vector.load %arg6[%c0_5, %c0_6] : memref<140x128xf32, #tpu.memory_space<vmem>>, vector<140x128xf32>
    tpu.vector_store %arg6[%c0_5, %c0_6], %4 {strides = array<i32>} : memref<140x128xf32, #tpu.memory_space<vmem>>, vector<140x128xf32>,
    %c0_7 = arith.constant 0 : index
    %c1 = arith.constant 1 : index
    %c0_8 = arith.constant 0 : index
    %6 = vector.load %arg1[%c0_7, %c1, %c0_8] : memref<1x182x128xbf16, #tpu.memory_space<vmem>>, vector<1x140x128xbf16>
    %7 = vector.shape_cast %6 : vector<1x140x128xbf16> to vector<140x128xbf16>
    %c1_9 = arith.constant 1 : index
    %c0_10 = arith.constant 0 : index
    %c0_11 = arith.constant 0 : index
    %8 = vector.load %arg2[%c1_9, %c0_10, %c0_11] : memref<9x128x128xbf16, #tpu.memory_space<vmem>>, vector<1x128x128xbf16>
    %9 = vector.shape_cast %8 : vector<1x128x128xbf16> to vector<128x128xbf16>
    %cst_12 = arith.constant dense<0.000000e+00> : vector<140x128xf32>
    %10 = tpu.matmul %7, %9, %cst_12 {dimension_numbers = #tpu.dot_dimension_numbers<[1], [0], [0], [1], [0, 0, 1, 1], [], []>} : vector<140x128xbf16>, vector<128x128xbf16>, vector<140x128xf32> -> vector<140x128xf32>
    %c0_13 = arith.constant 0 : index
    %c0_14 = arith.constant 0 : index
    %11 = vector.load %arg6[%c0_13, %c0_14] : memref<140x128xf32, #tpu.memory_space<vmem>>, vector<140x128xf32>
    %12 = arith.addf %11, %10 : vector<140x128xf32>
    %c0_15 = arith.constant 0 : index
    %c0_16 = arith.constant 0 : index
    %13 = vector.load %arg6[%c0_15, %c0_16] : memref<140x128xf32, #tpu.memory_space<vmem>>, vector<140x128xf32>
    tpu.vector_store %arg6[%c0_15, %c0_16], %12 {strides = array<i32>} : memref<140x128xf32, #tpu.memory_space<vmem>>, vector<140x128xf32>,
    %c0_17 = arith.constant 0 : index
    %c2 = arith.constant 2 : index
    %c0_18 = arith.constant 0 : index
    %14 = vector.load %arg1[%c0_17, %c2, %c0_18] : memref<1x182x128xbf16, #tpu.memory_space<vmem>>, vector<1x140x128xbf16>
    %15 = vector.shape_cast %14 : vector<1x140x128xbf16> to vector<140x128xbf16>
    %c2_19 = arith.constant 2 : index
    %c0_20 = arith.constant 0 : index
    %c0_21 = arith.constant 0 : index
    %16 = vector.load %arg2[%c2_19, %c0_20, %c0_21] : memref<9x128x128xbf16, #tpu.memory_space<vmem>>, vector<1x128x128xbf16>
    %17 = vector.shape_cast %16 : vector<1x128x128xbf16> to vector<128x128xbf16>
    %cst_22 = arith.constant dense<0.000000e+00> : vector<140x128xf32>
    %18 = tpu.matmul %15, %17, %cst_22 {dimension_numbers = #tpu.dot_dimension_numbers<[1], [0], [0], [1], [0, 0, 1, 1], [], []>} : vector<140x128xbf16>, vector<128x128xbf16>, vector<140x128xf32> -> vector<140x128xf32>
    %c0_23 = arith.constant 0 : index
    %c0_24 = arith.constant 0 : index
    %19 = vector.load %arg6[%c0_23, %c0_24] : memref<140x128xf32, #tpu.memory_space<vmem>>, vector<140x128xf32>
    %20 = arith.addf %19, %18 : vector<140x128xf32>
    %c0_25 = arith.constant 0 : index
    %c0_26 = arith.constant 0 : index
    %21 = vector.load %arg6[%c0_25, %c0_26] : memref<140x128xf32, #tpu.memory_space<vmem>>, vector<140x128xf32>
    tpu.vector_store %arg6[%c0_25, %c0_26], %20 {strides = array<i32>} : memref<140x128xf32, #tpu.memory_space<vmem>>, vector<140x128xf32>,
    %c0_27 = arith.constant 0 : index
    %c14 = arith.constant 14 : index
    %c0_28 = arith.constant 0 : index
    %22 = vector.load %arg1[%c0_27, %c14, %c0_28] : memref<1x182x128xbf16, #tpu.memory_space<vmem>>, vector<1x140x128xbf16>
    %23 = vector.shape_cast %22 : vector<1x140x128xbf16> to vector<140x128xbf16>
    %c3 = arith.constant 3 : index
    %c0_29 = arith.constant 0 : index
    %c0_30 = arith.constant 0 : index
    %24 = vector.load %arg2[%c3, %c0_29, %c0_30] : memref<9x128x128xbf16, #tpu.memory_space<vmem>>, vector<1x128x128xbf16>
    %25 = vector.shape_cast %24 : vector<1x128x128xbf16> to vector<128x128xbf16>
    %cst_31 = arith.constant dense<0.000000e+00> : vector<140x128xf32>
    %26 = tpu.matmul %23, %25, %cst_31 {dimension_numbers = #tpu.dot_dimension_numbers<[1], [0], [0], [1], [0, 0, 1, 1], [], []>} : vector<140x128xbf16>, vector<128x128xbf16>, vector<140x128xf32> -> vector<140x128xf32>
    %c0_32 = arith.constant 0 : index
    %c0_33 = arith.constant 0 : index
    %27 = vector.load %arg6[%c0_32, %c0_33] : memref<140x128xf32, #tpu.memory_space<vmem>>, vector<140x128xf32>
    %28 = arith.addf %27, %26 : vector<140x128xf32>
    %c0_34 = arith.constant 0 : index
    %c0_35 = arith.constant 0 : index
    %29 = vector.load %arg6[%c0_34, %c0_35] : memref<140x128xf32, #tpu.memory_space<vmem>>, vector<140x128xf32>
    tpu.vector_store %arg6[%c0_34, %c0_35], %28 {strides = array<i32>} : memref<140x128xf32, #tpu.memory_space<vmem>>, vector<140x128xf32>,
    %c0_36 = arith.constant 0 : index
    %c15 = arith.constant 15 : index
    %c0_37 = arith.constant 0 : index
    %30 = vector.load %arg1[%c0_36, %c15, %c0_37] : memref<1x182x128xbf16, #tpu.memory_space<vmem>>, vector<1x140x128xbf16>
    %31 = vector.shape_cast %30 : vector<1x140x128xbf16> to vector<140x128xbf16>
    %c4 = arith.constant 4 : index
    %c0_38 = arith.constant 0 : index
    %c0_39 = arith.constant 0 : index
    %32 = vector.load %arg2[%c4, %c0_38, %c0_39] : memref<9x128x128xbf16, #tpu.memory_space<vmem>>, vector<1x128x128xbf16>
    %33 = vector.shape_cast %32 : vector<1x128x128xbf16> to vector<128x128xbf16>
    %cst_40 = arith.constant dense<0.000000e+00> : vector<140x128xf32>
    %34 = tpu.matmul %31, %33, %cst_40 {dimension_numbers = #tpu.dot_dimension_numbers<[1], [0], [0], [1], [0, 0, 1, 1], [], []>} : vector<140x128xbf16>, vector<128x128xbf16>, vector<140x128xf32> -> vector<140x128xf32>
    %c0_41 = arith.constant 0 : index
    %c0_42 = arith.constant 0 : index
    %35 = vector.load %arg6[%c0_41, %c0_42] : memref<140x128xf32, #tpu.memory_space<vmem>>, vector<140x128xf32>
    %36 = arith.addf %35, %34 : vector<140x128xf32>
    %c0_43 = arith.constant 0 : index
    %c0_44 = arith.constant 0 : index
    %37 = vector.load %arg6[%c0_43, %c0_44] : memref<140x128xf32, #tpu.memory_space<vmem>>, vector<140x128xf32>
    tpu.vector_store %arg6[%c0_43, %c0_44], %36 {strides = array<i32>} : memref<140x128xf32, #tpu.memory_space<vmem>>, vector<140x128xf32>,
    %c0_45 = arith.constant 0 : index
    %c16 = arith.constant 16 : index
    %c0_46 = arith.constant 0 : index
    %38 = vector.load %arg1[%c0_45, %c16, %c0_46] : memref<1x182x128xbf16, #tpu.memory_space<vmem>>, vector<1x140x128xbf16>
    %39 = vector.shape_cast %38 : vector<1x140x128xbf16> to vector<140x128xbf16>
    %c5 = arith.constant 5 : index
    %c0_47 = arith.constant 0 : index
    %c0_48 = arith.constant 0 : index
    %40 = vector.load %arg2[%c5, %c0_47, %c0_48] : memref<9x128x128xbf16, #tpu.memory_space<vmem>>, vector<1x128x128xbf16>
    %41 = vector.shape_cast %40 : vector<1x128x128xbf16> to vector<128x128xbf16>
    %cst_49 = arith.constant dense<0.000000e+00> : vector<140x128xf32>
    %42 = tpu.matmul %39, %41, %cst_49 {dimension_numbers = #tpu.dot_dimension_numbers<[1], [0], [0], [1], [0, 0, 1, 1], [], []>} : vector<140x128xbf16>, vector<128x128xbf16>, vector<140x128xf32> -> vector<140x128xf32>
    %c0_50 = arith.constant 0 : index
    %c0_51 = arith.constant 0 : index
    %43 = vector.load %arg6[%c0_50, %c0_51] : memref<140x128xf32, #tpu.memory_space<vmem>>, vector<140x128xf32>
    %44 = arith.addf %43, %42 : vector<140x128xf32>
    %c0_52 = arith.constant 0 : index
    %c0_53 = arith.constant 0 : index
    %45 = vector.load %arg6[%c0_52, %c0_53] : memref<140x128xf32, #tpu.memory_space<vmem>>, vector<140x128xf32>
    tpu.vector_store %arg6[%c0_52, %c0_53], %44 {strides = array<i32>} : memref<140x128xf32, #tpu.memory_space<vmem>>, vector<140x128xf32>,
    %c0_54 = arith.constant 0 : index
    %c28 = arith.constant 28 : index
    %c0_55 = arith.constant 0 : index
    %46 = vector.load %arg1[%c0_54, %c28, %c0_55] : memref<1x182x128xbf16, #tpu.memory_space<vmem>>, vector<1x140x128xbf16>
    %47 = vector.shape_cast %46 : vector<1x140x128xbf16> to vector<140x128xbf16>
    %c6 = arith.constant 6 : index
    %c0_56 = arith.constant 0 : index
    %c0_57 = arith.constant 0 : index
    %48 = vector.load %arg2[%c6, %c0_56, %c0_57] : memref<9x128x128xbf16, #tpu.memory_space<vmem>>, vector<1x128x128xbf16>
    %49 = vector.shape_cast %48 : vector<1x128x128xbf16> to vector<128x128xbf16>
    %cst_58 = arith.constant dense<0.000000e+00> : vector<140x128xf32>
    %50 = tpu.matmul %47, %49, %cst_58 {dimension_numbers = #tpu.dot_dimension_numbers<[1], [0], [0], [1], [0, 0, 1, 1], [], []>} : vector<140x128xbf16>, vector<128x128xbf16>, vector<140x128xf32> -> vector<140x128xf32>
    %c0_59 = arith.constant 0 : index
    %c0_60 = arith.constant 0 : index
    %51 = vector.load %arg6[%c0_59, %c0_60] : memref<140x128xf32, #tpu.memory_space<vmem>>, vector<140x128xf32>
    %52 = arith.addf %51, %50 : vector<140x128xf32>
    %c0_61 = arith.constant 0 : index
    %c0_62 = arith.constant 0 : index
    %53 = vector.load %arg6[%c0_61, %c0_62] : memref<140x128xf32, #tpu.memory_space<vmem>>, vector<140x128xf32>
    tpu.vector_store %arg6[%c0_61, %c0_62], %52 {strides = array<i32>} : memref<140x128xf32, #tpu.memory_space<vmem>>, vector<140x128xf32>,
    %c0_63 = arith.constant 0 : index
    %c29 = arith.constant 29 : index
    %c0_64 = arith.constant 0 : index
    %54 = vector.load %arg1[%c0_63, %c29, %c0_64] : memref<1x182x128xbf16, #tpu.memory_space<vmem>>, vector<1x140x128xbf16>
    %55 = vector.shape_cast %54 : vector<1x140x128xbf16> to vector<140x128xbf16>
    %c7 = arith.constant 7 : index
    %c0_65 = arith.constant 0 : index
    %c0_66 = arith.constant 0 : index
    %56 = vector.load %arg2[%c7, %c0_65, %c0_66] : memref<9x128x128xbf16, #tpu.memory_space<vmem>>, vector<1x128x128xbf16>
    %57 = vector.shape_cast %56 : vector<1x128x128xbf16> to vector<128x128xbf16>
    %cst_67 = arith.constant dense<0.000000e+00> : vector<140x128xf32>
    %58 = tpu.matmul %55, %57, %cst_67 {dimension_numbers = #tpu.dot_dimension_numbers<[1], [0], [0], [1], [0, 0, 1, 1], [], []>} : vector<140x128xbf16>, vector<128x128xbf16>, vector<140x128xf32> -> vector<140x128xf32>
    %c0_68 = arith.constant 0 : index
    %c0_69 = arith.constant 0 : index
    %59 = vector.load %arg6[%c0_68, %c0_69] : memref<140x128xf32, #tpu.memory_space<vmem>>, vector<140x128xf32>
    %60 = arith.addf %59, %58 : vector<140x128xf32>
    %c0_70 = arith.constant 0 : index
    %c0_71 = arith.constant 0 : index
    %61 = vector.load %arg6[%c0_70, %c0_71] : memref<140x128xf32, #tpu.memory_space<vmem>>, vector<140x128xf32>
    tpu.vector_store %arg6[%c0_70, %c0_71], %60 {strides = array<i32>} : memref<140x128xf32, #tpu.memory_space<vmem>>, vector<140x128xf32>,
    %c0_72 = arith.constant 0 : index
    %c30 = arith.constant 30 : index
    %c0_73 = arith.constant 0 : index
    %62 = vector.load %arg1[%c0_72, %c30, %c0_73] : memref<1x182x128xbf16, #tpu.memory_space<vmem>>, vector<1x140x128xbf16>
    %63 = vector.shape_cast %62 : vector<1x140x128xbf16> to vector<140x128xbf16>
    %c8 = arith.constant 8 : index
    %c0_74 = arith.constant 0 : index
    %c0_75 = arith.constant 0 : index
    %64 = vector.load %arg2[%c8, %c0_74, %c0_75] : memref<9x128x128xbf16, #tpu.memory_space<vmem>>, vector<1x128x128xbf16>
    %65 = vector.shape_cast %64 : vector<1x128x128xbf16> to vector<128x128xbf16>
    %cst_76 = arith.constant dense<0.000000e+00> : vector<140x128xf32>
    %66 = tpu.matmul %63, %65, %cst_76 {dimension_numbers = #tpu.dot_dimension_numbers<[1], [0], [0], [1], [0, 0, 1, 1], [], []>} : vector<140x128xbf16>, vector<128x128xbf16>, vector<140x128xf32> -> vector<140x128xf32>
    %c0_77 = arith.constant 0 : index
    %c0_78 = arith.constant 0 : index
    %67 = vector.load %arg6[%c0_77, %c0_78] : memref<140x128xf32, #tpu.memory_space<vmem>>, vector<140x128xf32>
    %68 = arith.addf %67, %66 : vector<140x128xf32>
    %c0_79 = arith.constant 0 : index
    %c0_80 = arith.constant 0 : index
    %69 = vector.load %arg6[%c0_79, %c0_80] : memref<140x128xf32, #tpu.memory_space<vmem>>, vector<140x128xf32>
    tpu.vector_store %arg6[%c0_79, %c0_80], %68 {strides = array<i32>} : memref<140x128xf32, #tpu.memory_space<vmem>>, vector<140x128xf32>,
    %c0_81 = arith.constant 0 : index
    %c0_82 = arith.constant 0 : index
    %70 = vector.load %arg6[%c0_81, %c0_82] : memref<140x128xf32, #tpu.memory_space<vmem>>, vector<140x128xf32>
    %c0_83 = arith.constant 0 : index
    %c0_84 = arith.constant 0 : index
    %71 = vector.load %arg3[%c0_83, %c0_84] : memref<1x128xf32, #tpu.memory_space<vmem>>, vector<1x128xf32>
    %72 = vector.broadcast %71 : vector<1x128xf32> to vector<140x128xf32>
    %73 = arith.addf %70, %72 : vector<140x128xf32>
    %74 = arith.negf %73 : vector<140x128xf32>
    %75 = math.exp %74 : vector<140x128xf32>
    %cst_85 = arith.constant 1.000000e+00 : f32
    %76 = vector.broadcast %cst_85 : f32 to vector<140x128xf32>
    %77 = arith.addf %76, %75 : vector<140x128xf32>
    %78 = arith.divf %76, %77 : vector<140x128xf32>
    %79 = arith.mulf %73, %78 : vector<140x128xf32>
    %c0_86 = arith.constant 0 : index
    %c0_87 = arith.constant 0 : index
    %80 = vector.load %arg4[%c0_86, %c0_87] : memref<120x140xbf16, #tpu.memory_space<vmem>>, vector<120x140xbf16>
    %81 = arith.extf %80 : vector<120x140xbf16> to vector<120x140xf32>
    %cst_88 = arith.constant dense<0.000000e+00> : vector<120x128xf32>
    %82 = tpu.matmul %81, %79, %cst_88 {dimension_numbers = #tpu.dot_dimension_numbers<[1], [0], [0], [1], [0, 0, 1, 1], [], []>} : vector<120x140xf32>, vector<140x128xf32>, vector<120x128xf32> -> vector<120x128xf32>
    %c0_89 = arith.constant 0 : index
    %c0_90 = arith.constant 0 : index
    %c0_91 = arith.constant 0 : index
    %83 = vector.load %arg5[%c0_89, %c0_90, %c0_91] : memref<1x120x128xf32, #tpu.memory_space<vmem>>, vector<1x120x128xf32>
    %84 = vector.shape_cast %83 : vector<1x120x128xf32> to vector<120x128xf32>
    %85 = vector.shape_cast %82 : vector<120x128xf32> to vector<1x120x128xf32>
    tpu.vector_store %arg5[%c0_89, %c0_90, %c0_91], %85 {strides = array<i32>} : memref<1x120x128xf32, #tpu.memory_space<vmem>>, vector<1x120x128xf32>,
    return
  }
  func.func @transform_0(%arg0: i32) -> (i32, i32, i32) {
    %c0_i32 = arith.constant 0 : i32
    %c0_i32_0 = arith.constant 0 : i32
    %c0_i32_1 = arith.constant 0 : i32
    return %arg0, %c0_i32, %c0_i32_0 : i32, i32, i32
  }
  func.func @transform_1(%arg0: i32) -> (i32, i32, i32) {
    %c0_i32 = arith.constant 0 : i32
    %c0_i32_0 = arith.constant 0 : i32
    %c0_i32_1 = arith.constant 0 : i32
    %c0_i32_2 = arith.constant 0 : i32
    return %c0_i32, %c0_i32_0, %c0_i32_1 : i32, i32, i32
  }
  func.func @transform_2(%arg0: i32) -> (i32, i32) {
    %c0_i32 = arith.constant 0 : i32
    %c0_i32_0 = arith.constant 0 : i32
    %c0_i32_1 = arith.constant 0 : i32
    return %c0_i32, %c0_i32_0 : i32, i32
  }
  func.func @transform_3(%arg0: i32) -> (i32, i32) {
    %c0_i32 = arith.constant 0 : i32
    %c0_i32_0 = arith.constant 0 : i32
    %c0_i32_1 = arith.constant 0 : i32
    return %c0_i32, %c0_i32_0 : i32, i32
  }
  func.func @transform_4(%arg0: i32) -> (i32, i32, i32) {
    %c0_i32 = arith.constant 0 : i32
    %c0_i32_0 = arith.constant 0 : i32
    %c0_i32_1 = arith.constant 0 : i32
    return %arg0, %c0_i32, %c0_i32_0 : i32, i32, i32
  }
}

</mosaic_0001>

<llo_original>
// kernel: tpu_custom_call.1
$region0: #{tpu_custom_call.1}
  #allocation0 [shape = 'u32[]', space=smem, size = 0x4, offset = 0x4, fixed_abs, tag = 'smem constant byte address 0x4 - core index']
  #allocation1 [shape = 'u32[144,128]{1,0:T(1,128)}', space=vmem, size = 0x12000, scoped, tag = 'internal scratch']
  #allocation2 [shape = 'f32[140,128]{1,0:T(8,128)}', space=vmem, size = 0x12000, scoped, tag = 'scratch operand']
  %s0 = inlined_call_operand.vmem [shape: bf16[2,182,128], index: 0, kind: input, shape index: {}]
  %s1 = inlined_call_operand.hbm [shape: bf16[9,128,128], index: 1, kind: input, shape index: {}]
  %s2 = inlined_call_operand.vmem [shape: f32[1,128], index: 2, kind: input, shape index: {}]
  %s3 = inlined_call_operand.vmem [shape: bf16[120,140], index: 3, kind: input, shape index: {}]
  %s4 = inlined_call_operand.hbm [shape: f32[2,120,128], index: 4, kind: output, shape index: {}]
  %s5 = sld [smem:[#allocation0]]
  $region53: #{tpu_custom_call.1} parent=0
    _
  %s7 = ssub.s32 1, %s5
  %s8 = scalar_select 0, %s7, %s5
  $region1: #{tpu_custom_call.1} parent=0
    #allocation3 [shape = 'u8[294912]{0}', space=vmem, size = 0x48000, scoped, tag = 'input window, operand 1, single buffered']
    #allocation4 [shape = 's32[2]{0}', space=sflag, size = 0x8, scoped, tag = 'scoped memory for tpu_custom_call.1']
    #allocation5 [shape = 's32[2]{0}', space=sflag, size = 0x8, scoped, tag = 'scoped memory for tpu_custom_call.1']
    #allocation6 [shape = 'u8[122880]{0}', space=vmem, size = 0x1e000, scoped, tag = 'output window, operand 0']
    %9 = vsyncpa [#allocation4], 0
    %10 = vsyncpa [#allocation5], 0
    %s11 = scalar_lea.sflag [#allocation5], 1
    %12 = vsyncpa %s11, 0
    loop: start=0, step=1, limit=4
    $region2: #{tpu_custom_call.1} parent=1 // loop_pre_header
      _
    $region3: #{tpu_custom_call.1} parent=1 // loop_header
      %s14 = sphi 0, %s18
      %p15 = scmp.ge.s32.totalorder %s14, 4
      %s24 = sphi 0, %s26
      %s27 = sphi 0, %s24
      %s28 = sphi 0, %s27
      %s44 = sphi 0, %s28
      %s48 = sphi 0, %s48
      %s50 = sphi 0, %s48
      %s51 = sphi 0, %s50
      %s65 = sphi 0, %s51
      %s69 = sphi 0, %s69
      %s71 = sphi 0, %s69
      %s72 = sphi 0, %s71
      %s86 = sphi 0, %s72
      %s90 = sphi 0, %s90
      %s92 = sphi 0, %s90
      %s93 = sphi 0, %s92
      %s107 = sphi 0, %s93
      %s113 = sphi 0, %s115
      %s116 = sphi 0, %s113
      %s117 = sphi 0, %s116
      %s133 = sphi 0, %s117
    $region4: #{tpu_custom_call.1} parent=1 // loop_header_branch
      %17 = sbr.rel (%p15) target = $region8
    $region5: #{tpu_custom_call.1} parent=1 // loop_body
      %s19 = ssub.s32 %s14, 1
      %s20 = ssub.s32 %s14, 2
      %s21 = sadd.s32 %s14, 1
      %s22 = ssub.s32 %s14, %s21
      %p23 = scmp.eq.s32.totalorder %s22, 0
      %s25 = sadd.s32 %s24, 1
      %s26 = scalar_select %p23, %s24, %s25
      %p29 = pneg %p23
      %p30 = scmp.eq.s32.totalorder %s14, 1
      %p31 = por %p29, %p30
      %p32 = scmp.ne.s32.totalorder %s24, %s27
      %p33 = scmp.eq.s32.totalorder %s14, 0
      %p34 = por %p32, %p33
      %p35 = scmp.ne.s32.totalorder %s24, %s27
      %p36 = scmp.eq.s32.totalorder %s19, 1
      %p37 = por %p35, %p36
      %p38 = scmp.ne.s32.totalorder %s27, %s28
      %p39 = scmp.eq.s32.totalorder %s19, 0
      %p40 = por %p38, %p39
      %p41 = scmp.ne.s32.totalorder %s27, %s28
      %p42 = scmp.eq.s32.totalorder %s20, 1
      %p43 = por %p41, %p42
      %p45 = scmp.ne.s32.totalorder %s28, %s44
      %p46 = scmp.eq.s32.totalorder %s20, 0
      %p47 = por %p45, %p46
      %s49 = sadd.s32 %s48, 1
      %p52 = scmp.eq.s32.totalorder %s14, 1
      %p53 = scmp.ne.s32.totalorder %s48, %s50
      %p54 = scmp.eq.s32.totalorder %s14, 0
      %p55 = por %p53, %p54
      %p56 = scmp.ne.s32.totalorder %s48, %s50
      %p57 = scmp.eq.s32.totalorder %s19, 1
      %p58 = por %p56, %p57
      %p59 = scmp.ne.s32.totalorder %s50, %s51
      %p60 = scmp.eq.s32.totalorder %s19, 0
      %p61 = por %p59, %p60
      %p62 = scmp.ne.s32.totalorder %s50, %s51
      %p63 = scmp.eq.s32.totalorder %s20, 1
      %p64 = por %p62, %p63
      %p66 = scmp.ne.s32.totalorder %s51, %s65
      %p67 = scmp.eq.s32.totalorder %s20, 0
      %p68 = por %p66, %p67
      %s70 = sadd.s32 %s69, 1
      %p73 = scmp.eq.s32.totalorder %s14, 1
      %p74 = scmp.ne.s32.totalorder %s69, %s71
      %p75 = scmp.eq.s32.totalorder %s14, 0
      %p76 = por %p74, %p75
      %p77 = scmp.ne.s32.totalorder %s69, %s71
      %p78 = scmp.eq.s32.totalorder %s19, 1
      %p79 = por %p77, %p78
      %p80 = scmp.ne.s32.totalorder %s71, %s72
      %p81 = scmp.eq.s32.totalorder %s19, 0
      %p82 = por %p80, %p81
      %p83 = scmp.ne.s32.totalorder %s71, %s72
      %p84 = scmp.eq.s32.totalorder %s20, 1
      %p85 = por %p83, %p84
      %p87 = scmp.ne.s32.totalorder %s72, %s86
      %p88 = scmp.eq.s32.totalorder %s20, 0
      %p89 = por %p87, %p88
      %s91 = sadd.s32 %s90, 1
      %p94 = scmp.eq.s32.totalorder %s14, 1
      %p95 = scmp.ne.s32.totalorder %s90, %s92
      %p96 = scmp.eq.s32.totalorder %s14, 0
      %p97 = por %p95, %p96
      %p98 = scmp.ne.s32.totalorder %s90, %s92
      %p99 = scmp.eq.s32.totalorder %s19, 1
      %p100 = por %p98, %p99
      %p101 = scmp.ne.s32.totalorder %s92, %s93
      %p102 = scmp.eq.s32.totalorder %s19, 0
      %p103 = por %p101, %p102
      %p104 = scmp.ne.s32.totalorder %s92, %s93
      %p105 = scmp.eq.s32.totalorder %s20, 1
      %p106 = por %p104, %p105
      %p108 = scmp.ne.s32.totalorder %s93, %s107
      %p109 = scmp.eq.s32.totalorder %s20, 0
      %p110 = por %p108, %p109
      %s111 = ssub.s32 %s14, %s21
      %p112 = scmp.eq.s32.totalorder %s111, 0
      %s114 = sadd.s32 %s113, 1
      %s115 = scalar_select %p112, %s113, %s114
      %p118 = pneg %p112
      %p119 = scmp.eq.s32.totalorder %s14, 1
      %p120 = por %p118, %p119
      %p121 = scmp.ne.s32.totalorder %s113, %s116
      %p122 = scmp.eq.s32.totalorder %s14, 0
      %p123 = por %p121, %p122
      %p124 = scmp.ne.s32.totalorder %s113, %s116
      %p125 = scmp.eq.s32.totalorder %s19, 1
      %p126 = por %p124, %p125
      %p127 = scmp.ne.s32.totalorder %s116, %s117
      %p128 = scmp.eq.s32.totalorder %s19, 0
      %p129 = por %p127, %p128
      %p130 = scmp.ne.s32.totalorder %s116, %s117
      %p131 = scmp.eq.s32.totalorder %s20, 1
      %p132 = por %p130, %p131
      %p134 = scmp.ne.s32.totalorder %s117, %s133
      %p135 = scmp.eq.s32.totalorder %s20, 0
      %p136 = por %p134, %p135
      %p137 = scmp.le.s32.totalorder 1, %s14
      %p138 = scmp.lt.s32.totalorder %s14, 3
      %p139 = pnand %p137, %p138
      %p140 = pneg %p139
      // Predicated region
      $region9: #{tpu_custom_call.1} parent=5 // pred_check
        _
      $region10: #{tpu_custom_call.1} parent=5 // pred_check_branch
        %142 = sbr.rel (%p139) target = $region12
      $region11: #{tpu_custom_call.1} parent=5 // pred_region
        %s143 = ssub.s32 %s14, 1
        // Predicated region
        $region13: #{tpu_custom_call.1} parent=11 // pred_check
          %p144 = pneg %p61
        $region14: #{tpu_custom_call.1} parent=11 // pred_check_branch
          %146 = sbr.rel (%p144) target = $region16
        $region15: #{tpu_custom_call.1} parent=11 // pred_region
          %s148 = ssub.s32 9216, 9216
          %149 = vsyncadd [#allocation4], %s148
          %s150 = sshll.u32 [#allocation3], 4
          %s151 = int_to_ptr.vmem [resolvable:$true] %s150
          %156 = dma.hbm_to_vmem [thread:$0]  %s1, 9216, %s151, [#allocation4], 64, 64, 4
        $region16: #{tpu_custom_call.1} parent=11 // pred_fallthru
          _
        // Predicated region
        $region17: #{tpu_custom_call.1} parent=11 // pred_check
          %p157 = pneg %p82
        $region18: #{tpu_custom_call.1} parent=11 // pred_check_branch
          %159 = sbr.rel (%p157) target = $region20
        $region19: #{tpu_custom_call.1} parent=11 // pred_region
          _
        $region20: #{tpu_custom_call.1} parent=11 // pred_fallthru
          _
        // Predicated region
        $region21: #{tpu_custom_call.1} parent=11 // pred_check
          %p160 = pneg %p103
        $region22: #{tpu_custom_call.1} parent=11 // pred_check_branch
          %162 = sbr.rel (%p160) target = $region24
        $region23: #{tpu_custom_call.1} parent=11 // pred_region
          _
        $region24: #{tpu_custom_call.1} parent=11 // pred_fallthru
          _
      $region12: #{tpu_custom_call.1} parent=5 // pred_fallthru
        _
      %p163 = scmp.lt.s32.totalorder %s14, 2
      // Predicated region
      $region25: #{tpu_custom_call.1} parent=5 // pred_check
        %p164 = pneg %p163
      $region26: #{tpu_custom_call.1} parent=5 // pred_check_branch
        %166 = sbr.rel (%p164) target = $region28
      $region27: #{tpu_custom_call.1} parent=5 // pred_region
        // Predicated region
        $region29: #{tpu_custom_call.1} parent=27 // pred_check
          %p167 = pneg %p34
        $region30: #{tpu_custom_call.1} parent=27 // pred_check_branch
          %169 = sbr.rel (%p167) target = $region32
        $region31: #{tpu_custom_call.1} parent=27 // pred_region
          %p170 = scmp.lt.s32.totalorder %s14, 1
          %s171 = scalar_select %p170, %s14, 1
          %s172 = smul.addr %s171, 23
          %s173 = smul.addr %s172, 4
          %s174 = scalar_lea.vmem %s0, %s173
        $region32: #{tpu_custom_call.1} parent=27 // pred_fallthru
          _
      $region28: #{tpu_custom_call.1} parent=5 // pred_fallthru
        _
      %p175 = scmp.le.s32.totalorder 1, %s14
      %p176 = scmp.lt.s32.totalorder %s14, 3
      %p177 = pnand %p175, %p176
      %p178 = pneg %p177
      // Predicated region
      $region33: #{tpu_custom_call.1} parent=5 // pred_check
        _
      $region34: #{tpu_custom_call.1} parent=5 // pred_check_branch
        %180 = sbr.rel (%p177) target = $region36
      $region35: #{tpu_custom_call.1} parent=5 // pred_region
        %s181 = ssub.s32 %s14, 1
        // Predicated region
        $region37: #{tpu_custom_call.1} parent=35 // pred_check
          %p182 = pneg %p61
        $region38: #{tpu_custom_call.1} parent=35 // pred_check_branch
          %184 = sbr.rel (%p182) target = $region40
        $region39: #{tpu_custom_call.1} parent=35 // pred_region
          %185 = dma.done [#allocation4], 9216
        $region40: #{tpu_custom_call.1} parent=35 // pred_fallthru
          _
        %p186 = scmp.lt.s32.totalorder %s19, 1
        %s187 = scalar_select %p186, %s19, 1
        %s188 = smul.addr %s187, 23
        %s189 = smul.addr %s188, 4
        %s190 = scalar_lea.vmem %s0, %s189
        %p191 = pneg %p40
        %p192 = pneg %p37
        %p193 = pneg %p61
        %p194 = pneg %p58
        %p195 = pneg %p82
        %p196 = pneg %p79
        %p197 = pneg %p103
        %p198 = pneg %p100
        %p199 = pneg %p129
        %p200 = pneg %p126
        %s201 = sand.u32 %s116, 1
        %s202 = scalar_lea.sflag [#allocation5], %s201
        %s203 = sand.u32 %s116, 1
        %s204 = smul.addr %s203, 120
        %s205 = scalar_lea.vmem [#allocation6], %s204
        %p206 = scmp.lt.s32.totalorder %s19, 1
        %s207 = scalar_select %p206, %s19, 1
        %s208 = smul.addr %s207, 23
        %s209 = smul.addr %s208, 4
        %s210 = scalar_lea.vmem %s0, %s209
        %v212 = vld [vmem:[%s210] sm:$0xf]
        %v213 = vld [vmem:[%s210 + $0x4] sm:$0xf]
        %v214 = vld [vmem:[%s210 + $0x8] sm:$0xf]
        %v215 = vld [vmem:[%s210 + $0xc] sm:$0xf]
        %v216 = vld [vmem:[%s210 + $0x10] sm:$0xf]
        %v217 = vld [vmem:[%s210 + $0x14] sm:$0xf]
        %v218 = vld [vmem:[%s210 + $0x18] sm:$0xf]
        %v219 = vld [vmem:[%s210 + $0x1c] sm:$0xf]
        %v220 = vld [vmem:[%s210 + $0x20] sm:$0xf]
        %v221 = vld [vmem:[%s210 + $0x24] sm:$0xf]
        %v222 = vld [vmem:[%s210 + $0x28] sm:$0xf]
        %v223 = vld [vmem:[%s210 + $0x2c] sm:$0xf]
        %v224 = vld [vmem:[%s210 + $0x30] sm:$0xf]
        %v225 = vld [vmem:[%s210 + $0x34] sm:$0xf]
        %v226 = vld [vmem:[%s210 + $0x38] sm:$0xf]
        %v227 = vld [vmem:[%s210 + $0x3c] sm:$0xf]
        %v228 = vld [vmem:[%s210 + $0x40] sm:$0xf]
        %v229 = vld [vmem:[%s210 + $0x44] sm:$0x3]
        %v230 = vld [vmem:[#allocation3] sm:$0xf]
        %v231 = vld [vmem:[#allocation3 + $0x4] sm:$0xf]
        %v232 = vld [vmem:[#allocation3 + $0x8] sm:$0xf]
        %v233 = vld [vmem:[#allocation3 + $0xc] sm:$0xf]
        %v234 = vld [vmem:[#allocation3 + $0x10] sm:$0xf]
        %v235 = vld [vmem:[#allocation3 + $0x14] sm:$0xf]
        %v236 = vld [vmem:[#allocation3 + $0x18] sm:$0xf]
        %v237 = vld [vmem:[#allocation3 + $0x1c] sm:$0xf]
        %v238 = vld [vmem:[#allocation3 + $0x20] sm:$0xf]
        %v239 = vld [vmem:[#allocation3 + $0x24] sm:$0xf]
        %v240 = vld [vmem:[#allocation3 + $0x28] sm:$0xf]
        %v241 = vld [vmem:[#allocation3 + $0x2c] sm:$0xf]
        %v242 = vld [vmem:[#allocation3 + $0x30] sm:$0xf]
        %v243 = vld [vmem:[#allocation3 + $0x34] sm:$0xf]
        %v244 = vld [vmem:[#allocation3 + $0x38] sm:$0xf]
        %v245 = vld [vmem:[#allocation3 + $0x3c] sm:$0xf]
        %v264 = vunpack.c.l.b16 %v212
        %v265 = vunpack.c.l.b16 %v213
        %v266 = vunpack.c.l.b16 %v214
        %v267 = vunpack.c.l.b16 %v215
        %v268 = vunpack.c.l.b16 %v216
        %v269 = vunpack.c.l.b16 %v217
        %v270 = vunpack.c.l.b16 %v218
        %v271 = vunpack.c.l.b16 %v219
        %v272 = vunpack.c.l.b16 %v220
        %v273 = vunpack.c.l.b16 %v221
        %v274 = vunpack.c.l.b16 %v222
        %v275 = vunpack.c.l.b16 %v223
        %v276 = vunpack.c.l.b16 %v224
        %v277 = vunpack.c.l.b16 %v225
        %v278 = vunpack.c.l.b16 %v226
        %v279 = vunpack.c.l.b16 %v227
        %v280 = vunpack.c.l.b16 %v228
        %v281 = vunpack.c.l.b16 %v229
        %v282 = vpack.c.b16 %v265, %v264
        %v283 = vpack.c.b16 %v267, %v266
        %v284 = vpack.c.b16 %v269, %v268
        %v285 = vpack.c.b16 %v271, %v270
        %v286 = vpack.c.b16 %v273, %v272
        %v287 = vpack.c.b16 %v275, %v274
        %v288 = vpack.c.b16 %v277, %v276
        %v289 = vpack.c.b16 %v279, %v278
        %v290 = vpack.c.b16 %v281, %v280
        %v316 = vunpack.c.l.b16 %v230
        %v317 = vunpack.c.l.b16 %v231
        %v318 = vunpack.c.l.b16 %v232
        %v319 = vunpack.c.l.b16 %v233
        %v320 = vunpack.c.l.b16 %v234
        %v321 = vunpack.c.l.b16 %v235
        %v322 = vunpack.c.l.b16 %v236
        %v323 = vunpack.c.l.b16 %v237
        %v324 = vunpack.c.l.b16 %v238
        %v325 = vunpack.c.l.b16 %v239
        %v326 = vunpack.c.l.b16 %v240
        %v327 = vunpack.c.l.b16 %v241
        %v328 = vunpack.c.l.b16 %v242
        %v329 = vunpack.c.l.b16 %v243
        %v330 = vunpack.c.l.b16 %v244
        %v331 = vunpack.c.l.b16 %v245
        %v332 = vpack.c.b16 %v317, %v316
        %v333 = vpack.c.b16 %v319, %v318
        %v334 = vpack.c.b16 %v321, %v320
        %v335 = vpack.c.b16 %v323, %v322
        %v336 = vpack.c.b16 %v325, %v324
        %v337 = vpack.c.b16 %v327, %v326
        %v338 = vpack.c.b16 %v329, %v328
        %v339 = vpack.c.b16 %v331, %v330
        %348 = vmatprep.subr.bf16.mxu0 0
        %349 = vmatpush1.bf16.msra.mxu0 %v332
        %350 = vmatprep.subr.bf16.mxu0 0
        %351 = vmatpush1.bf16.msra.mxu0 %v333
        %352 = vmatprep.subr.bf16.mxu0 0
        %353 = vmatpush1.bf16.msra.mxu0 %v334
        %354 = vmatprep.subr.bf16.mxu0 0
        %355 = vmatpush1.bf16.msra.mxu0 %v335
        %356 = vmatprep.subr.bf16.mxu0 0
        %357 = vmatpush1.bf16.msra.mxu0 %v336
        %358 = vmatprep.subr.bf16.mxu0 0
        %359 = vmatpush1.bf16.msra.mxu0 %v337
        %360 = vmatprep.subr.bf16.mxu0 0
        %361 = vmatpush1.bf16.msra.mxu0 %v338
        %362 = vmatprep.subr.bf16.mxu0 0
        %363 = vmatpush1.bf16.msra.mxu0 %v339
        %364 = vmatprep.subr.bf16.mxu0 0
        %365 = vmatpush1.bf16.msra.mxu0 0
        %366 = vmatprep.subr.bf16.mxu0 0
        %367 = vmatpush1.bf16.msra.mxu0 0
        %368 = vmatprep.subr.bf16.mxu0 0
        %369 = vmatpush1.bf16.msra.mxu0 0
        %370 = vmatprep.subr.bf16.mxu0 0
        %371 = vmatpush1.bf16.msra.mxu0 0
        %372 = vmatprep.subr.bf16.mxu0 0
        %373 = vmatpush1.bf16.msra.mxu0 0
        %374 = vmatprep.subr.bf16.mxu0 0
        %375 = vmatpush1.bf16.msra.mxu0 0
        %376 = vmatprep.subr.bf16.mxu0 0
        %377 = vmatpush1.bf16.msra.mxu0 0
        %378 = vmatprep.subr.bf16.mxu0 0
        %379 = vmatpush1.bf16.msra.mxu0 0
        %380 = vmatprep.mubr.bf16.mxu0 0
        %381 = vmatmul.mubr.bf16.gmra.mrb[0].mxu0 %v282
        %v382 = vpop.f32.mrb[0].mxu0
        %v383 = vadd.f32 0.0, %v382
        %v384 = vpop.f32.mrb[0].mxu0
        %v385 = vpop.f32.mrb[0].mxu0
        %v386 = vadd.f32 0.0, %v385
        %v387 = vpop.f32.mrb[0].mxu0
        %388 = vmatprep.mubr.bf16.mxu0 0
        %389 = vmatmul.mubr.bf16.gmra.mrb[0].mxu0 %v283
        %v390 = vpop.f32.mrb[0].mxu0
        %v391 = vadd.f32 0.0, %v390
        %v392 = vpop.f32.mrb[0].mxu0
        %v393 = vpop.f32.mrb[0].mxu0
        %v394 = vadd.f32 0.0, %v393
        %v395 = vpop.f32.mrb[0].mxu0
        %396 = vmatprep.mubr.bf16.mxu0 0
        %397 = vmatmul.mubr.bf16.gmra.mrb[0].mxu0 %v284
        %v398 = vpop.f32.mrb[0].mxu0
        %v399 = vadd.f32 0.0, %v398
        %v400 = vpop.f32.mrb[0].mxu0
        %v401 = vpop.f32.mrb[0].mxu0
        %v402 = vadd.f32 0.0, %v401
        %v403 = vpop.f32.mrb[0].mxu0
        %404 = vmatprep.mubr.bf16.mxu0 0
        %405 = vmatmul.mubr.bf16.gmra.mrb[0].mxu0 %v285
        %v406 = vpop.f32.mrb[0].mxu0
        %v407 = vadd.f32 0.0, %v406
        %v408 = vpop.f32.mrb[0].mxu0
        %v409 = vpop.f32.mrb[0].mxu0
        %v410 = vadd.f32 0.0, %v409
        %v411 = vpop.f32.mrb[0].mxu0
        %412 = vmatprep.mubr.bf16.mxu0 0
        %413 = vmatmul.mubr.bf16.gmra.mrb[0].mxu0 %v286
        %v414 = vpop.f32.mrb[0].mxu0
        %v415 = vadd.f32 0.0, %v414
        %v416 = vpop.f32.mrb[0].mxu0
        %v417 = vpop.f32.mrb[0].mxu0
        %v418 = vadd.f32 0.0, %v417
        %v419 = vpop.f32.mrb[0].mxu0
        %420 = vmatprep.mubr.bf16.mxu0 0
        %421 = vmatmul.mubr.bf16.gmra.mrb[0].mxu0 %v287
        %v422 = vpop.f32.mrb[0].mxu0
        %v423 = vadd.f32 0.0, %v422
        %v424 = vpop.f32.mrb[0].mxu0
        %v425 = vpop.f32.mrb[0].mxu0
        %v426 = vadd.f32 0.0, %v425
        %v427 = vpop.f32.mrb[0].mxu0
        %428 = vmatprep.mubr.bf16.mxu0 0
        %429 = vmatmul.mubr.bf16.gmra.mrb[0].mxu0 %v288
        %v430 = vpop.f32.mrb[0].mxu0
        %v431 = vadd.f32 0.0, %v430
        %v432 = vpop.f32.mrb[0].mxu0
        %v433 = vpop.f32.mrb[0].mxu0
        %v434 = vadd.f32 0.0, %v433
        %v435 = vpop.f32.mrb[0].mxu0
        %436 = vmatprep.mubr.bf16.mxu0 0
        %437 = vmatmul.mubr.bf16.gmra.mrb[0].mxu0 %v289
        %v438 = vpop.f32.mrb[0].mxu0
        %v439 = vadd.f32 0.0, %v438
        %v440 = vpop.f32.mrb[0].mxu0
        %v441 = vpop.f32.mrb[0].mxu0
        %v442 = vadd.f32 0.0, %v441
        %v443 = vpop.f32.mrb[0].mxu0
        %444 = vmatprep.mubr.bf16.mxu0 0
        %445 = vmatmul.mubr.bf16.gmra.mrb[0].mxu0 %v290
        %v446 = vpop.f32.mrb[0].mxu0
        %v447 = vadd.f32 0.0, %v446
        %v448 = vpop.f32.mrb[0].mxu0
        %v449 = vpop.f32.mrb[0].mxu0
        %v450 = vadd.f32 0.0, %v449
        %v451 = vpop.f32.mrb[0].mxu0
        %452 = vdwg.mxu0
        %453 = vst [vmem:[#allocation2] sm:$0xff] %v383
        %454 = vst [vmem:[#allocation2 + $0x8] sm:$0xff] %v386
        %455 = vst [vmem:[#allocation2 + $0x10] sm:$0xff] %v391
        %456 = vst [vmem:[#allocation2 + $0x18] sm:$0xff] %v394
        %457 = vst [vmem:[#allocation2 + $0x20] sm:$0xff] %v399
        %458 = vst [vmem:[#allocation2 + $0x28] sm:$0xff] %v402
        %459 = vst [vmem:[#allocation2 + $0x30] sm:$0xff] %v407
        %460 = vst [vmem:[#allocation2 + $0x38] sm:$0xff] %v410
        %461 = vst [vmem:[#allocation2 + $0x40] sm:$0xff] %v415
        %462 = vst [vmem:[#allocation2 + $0x48] sm:$0xff] %v418
        %463 = vst [vmem:[#allocation2 + $0x50] sm:$0xff] %v423
        %464 = vst [vmem:[#allocation2 + $0x58] sm:$0xff] %v426
        %465 = vst [vmem:[#allocation2 + $0x60] sm:$0xff] %v431
        %466 = vst [vmem:[#allocation2 + $0x68] sm:$0xff] %v434
        %467 = vst [vmem:[#allocation2 + $0x70] sm:$0xff] %v439
        %468 = vst [vmem:[#allocation2 + $0x78] sm:$0xff] %v442
        %469 = vst [vmem:[#allocation2 + $0x80] sm:$0xff] %v447
        %470 = vst [vmem:[#allocation2 + $0x88] sm:$0xf] %v450
        %v471 = vld [vmem:[%s210] sm:$0xf]
        %v472 = vld [vmem:[%s210 + $0x4] sm:$0xf]
        %v473 = vld [vmem:[%s210 + $0x8] sm:$0xf]
        %v474 = vld [vmem:[%s210 + $0xc] sm:$0xf]
        %v475 = vld [vmem:[%s210 + $0x10] sm:$0xf]
        %v476 = vld [vmem:[%s210 + $0x14] sm:$0xf]
        %v477 = vld [vmem:[%s210 + $0x18] sm:$0xf]
        %v478 = vld [vmem:[%s210 + $0x1c] sm:$0xf]
        %v479 = vld [vmem:[%s210 + $0x20] sm:$0xf]
        %v480 = vld [vmem:[%s210 + $0x24] sm:$0xf]
        %v481 = vld [vmem:[%s210 + $0x28] sm:$0xf]
        %v482 = vld [vmem:[%s210 + $0x2c] sm:$0xf]
        %v483 = vld [vmem:[%s210 + $0x30] sm:$0xf]
        %v484 = vld [vmem:[%s210 + $0x34] sm:$0xf]
        %v485 = vld [vmem:[%s210 + $0x38] sm:$0xf]
        %v486 = vld [vmem:[%s210 + $0x3c] sm:$0xf]
        %v487 = vld [vmem:[%s210 + $0x40] sm:$0xf]
        %v488 = vld [vmem:[%s210 + $0x44] sm:$0x7]
        %s489 = scalar_lea.vmem [#allocation3], 64
        %v490 = vld [vmem:[%s489] sm:$0xf]
        %v491 = vld [vmem:[%s489 + $0x4] sm:$0xf]
        %v492 = vld [vmem:[%s489 + $0x8] sm:$0xf]
        %v493 = vld [vmem:[%s489 + $0xc] sm:$0xf]
        %v494 = vld [vmem:[%s489 + $0x10] sm:$0xf]
        %v495 = vld [vmem:[%s489 + $0x14] sm:$0xf]
        %v496 = vld [vmem:[%s489 + $0x18] sm:$0xf]
        %v497 = vld [vmem:[%s489 + $0x1c] sm:$0xf]
        %v498 = vld [vmem:[%s489 + $0x20] sm:$0xf]
        %v499 = vld [vmem:[%s489 + $0x24] sm:$0xf]
        %v500 = vld [vmem:[%s489 + $0x28] sm:$0xf]
        %v501 = vld [vmem:[%s489 + $0x2c] sm:$0xf]
        %v502 = vld [vmem:[%s489 + $0x30] sm:$0xf]
        %v503 = vld [vmem:[%s489 + $0x34] sm:$0xf]
        %v504 = vld [vmem:[%s489 + $0x38] sm:$0xf]
        %v505 = vld [vmem:[%s489 + $0x3c] sm:$0xf]
        %v524 = vunpack.c.l.b16 %v471
        %v525 = vunpack.c.l.b16 %v472
        %v526 = vunpack.c.l.b16 %v473
        %v527 = vunpack.c.l.b16 %v474
        %v528 = vunpack.c.l.b16 %v475
        %v529 = vunpack.c.l.b16 %v476
        %v530 = vunpack.c.l.b16 %v477
        %v531 = vunpack.c.l.b16 %v478
        %v532 = vunpack.c.l.b16 %v479
        %v533 = vunpack.c.l.b16 %v480
        %v534 = vunpack.c.l.b16 %v481
        %v535 = vunpack.c.l.b16 %v482
        %v536 = vunpack.c.l.b16 %v483
        %v537 = vunpack.c.l.b16 %v484
        %v538 = vunpack.c.l.b16 %v485
        %v539 = vunpack.c.l.b16 %v486
        %v540 = vunpack.c.l.b16 %v487
        %v541 = vunpack.c.l.b16 %v488
        %v542 = vpack.c.b16 %v525, %v524
        %v543 = vpack.c.b16 %v527, %v526
        %v544 = vpack.c.b16 %v529, %v528
        %v545 = vpack.c.b16 %v531, %v530
        %v546 = vpack.c.b16 %v533, %v532
        %v547 = vpack.c.b16 %v535, %v534
        %v548 = vpack.c.b16 %v537, %v536
        %v549 = vpack.c.b16 %v539, %v538
        %v550 = vpack.c.b16 %v541, %v540
        %vm551 = vsmask.f32 7424
        %v553 = vshrl.u32 %v542, 16
        %v555 = vshll.u32 %v542, 16
        %v557 = vrot.slane %v555, 1
        %v558 = vor.u32 %v553, %v557
        %v560 = vshll.u32 %v543, 16
        %v562 = vrot.slane %v560, 1
        %v563 = vsel %vm551, %v558, %v562
        %v564 = vshrl.u32 %v543, 16
        %v566 = vor.u32 %v564, %v562
        %v568 = vshll.u32 %v544, 16
        %v570 = vrot.slane %v568, 1
        %v571 = vsel %vm551, %v566, %v570
        %v572 = vshrl.u32 %v544, 16
        %v574 = vor.u32 %v572, %v570
        %v576 = vshll.u32 %v545, 16
        %v578 = vrot.slane %v576, 1
        %v579 = vsel %vm551, %v574, %v578
        %v580 = vshrl.u32 %v545, 16
        %v582 = vor.u32 %v580, %v578
        %v584 = vshll.u32 %v546, 16
        %v586 = vrot.slane %v584, 1
        %v587 = vsel %vm551, %v582, %v586
        %v588 = vshrl.u32 %v546, 16
        %v590 = vor.u32 %v588, %v586
        %v592 = vshll.u32 %v547, 16
        %v594 = vrot.slane %v592, 1
        %v595 = vsel %vm551, %v590, %v594
        %v596 = vshrl.u32 %v547, 16
        %v598 = vor.u32 %v596, %v594
        %v600 = vshll.u32 %v548, 16
        %v602 = vrot.slane %v600, 1
        %v603 = vsel %vm551, %v598, %v602
        %v604 = vshrl.u32 %v548, 16
        %v606 = vor.u32 %v604, %v602
        %v608 = vshll.u32 %v549, 16
        %v610 = vrot.slane %v608, 1
        %v611 = vsel %vm551, %v606, %v610
        %v612 = vshrl.u32 %v549, 16
        %v614 = vor.u32 %v612, %v610
        %v616 = vshll.u32 %v550, 16
        %v618 = vrot.slane %v616, 1
        %v619 = vsel %vm551, %v614, %v618
        %v620 = vshrl.u32 %v550, 16
        %v622 = vor.u32 %v620, %v618
        %v648 = vunpack.c.l.b16 %v490
        %v649 = vunpack.c.l.b16 %v491
        %v650 = vunpack.c.l.b16 %v492
        %v651 = vunpack.c.l.b16 %v493
        %v652 = vunpack.c.l.b16 %v494
        %v653 = vunpack.c.l.b16 %v495
        %v654 = vunpack.c.l.b16 %v496
        %v655 = vunpack.c.l.b16 %v497
        %v656 = vunpack.c.l.b16 %v498
        %v657 = vunpack.c.l.b16 %v499
        %v658 = vunpack.c.l.b16 %v500
        %v659 = vunpack.c.l.b16 %v501
        %v660 = vunpack.c.l.b16 %v502
        %v661 = vunpack.c.l.b16 %v503
        %v662 = vunpack.c.l.b16 %v504
        %v663 = vunpack.c.l.b16 %v505
        %v664 = vpack.c.b16 %v649, %v648
        %v665 = vpack.c.b16 %v651, %v650
        %v666 = vpack.c.b16 %v653, %v652
        %v667 = vpack.c.b16 %v655, %v654
        %v668 = vpack.c.b16 %v657, %v656
        %v669 = vpack.c.b16 %v659, %v658
        %v670 = vpack.c.b16 %v661, %v660
        %v671 = vpack.c.b16 %v663, %v662
        %680 = vmatprep.subr.bf16.mxu0 0
        %681 = vmatpush1.bf16.msra.mxu0 %v664
        %682 = vmatprep.subr.bf16.mxu0 0
        %683 = vmatpush1.bf16.msra.mxu0 %v665
        %684 = vmatprep.subr.bf16.mxu0 0
        %685 = vmatpush1.bf16.msra.mxu0 %v666
        %686 = vmatprep.subr.bf16.mxu0 0
        %687 = vmatpush1.bf16.msra.mxu0 %v667
        %688 = vmatprep.subr.bf16.mxu0 0
        %689 = vmatpush1.bf16.msra.mxu0 %v668
        %690 = vmatprep.subr.bf16.mxu0 0
        %691 = vmatpush1.bf16.msra.mxu0 %v669
        %692 = vmatprep.subr.bf16.mxu0 0
        %693 = vmatpush1.bf16.msra.mxu0 %v670
        %694 = vmatprep.subr.bf16.mxu0 0
        %695 = vmatpush1.bf16.msra.mxu0 %v671
        %696 = vmatprep.subr.bf16.mxu0 0
        %697 = vmatpush1.bf16.msra.mxu0 0
        %698 = vmatprep.subr.bf16.mxu0 0
        %699 = vmatpush1.bf16.msra.mxu0 0
        %700 = vmatprep.subr.bf16.mxu0 0
        %701 = vmatpush1.bf16.msra.mxu0 0
        %702 = vmatprep.subr.bf16.mxu0 0
        %703 = vmatpush1.bf16.msra.mxu0 0
        %704 = vmatprep.subr.bf16.mxu0 0
        %705 = vmatpush1.bf16.msra.mxu0 0
        %706 = vmatprep.subr.bf16.mxu0 0
        %707 = vmatpush1.bf16.msra.mxu0 0
        %708 = vmatprep.subr.bf16.mxu0 0
        %709 = vmatpush1.bf16.msra.mxu0 0
        %710 = vmatprep.subr.bf16.mxu0 0
        %711 = vmatpush1.bf16.msra.mxu0 0
        %712 = vmatprep.mubr.bf16.mxu0 0
        %713 = vmatmul.mubr.bf16.gmra.mrb[0].mxu0 %v563
        %v714 = vpop.f32.mrb[0].mxu0
        %v715 = vadd.f32 0.0, %v714
        %v716 = vpop.f32.mrb[0].mxu0
        %v717 = vpop.f32.mrb[0].mxu0
        %v718 = vadd.f32 0.0, %v717
        %v719 = vpop.f32.mrb[0].mxu0
        %720 = vmatprep.mubr.bf16.mxu0 0
        %721 = vmatmul.mubr.bf16.gmra.mrb[0].mxu0 %v571
        %v722 = vpop.f32.mrb[0].mxu0
        %v723 = vadd.f32 0.0, %v722
        %v724 = vpop.f32.mrb[0].mxu0
        %v725 = vpop.f32.mrb[0].mxu0
        %v726 = vadd.f32 0.0, %v725
        %v727 = vpop.f32.mrb[0].mxu0
        %728 = vmatprep.mubr.bf16.mxu0 0
        %729 = vmatmul.mubr.bf16.gmra.mrb[0].mxu0 %v579
        %v730 = vpop.f32.mrb[0].mxu0
        %v731 = vadd.f32 0.0, %v730
        %v732 = vpop.f32.mrb[0].mxu0
        %v733 = vpop.f32.mrb[0].mxu0
        %v734 = vadd.f32 0.0, %v733
        %v735 = vpop.f32.mrb[0].mxu0
        %736 = vmatprep.mubr.bf16.mxu0 0
        %737 = vmatmul.mubr.bf16.gmra.mrb[0].mxu0 %v587
        %v738 = vpop.f32.mrb[0].mxu0
        %v739 = vadd.f32 0.0, %v738
        %v740 = vpop.f32.mrb[0].mxu0
        %v741 = vpop.f32.mrb[0].mxu0
        %v742 = vadd.f32 0.0, %v741
        %v743 = vpop.f32.mrb[0].mxu0
        %744 = vmatprep.mubr.bf16.mxu0 0
        %745 = vmatmul.mubr.bf16.gmra.mrb[0].mxu0 %v595
        %v746 = vpop.f32.mrb[0].mxu0
        %v747 = vadd.f32 0.0, %v746
        %v748 = vpop.f32.mrb[0].mxu0
        %v749 = vpop.f32.mrb[0].mxu0
        %v750 = vadd.f32 0.0, %v749
        %v751 = vpop.f32.mrb[0].mxu0
        %752 = vmatprep.mubr.bf16.mxu0 0
        %753 = vmatmul.mubr.bf16.gmra.mrb[0].mxu0 %v603
        %v754 = vpop.f32.mrb[0].mxu0
        %v755 = vadd.f32 0.0, %v754
        %v756 = vpop.f32.mrb[0].mxu0
        %v757 = vpop.f32.mrb[0].mxu0
        %v758 = vadd.f32 0.0, %v757
        %v759 = vpop.f32.mrb[0].mxu0
        %760 = vmatprep.mubr.bf16.mxu0 0
        %761 = vmatmul.mubr.bf16.gmra.mrb[0].mxu0 %v611
        %v762 = vpop.f32.mrb[0].mxu0
        %v763 = vadd.f32 0.0, %v762
        %v764 = vpop.f32.mrb[0].mxu0
        %v765 = vpop.f32.mrb[0].mxu0
        %v766 = vadd.f32 0.0, %v765
        %v767 = vpop.f32.mrb[0].mxu0
        %768 = vmatprep.mubr.bf16.mxu0 0
        %769 = vmatmul.mubr.bf16.gmra.mrb[0].mxu0 %v619
        %v770 = vpop.f32.mrb[0].mxu0
        %v771 = vadd.f32 0.0, %v770
        %v772 = vpop.f32.mrb[0].mxu0
        %v773 = vpop.f32.mrb[0].mxu0
        %v774 = vadd.f32 0.0, %v773
        %v775 = vpop.f32.mrb[0].mxu0
        %776 = vmatprep.mubr.bf16.mxu0 0
        %777 = vmatmul.mubr.bf16.gmra.mrb[0].mxu0 %v622
        %v778 = vpop.f32.mrb[0].mxu0
        %v779 = vadd.f32 0.0, %v778
        %v780 = vpop.f32.mrb[0].mxu0
        %v781 = vpop.f32.mrb[0].mxu0
        %v782 = vadd.f32 0.0, %v781
        %v783 = vpop.f32.mrb[0].mxu0
        %784 = vdwg.mxu0
        %v785 = vld [vmem:[#allocation2] sm:$0xff]
        %v786 = vld [vmem:[#allocation2 + $0x8] sm:$0xff]
        %v787 = vld [vmem:[#allocation2 + $0x10] sm:$0xff]
        %v788 = vld [vmem:[#allocation2 + $0x18] sm:$0xff]
        %v789 = vld [vmem:[#allocation2 + $0x20] sm:$0xff]
        %v790 = vld [vmem:[#allocation2 + $0x28] sm:$0xff]
        %v791 = vld [vmem:[#allocation2 + $0x30] sm:$0xff]
        %v792 = vld [vmem:[#allocation2 + $0x38] sm:$0xff]
        %v793 = vld [vmem:[#allocation2 + $0x40] sm:$0xff]
        %v794 = vld [vmem:[#allocation2 + $0x48] sm:$0xff]
        %v795 = vld [vmem:[#allocation2 + $0x50] sm:$0xff]
        %v796 = vld [vmem:[#allocation2 + $0x58] sm:$0xff]
        %v797 = vld [vmem:[#allocation2 + $0x60] sm:$0xff]
        %v798 = vld [vmem:[#allocation2 + $0x68] sm:$0xff]
        %v799 = vld [vmem:[#allocation2 + $0x70] sm:$0xff]
        %v800 = vld [vmem:[#allocation2 + $0x78] sm:$0xff]
        %v801 = vld [vmem:[#allocation2 + $0x80] sm:$0xff]
        %v802 = vld [vmem:[#allocation2 + $0x88] sm:$0xf]
        %v803 = vadd.f32 %v785, %v715
        %v804 = vadd.f32 %v786, %v718
        %v805 = vadd.f32 %v787, %v723
        %v806 = vadd.f32 %v788, %v726
        %v807 = vadd.f32 %v789, %v731
        %v808 = vadd.f32 %v790, %v734
        %v809 = vadd.f32 %v791, %v739
        %v810 = vadd.f32 %v792, %v742
        %v811 = vadd.f32 %v793, %v747
        %v812 = vadd.f32 %v794, %v750
        %v813 = vadd.f32 %v795, %v755
        %v814 = vadd.f32 %v796, %v758
        %v815 = vadd.f32 %v797, %v763
        %v816 = vadd.f32 %v798, %v766
        %v817 = vadd.f32 %v799, %v771
        %v818 = vadd.f32 %v800, %v774
        %v819 = vadd.f32 %v801, %v779
        %v820 = vadd.f32 %v802, %v782
        %821 = vst [vmem:[#allocation2] sm:$0xff] %v803
        %822 = vst [vmem:[#allocation2 + $0x8] sm:$0xff] %v804
        %823 = vst [vmem:[#allocation2 + $0x10] sm:$0xff] %v805
        %824 = vst [vmem:[#allocation2 + $0x18] sm:$0xff] %v806
        %825 = vst [vmem:[#allocation2 + $0x20] sm:$0xff] %v807
        %826 = vst [vmem:[#allocation2 + $0x28] sm:$0xff] %v808
        %827 = vst [vmem:[#allocation2 + $0x30] sm:$0xff] %v809
        %828 = vst [vmem:[#allocation2 + $0x38] sm:$0xff] %v810
        %829 = vst [vmem:[#allocation2 + $0x40] sm:$0xff] %v811
        %830 = vst [vmem:[#allocation2 + $0x48] sm:$0xff] %v812
        %831 = vst [vmem:[#allocation2 + $0x50] sm:$0xff] %v813
        %832 = vst [vmem:[#allocation2 + $0x58] sm:$0xff] %v814
        %833 = vst [vmem:[#allocation2 + $0x60] sm:$0xff] %v815
        %834 = vst [vmem:[#allocation2 + $0x68] sm:$0xff] %v816
        %835 = vst [vmem:[#allocation2 + $0x70] sm:$0xff] %v817
        %836 = vst [vmem:[#allocation2 + $0x78] sm:$0xff] %v818
        %837 = vst [vmem:[#allocation2 + $0x80] sm:$0xff] %v819
        %838 = vst [vmem:[#allocation2 + $0x88] sm:$0xf] %v820
        %v839 = vld [vmem:[%s210] sm:$0xe]
        %v840 = vld [vmem:[%s210 + $0x4] sm:$0xf]
        %v841 = vld [vmem:[%s210 + $0x8] sm:$0xf]
        %v842 = vld [vmem:[%s210 + $0xc] sm:$0xf]
        %v843 = vld [vmem:[%s210 + $0x10] sm:$0xf]
        %v844 = vld [vmem:[%s210 + $0x14] sm:$0xf]
        %v845 = vld [vmem:[%s210 + $0x18] sm:$0xf]
        %v846 = vld [vmem:[%s210 + $0x1c] sm:$0xf]
        %v847 = vld [vmem:[%s210 + $0x20] sm:$0xf]
        %v848 = vld [vmem:[%s210 + $0x24] sm:$0xf]
        %v849 = vld [vmem:[%s210 + $0x28] sm:$0xf]
        %v850 = vld [vmem:[%s210 + $0x2c] sm:$0xf]
        %v851 = vld [vmem:[%s210 + $0x30] sm:$0xf]
        %v852 = vld [vmem:[%s210 + $0x34] sm:$0xf]
        %v853 = vld [vmem:[%s210 + $0x38] sm:$0xf]
        %v854 = vld [vmem:[%s210 + $0x3c] sm:$0xf]
        %v855 = vld [vmem:[%s210 + $0x40] sm:$0xf]
        %v856 = vld [vmem:[%s210 + $0x44] sm:$0x7]
        %s857 = scalar_lea.vmem [#allocation3], 128
        %v858 = vld [vmem:[%s857] sm:$0xf]
        %v859 = vld [vmem:[%s857 + $0x4] sm:$0xf]
        %v860 = vld [vmem:[%s857 + $0x8] sm:$0xf]
        %v861 = vld [vmem:[%s857 + $0xc] sm:$0xf]
        %v862 = vld [vmem:[%s857 + $0x10] sm:$0xf]
        %v863 = vld [vmem:[%s857 + $0x14] sm:$0xf]
        %v864 = vld [vmem:[%s857 + $0x18] sm:$0xf]
        %v865 = vld [vmem:[%s857 + $0x1c] sm:$0xf]
        %v866 = vld [vmem:[%s857 + $0x20] sm:$0xf]
        %v867 = vld [vmem:[%s857 + $0x24] sm:$0xf]
        %v868 = vld [vmem:[%s857 + $0x28] sm:$0xf]
        %v869 = vld [vmem:[%s857 + $0x2c] sm:$0xf]
        %v870 = vld [vmem:[%s857 + $0x30] sm:$0xf]
        %v871 = vld [vmem:[%s857 + $0x34] sm:$0xf]
        %v872 = vld [vmem:[%s857 + $0x38] sm:$0xf]
        %v873 = vld [vmem:[%s857 + $0x3c] sm:$0xf]
        %v892 = vunpack.c.l.b16 %v839
        %v893 = vunpack.c.l.b16 %v840
        %v894 = vunpack.c.l.b16 %v841
        %v895 = vunpack.c.l.b16 %v842
        %v896 = vunpack.c.l.b16 %v843
        %v897 = vunpack.c.l.b16 %v844
        %v898 = vunpack.c.l.b16 %v845
        %v899 = vunpack.c.l.b16 %v846
        %v900 = vunpack.c.l.b16 %v847
        %v901 = vunpack.c.l.b16 %v848
        %v902 = vunpack.c.l.b16 %v849
        %v903 = vunpack.c.l.b16 %v850
        %v904 = vunpack.c.l.b16 %v851
        %v905 = vunpack.c.l.b16 %v852
        %v906 = vunpack.c.l.b16 %v853
        %v907 = vunpack.c.l.b16 %v854
        %v908 = vunpack.c.l.b16 %v855
        %v909 = vunpack.c.l.b16 %v856
        %v910 = vpack.c.b16 %v893, %v892
        %v911 = vpack.c.b16 %v895, %v894
        %v912 = vpack.c.b16 %v897, %v896
        %v913 = vpack.c.b16 %v899, %v898
        %v914 = vpack.c.b16 %v901, %v900
        %v915 = vpack.c.b16 %v903, %v902
        %v916 = vpack.c.b16 %v905, %v904
        %v917 = vpack.c.b16 %v907, %v906
        %v918 = vpack.c.b16 %v909, %v908
        %vm919 = vcmask 1046528
        %v920 = vrot.slane %v910, 1
        %v921 = vrot.slane %v911, 1
        %v922 = vsel %vm919, %v920, %v921
        %v923 = vrot.slane %v912, 1
        %v924 = vsel %vm919, %v921, %v923
        %v925 = vrot.slane %v913, 1
        %v926 = vsel %vm919, %v923, %v925
        %v927 = vrot.slane %v914, 1
        %v928 = vsel %vm919, %v925, %v927
        %v929 = vrot.slane %v915, 1
        %v930 = vsel %vm919, %v927, %v929
        %v931 = vrot.slane %v916, 1
        %v932 = vsel %vm919, %v929, %v931
        %v933 = vrot.slane %v917, 1
        %v934 = vsel %vm919, %v931, %v933
        %v935 = vrot.slane %v918, 1
        %v936 = vsel %vm919, %v933, %v935
        %v962 = vunpack.c.l.b16 %v858
        %v963 = vunpack.c.l.b16 %v859
        %v964 = vunpack.c.l.b16 %v860
        %v965 = vunpack.c.l.b16 %v861
        %v966 = vunpack.c.l.b16 %v862
        %v967 = vunpack.c.l.b16 %v863
        %v968 = vunpack.c.l.b16 %v864
        %v969 = vunpack.c.l.b16 %v865
        %v970 = vunpack.c.l.b16 %v866
        %v971 = vunpack.c.l.b16 %v867
        %v972 = vunpack.c.l.b16 %v868
        %v973 = vunpack.c.l.b16 %v869
        %v974 = vunpack.c.l.b16 %v870
        %v975 = vunpack.c.l.b16 %v871
        %v976 = vunpack.c.l.b16 %v872
        %v977 = vunpack.c.l.b16 %v873
        %v978 = vpack.c.b16 %v963, %v962
        %v979 = vpack.c.b16 %v965, %v964
        %v980 = vpack.c.b16 %v967, %v966
        %v981 = vpack.c.b16 %v969, %v968
        %v982 = vpack.c.b16 %v971, %v970
        %v983 = vpack.c.b16 %v973, %v972
        %v984 = vpack.c.b16 %v975, %v974
        %v985 = vpack.c.b16 %v977, %v976
        %994 = vmatprep.subr.bf16.mxu0 0
        %995 = vmatpush1.bf16.msra.mxu0 %v978
        %996 = vmatprep.subr.bf16.mxu0 0
        %997 = vmatpush1.bf16.msra.mxu0 %v979
        %998 = vmatprep.subr.bf16.mxu0 0
        %999 = vmatpush1.bf16.msra.mxu0 %v980
        %1000 = vmatprep.subr.bf16.mxu0 0
        %1001 = vmatpush1.bf16.msra.mxu0 %v981
        %1002 = vmatprep.subr.bf16.mxu0 0
        %1003 = vmatpush1.bf16.msra.mxu0 %v982
        %1004 = vmatprep.subr.bf16.mxu0 0
        %1005 = vmatpush1.bf16.msra.mxu0 %v983
        %1006 = vmatprep.subr.bf16.mxu0 0
        %1007 = vmatpush1.bf16.msra.mxu0 %v984
        %1008 = vmatprep.subr.bf16.mxu0 0
        %1009 = vmatpush1.bf16.msra.mxu0 %v985
        %1010 = vmatprep.subr.bf16.mxu0 0
        %1011 = vmatpush1.bf16.msra.mxu0 0
        %1012 = vmatprep.subr.bf16.mxu0 0
        %1013 = vmatpush1.bf16.msra.mxu0 0
        %1014 = vmatprep.subr.bf16.mxu0 0
        %1015 = vmatpush1.bf16.msra.mxu0 0
        %1016 = vmatprep.subr.bf16.mxu0 0
        %1017 = vmatpush1.bf16.msra.mxu0 0
        %1018 = vmatprep.subr.bf16.mxu0 0
        %1019 = vmatpush1.bf16.msra.mxu0 0
        %1020 = vmatprep.subr.bf16.mxu0 0
        %1021 = vmatpush1.bf16.msra.mxu0 0
        %1022 = vmatprep.subr.bf16.mxu0 0
        %1023 = vmatpush1.bf16.msra.mxu0 0
        %1024 = vmatprep.subr.bf16.mxu0 0
        %1025 = vmatpush1.bf16.msra.mxu0 0
        %1026 = vmatprep.mubr.bf16.mxu0 0
        %1027 = vmatmul.mubr.bf16.gmra.mrb[0].mxu0 %v922
        %v1028 = vpop.f32.mrb[0].mxu0
        %v1029 = vadd.f32 0.0, %v1028
        %v1030 = vpop.f32.mrb[0].mxu0
        %v1031 = vpop.f32.mrb[0].mxu0
        %v1032 = vadd.f32 0.0, %v1031
        %v1033 = vpop.f32.mrb[0].mxu0
        %1034 = vmatprep.mubr.bf16.mxu0 0
        %1035 = vmatmul.mubr.bf16.gmra.mrb[0].mxu0 %v924
        %v1036 = vpop.f32.mrb[0].mxu0
        %v1037 = vadd.f32 0.0, %v1036
        %v1038 = vpop.f32.mrb[0].mxu0
        %v1039 = vpop.f32.mrb[0].mxu0
        %v1040 = vadd.f32 0.0, %v1039
        %v1041 = vpop.f32.mrb[0].mxu0
        %1042 = vmatprep.mubr.bf16.mxu0 0
        %1043 = vmatmul.mubr.bf16.gmra.mrb[0].mxu0 %v926
        %v1044 = vpop.f32.mrb[0].mxu0
        %v1045 = vadd.f32 0.0, %v1044
        %v1046 = vpop.f32.mrb[0].mxu0
        %v1047 = vpop.f32.mrb[0].mxu0
        %v1048 = vadd.f32 0.0, %v1047
        %v1049 = vpop.f32.mrb[0].mxu0
        %1050 = vmatprep.mubr.bf16.mxu0 0
        %1051 = vmatmul.mubr.bf16.gmra.mrb[0].mxu0 %v928
        %v1052 = vpop.f32.mrb[0].mxu0
        %v1053 = vadd.f32 0.0, %v1052
        %v1054 = vpop.f32.mrb[0].mxu0
        %v1055 = vpop.f32.mrb[0].mxu0
        %v1056 = vadd.f32 0.0, %v1055
        %v1057 = vpop.f32.mrb[0].mxu0
        %1058 = vmatprep.mubr.bf16.mxu0 0
        %1059 = vmatmul.mubr.bf16.gmra.mrb[0].mxu0 %v930
        %v1060 = vpop.f32.mrb[0].mxu0
        %v1061 = vadd.f32 0.0, %v1060
        %v1062 = vpop.f32.mrb[0].mxu0
        %v1063 = vpop.f32.mrb[0].mxu0
        %v1064 = vadd.f32 0.0, %v1063
        %v1065 = vpop.f32.mrb[0].mxu0
        %1066 = vmatprep.mubr.bf16.mxu0 0
        %1067 = vmatmul.mubr.bf16.gmra.mrb[0].mxu0 %v932
        %v1068 = vpop.f32.mrb[0].mxu0
        %v1069 = vadd.f32 0.0, %v1068
        %v1070 = vpop.f32.mrb[0].mxu0
        %v1071 = vpop.f32.mrb[0].mxu0
        %v1072 = vadd.f32 0.0, %v1071
        %v1073 = vpop.f32.mrb[0].mxu0
        %1074 = vmatprep.mubr.bf16.mxu0 0
        %1075 = vmatmul.mubr.bf16.gmra.mrb[0].mxu0 %v934
        %v1076 = vpop.f32.mrb[0].mxu0
        %v1077 = vadd.f32 0.0, %v1076
        %v1078 = vpop.f32.mrb[0].mxu0
        %v1079 = vpop.f32.mrb[0].mxu0
        %v1080 = vadd.f32 0.0, %v1079
        %v1081 = vpop.f32.mrb[0].mxu0
        %1082 = vmatprep.mubr.bf16.mxu0 0
        %1083 = vmatmul.mubr.bf16.gmra.mrb[0].mxu0 %v936
        %v1084 = vpop.f32.mrb[0].mxu0
        %v1085 = vadd.f32 0.0, %v1084
        %v1086 = vpop.f32.mrb[0].mxu0
        %v1087 = vpop.f32.mrb[0].mxu0
        %v1088 = vadd.f32 0.0, %v1087
        %v1089 = vpop.f32.mrb[0].mxu0
        %1090 = vmatprep.mubr.bf16.mxu0 0
        %1091 = vmatmul.mubr.bf16.gmra.mrb[0].mxu0 %v935
        %v1092 = vpop.f32.mrb[0].mxu0
        %v1093 = vadd.f32 0.0, %v1092
        %v1094 = vpop.f32.mrb[0].mxu0
        %v1095 = vpop.f32.mrb[0].mxu0
        %v1096 = vadd.f32 0.0, %v1095
        %v1097 = vpop.f32.mrb[0].mxu0
        %1098 = vdwg.mxu0
        %v1099 = vld [vmem:[#allocation2] sm:$0xff]
        %v1100 = vld [vmem:[#allocation2 + $0x8] sm:$0xff]
        %v1101 = vld [vmem:[#allocation2 + $0x10] sm:$0xff]
        %v1102 = vld [vmem:[#allocation2 + $0x18] sm:$0xff]
        %v1103 = vld [vmem:[#allocation2 + $0x20] sm:$0xff]
        %v1104 = vld [vmem:[#allocation2 + $0x28] sm:$0xff]
        %v1105 = vld [vmem:[#allocation2 + $0x30] sm:$0xff]
        %v1106 = vld [vmem:[#allocation2 + $0x38] sm:$0xff]
        %v1107 = vld [vmem:[#allocation2 + $0x40] sm:$0xff]
        %v1108 = vld [vmem:[#allocation2 + $0x48] sm:$0xff]
        %v1109 = vld [vmem:[#allocation2 + $0x50] sm:$0xff]
        %v1110 = vld [vmem:[#allocation2 + $0x58] sm:$0xff]
        %v1111 = vld [vmem:[#allocation2 + $0x60] sm:$0xff]
        %v1112 = vld [vmem:[#allocation2 + $0x68] sm:$0xff]
        %v1113 = vld [vmem:[#allocation2 + $0x70] sm:$0xff]
        %v1114 = vld [vmem:[#allocation2 + $0x78] sm:$0xff]
        %v1115 = vld [vmem:[#allocation2 + $0x80] sm:$0xff]
        %v1116 = vld [vmem:[#allocation2 + $0x88] sm:$0xf]
        %v1117 = vadd.f32 %v1099, %v1029
        %v1118 = vadd.f32 %v1100, %v1032
        %v1119 = vadd.f32 %v1101, %v1037
        %v1120 = vadd.f32 %v1102, %v1040
        %v1121 = vadd.f32 %v1103, %v1045
        %v1122 = vadd.f32 %v1104, %v1048
        %v1123 = vadd.f32 %v1105, %v1053
        %v1124 = vadd.f32 %v1106, %v1056
        %v1125 = vadd.f32 %v1107, %v1061
        %v1126 = vadd.f32 %v1108, %v1064
        %v1127 = vadd.f32 %v1109, %v1069
        %v1128 = vadd.f32 %v1110, %v1072
        %v1129 = vadd.f32 %v1111, %v1077
        %v1130 = vadd.f32 %v1112, %v1080
        %v1131 = vadd.f32 %v1113, %v1085
        %v1132 = vadd.f32 %v1114, %v1088
        %v1133 = vadd.f32 %v1115, %v1093
        %v1134 = vadd.f32 %v1116, %v1096
        %1135 = vst [vmem:[#allocation2] sm:$0xff] %v1117
        %1136 = vst [vmem:[#allocation2 + $0x8] sm:$0xff] %v1118
        %1137 = vst [vmem:[#allocation2 + $0x10] sm:$0xff] %v1119
        %1138 = vst [vmem:[#allocation2 + $0x18] sm:$0xff] %v1120
        %1139 = vst [vmem:[#allocation2 + $0x20] sm:$0xff] %v1121
        %1140 = vst [vmem:[#allocation2 + $0x28] sm:$0xff] %v1122
        %1141 = vst [vmem:[#allocation2 + $0x30] sm:$0xff] %v1123
        %1142 = vst [vmem:[#allocation2 + $0x38] sm:$0xff] %v1124
        %1143 = vst [vmem:[#allocation2 + $0x40] sm:$0xff] %v1125
        %1144 = vst [vmem:[#allocation2 + $0x48] sm:$0xff] %v1126
        %1145 = vst [vmem:[#allocation2 + $0x50] sm:$0xff] %v1127
        %1146 = vst [vmem:[#allocation2 + $0x58] sm:$0xff] %v1128
        %1147 = vst [vmem:[#allocation2 + $0x60] sm:$0xff] %v1129
        %1148 = vst [vmem:[#allocation2 + $0x68] sm:$0xff] %v1130
        %1149 = vst [vmem:[#allocation2 + $0x70] sm:$0xff] %v1131
        %1150 = vst [vmem:[#allocation2 + $0x78] sm:$0xff] %v1132
        %1151 = vst [vmem:[#allocation2 + $0x80] sm:$0xff] %v1133
        %1152 = vst [vmem:[#allocation2 + $0x88] sm:$0xf] %v1134
        %v1153 = vld [vmem:[%s210 + $0x4] sm:$0x8]
        %v1154 = vld [vmem:[%s210 + $0x8] sm:$0xf]
        %v1155 = vld [vmem:[%s210 + $0xc] sm:$0xf]
        %v1156 = vld [vmem:[%s210 + $0x10] sm:$0xf]
        %v1157 = vld [vmem:[%s210 + $0x14] sm:$0xf]
        %v1158 = vld [vmem:[%s210 + $0x18] sm:$0xf]
        %v1159 = vld [vmem:[%s210 + $0x1c] sm:$0xf]
        %v1160 = vld [vmem:[%s210 + $0x20] sm:$0xf]
        %v1161 = vld [vmem:[%s210 + $0x24] sm:$0xf]
        %v1162 = vld [vmem:[%s210 + $0x28] sm:$0xf]
        %v1163 = vld [vmem:[%s210 + $0x2c] sm:$0xf]
        %v1164 = vld [vmem:[%s210 + $0x30] sm:$0xf]
        %v1165 = vld [vmem:[%s210 + $0x34] sm:$0xf]
        %v1166 = vld [vmem:[%s210 + $0x38] sm:$0xf]
        %v1167 = vld [vmem:[%s210 + $0x3c] sm:$0xf]
        %v1168 = vld [vmem:[%s210 + $0x40] sm:$0xf]
        %v1169 = vld [vmem:[%s210 + $0x44] sm:$0xf]
        %v1170 = vld [vmem:[%s210 + $0x48] sm:$0xf]
        %v1171 = vld [vmem:[%s210 + $0x4c] sm:$0x1]
        %s1172 = scalar_lea.vmem [#allocation3], 192
        %v1173 = vld [vmem:[%s1172] sm:$0xf]
        %v1174 = vld [vmem:[%s1172 + $0x4] sm:$0xf]
        %v1175 = vld [vmem:[%s1172 + $0x8] sm:$0xf]
        %v1176 = vld [vmem:[%s1172 + $0xc] sm:$0xf]
        %v1177 = vld [vmem:[%s1172 + $0x10] sm:$0xf]
        %v1178 = vld [vmem:[%s1172 + $0x14] sm:$0xf]
        %v1179 = vld [vmem:[%s1172 + $0x18] sm:$0xf]
        %v1180 = vld [vmem:[%s1172 + $0x1c] sm:$0xf]
        %v1181 = vld [vmem:[%s1172 + $0x20] sm:$0xf]
        %v1182 = vld [vmem:[%s1172 + $0x24] sm:$0xf]
        %v1183 = vld [vmem:[%s1172 + $0x28] sm:$0xf]
        %v1184 = vld [vmem:[%s1172 + $0x2c] sm:$0xf]
        %v1185 = vld [vmem:[%s1172 + $0x30] sm:$0xf]
        %v1186 = vld [vmem:[%s1172 + $0x34] sm:$0xf]
        %v1187 = vld [vmem:[%s1172 + $0x38] sm:$0xf]
        %v1188 = vld [vmem:[%s1172 + $0x3c] sm:$0xf]
        %v1208 = vunpack.c.l.b16 %v1153
        %v1209 = vunpack.c.l.b16 %v1154
        %v1210 = vunpack.c.l.b16 %v1155
        %v1211 = vunpack.c.l.b16 %v1156
        %v1212 = vunpack.c.l.b16 %v1157
        %v1213 = vunpack.c.l.b16 %v1158
        %v1214 = vunpack.c.l.b16 %v1159
        %v1215 = vunpack.c.l.b16 %v1160
        %v1216 = vunpack.c.l.b16 %v1161
        %v1217 = vunpack.c.l.b16 %v1162
        %v1218 = vunpack.c.l.b16 %v1163
        %v1219 = vunpack.c.l.b16 %v1164
        %v1220 = vunpack.c.l.b16 %v1165
        %v1221 = vunpack.c.l.b16 %v1166
        %v1222 = vunpack.c.l.b16 %v1167
        %v1223 = vunpack.c.l.b16 %v1168
        %v1224 = vunpack.c.l.b16 %v1169
        %v1225 = vunpack.c.l.b16 %v1170
        %v1226 = vunpack.c.l.b16 %v1171
        %v1227 = vpack.c.b16 %v1209, %v1208
        %v1228 = vpack.c.b16 %v1211, %v1210
        %v1229 = vpack.c.b16 %v1213, %v1212
        %v1230 = vpack.c.b16 %v1215, %v1214
        %v1231 = vpack.c.b16 %v1217, %v1216
        %v1232 = vpack.c.b16 %v1219, %v1218
        %v1233 = vpack.c.b16 %v1221, %v1220
        %v1234 = vpack.c.b16 %v1223, %v1222
        %v1235 = vpack.c.b16 %v1225, %v1224
        %v1236 = vpack.c.b16 %v1226, %v1226
        %vm1237 = vcmask 1044480
        %v1238 = vrot.slane %v1227, 3
        %v1239 = vrot.slane %v1228, 3
        %v1240 = vsel %vm1237, %v1238, %v1239
        %v1241 = vrot.slane %v1229, 3
        %v1242 = vsel %vm1237, %v1239, %v1241
        %v1243 = vrot.slane %v1230, 3
        %v1244 = vsel %vm1237, %v1241, %v1243
        %v1245 = vrot.slane %v1231, 3
        %v1246 = vsel %vm1237, %v1243, %v1245
        %v1247 = vrot.slane %v1232, 3
        %v1248 = vsel %vm1237, %v1245, %v1247
        %v1249 = vrot.slane %v1233, 3
        %v1250 = vsel %vm1237, %v1247, %v1249
        %v1251 = vrot.slane %v1234, 3
        %v1252 = vsel %vm1237, %v1249, %v1251
        %v1253 = vrot.slane %v1235, 3
        %v1254 = vsel %vm1237, %v1251, %v1253
        %v1255 = vrot.slane %v1236, 3
        %v1256 = vsel %vm1237, %v1253, %v1255
        %v1282 = vunpack.c.l.b16 %v1173
        %v1283 = vunpack.c.l.b16 %v1174
        %v1284 = vunpack.c.l.b16 %v1175
        %v1285 = vunpack.c.l.b16 %v1176
        %v1286 = vunpack.c.l.b16 %v1177
        %v1287 = vunpack.c.l.b16 %v1178
        %v1288 = vunpack.c.l.b16 %v1179
        %v1289 = vunpack.c.l.b16 %v1180
        %v1290 = vunpack.c.l.b16 %v1181
        %v1291 = vunpack.c.l.b16 %v1182
        %v1292 = vunpack.c.l.b16 %v1183
        %v1293 = vunpack.c.l.b16 %v1184
        %v1294 = vunpack.c.l.b16 %v1185
        %v1295 = vunpack.c.l.b16 %v1186
        %v1296 = vunpack.c.l.b16 %v1187
        %v1297 = vunpack.c.l.b16 %v1188
        %v1298 = vpack.c.b16 %v1283, %v1282
        %v1299 = vpack.c.b16 %v1285, %v1284
        %v1300 = vpack.c.b16 %v1287, %v1286
        %v1301 = vpack.c.b16 %v1289, %v1288
        %v1302 = vpack.c.b16 %v1291, %v1290
        %v1303 = vpack.c.b16 %v1293, %v1292
        %v1304 = vpack.c.b16 %v1295, %v1294
        %v1305 = vpack.c.b16 %v1297, %v1296
        %1314 = vmatprep.subr.bf16.mxu0 0
        %1315 = vmatpush1.bf16.msra.mxu0 %v1298
        %1316 = vmatprep.subr.bf16.mxu0 0
        %1317 = vmatpush1.bf16.msra.mxu0 %v1299
        %1318 = vmatprep.subr.bf16.mxu0 0
        %1319 = vmatpush1.bf16.msra.mxu0 %v1300
        %1320 = vmatprep.subr.bf16.mxu0 0
        %1321 = vmatpush1.bf16.msra.mxu0 %v1301
        %1322 = vmatprep.subr.bf16.mxu0 0
        %1323 = vmatpush1.bf16.msra.mxu0 %v1302
        %1324 = vmatprep.subr.bf16.mxu0 0
        %1325 = vmatpush1.bf16.msra.mxu0 %v1303
        %1326 = vmatprep.subr.bf16.mxu0 0
        %1327 = vmatpush1.bf16.msra.mxu0 %v1304
        %1328 = vmatprep.subr.bf16.mxu0 0
        %1329 = vmatpush1.bf16.msra.mxu0 %v1305
        %1330 = vmatprep.subr.bf16.mxu0 0
        %1331 = vmatpush1.bf16.msra.mxu0 0
        %1332 = vmatprep.subr.bf16.mxu0 0
        %1333 = vmatpush1.bf16.msra.mxu0 0
        %1334 = vmatprep.subr.bf16.mxu0 0
        %1335 = vmatpush1.bf16.msra.mxu0 0
        %1336 = vmatprep.subr.bf16.mxu0 0
        %1337 = vmatpush1.bf16.msra.mxu0 0
        %1338 = vmatprep.subr.bf16.mxu0 0
        %1339 = vmatpush1.bf16.msra.mxu0 0
        %1340 = vmatprep.subr.bf16.mxu0 0
        %1341 = vmatpush1.bf16.msra.mxu0 0
        %1342 = vmatprep.subr.bf16.mxu0 0
        %1343 = vmatpush1.bf16.msra.mxu0 0
        %1344 = vmatprep.subr.bf16.mxu0 0
        %1345 = vmatpush1.bf16.msra.mxu0 0
        %1346 = vmatprep.mubr.bf16.mxu0 0
        %1347 = vmatmul.mubr.bf16.gmra.mrb[0].mxu0 %v1240
        %v1348 = vpop.f32.mrb[0].mxu0
        %v1349 = vadd.f32 0.0, %v1348
        %v1350 = vpop.f32.mrb[0].mxu0
        %v1351 = vpop.f32.mrb[0].mxu0
        %v1352 = vadd.f32 0.0, %v1351
        %v1353 = vpop.f32.mrb[0].mxu0
        %1354 = vmatprep.mubr.bf16.mxu0 0
        %1355 = vmatmul.mubr.bf16.gmra.mrb[0].mxu0 %v1242
        %v1356 = vpop.f32.mrb[0].mxu0
        %v1357 = vadd.f32 0.0, %v1356
        %v1358 = vpop.f32.mrb[0].mxu0
        %v1359 = vpop.f32.mrb[0].mxu0
        %v1360 = vadd.f32 0.0, %v1359
        %v1361 = vpop.f32.mrb[0].mxu0
        %1362 = vmatprep.mubr.bf16.mxu0 0
        %1363 = vmatmul.mubr.bf16.gmra.mrb[0].mxu0 %v1244
        %v1364 = vpop.f32.mrb[0].mxu0
        %v1365 = vadd.f32 0.0, %v1364
        %v1366 = vpop.f32.mrb[0].mxu0
        %v1367 = vpop.f32.mrb[0].mxu0
        %v1368 = vadd.f32 0.0, %v1367
        %v1369 = vpop.f32.mrb[0].mxu0
        %1370 = vmatprep.mubr.bf16.mxu0 0
        %1371 = vmatmul.mubr.bf16.gmra.mrb[0].mxu0 %v1246
        %v1372 = vpop.f32.mrb[0].mxu0
        %v1373 = vadd.f32 0.0, %v1372
        %v1374 = vpop.f32.mrb[0].mxu0
        %v1375 = vpop.f32.mrb[0].mxu0
        %v1376 = vadd.f32 0.0, %v1375
        %v1377 = vpop.f32.mrb[0].mxu0
        %1378 = vmatprep.mubr.bf16.mxu0 0
        %1379 = vmatmul.mubr.bf16.gmra.mrb[0].mxu0 %v1248
        %v1380 = vpop.f32.mrb[0].mxu0
        %v1381 = vadd.f32 0.0, %v1380
        %v1382 = vpop.f32.mrb[0].mxu0
        %v1383 = vpop.f32.mrb[0].mxu0
        %v1384 = vadd.f32 0.0, %v1383
        %v1385 = vpop.f32.mrb[0].mxu0
        %1386 = vmatprep.mubr.bf16.mxu0 0
        %1387 = vmatmul.mubr.bf16.gmra.mrb[0].mxu0 %v1250
        %v1388 = vpop.f32.mrb[0].mxu0
        %v1389 = vadd.f32 0.0, %v1388
        %v1390 = vpop.f32.mrb[0].mxu0
        %v1391 = vpop.f32.mrb[0].mxu0
        %v1392 = vadd.f32 0.0, %v1391
        %v1393 = vpop.f32.mrb[0].mxu0
        %1394 = vmatprep.mubr.bf16.mxu0 0
        %1395 = vmatmul.mubr.bf16.gmra.mrb[0].mxu0 %v1252
        %v1396 = vpop.f32.mrb[0].mxu0
        %v1397 = vadd.f32 0.0, %v1396
        %v1398 = vpop.f32.mrb[0].mxu0
        %v1399 = vpop.f32.mrb[0].mxu0
        %v1400 = vadd.f32 0.0, %v1399
        %v1401 = vpop.f32.mrb[0].mxu0
        %1402 = vmatprep.mubr.bf16.mxu0 0
        %1403 = vmatmul.mubr.bf16.gmra.mrb[0].mxu0 %v1254
        %v1404 = vpop.f32.mrb[0].mxu0
        %v1405 = vadd.f32 0.0, %v1404
        %v1406 = vpop.f32.mrb[0].mxu0
        %v1407 = vpop.f32.mrb[0].mxu0
        %v1408 = vadd.f32 0.0, %v1407
        %v1409 = vpop.f32.mrb[0].mxu0
        %1410 = vmatprep.mubr.bf16.mxu0 0
        %1411 = vmatmul.mubr.bf16.gmra.mrb[0].mxu0 %v1256
        %v1412 = vpop.f32.mrb[0].mxu0
        %v1413 = vadd.f32 0.0, %v1412
        %v1414 = vpop.f32.mrb[0].mxu0
        %v1415 = vpop.f32.mrb[0].mxu0
        %v1416 = vadd.f32 0.0, %v1415
        %v1417 = vpop.f32.mrb[0].mxu0
        %1418 = vdwg.mxu0
        %v1419 = vld [vmem:[#allocation2] sm:$0xff]
        %v1420 = vld [vmem:[#allocation2 + $0x8] sm:$0xff]
        %v1421 = vld [vmem:[#allocation2 + $0x10] sm:$0xff]
        %v1422 = vld [vmem:[#allocation2 + $0x18] sm:$0xff]
        %v1423 = vld [vmem:[#allocation2 + $0x20] sm:$0xff]
        %v1424 = vld [vmem:[#allocation2 + $0x28] sm:$0xff]
        %v1425 = vld [vmem:[#allocation2 + $0x30] sm:$0xff]
        %v1426 = vld [vmem:[#allocation2 + $0x38] sm:$0xff]
        %v1427 = vld [vmem:[#allocation2 + $0x40] sm:$0xff]
        %v1428 = vld [vmem:[#allocation2 + $0x48] sm:$0xff]
        %v1429 = vld [vmem:[#allocation2 + $0x50] sm:$0xff]
        %v1430 = vld [vmem:[#allocation2 + $0x58] sm:$0xff]
        %v1431 = vld [vmem:[#allocation2 + $0x60] sm:$0xff]
        %v1432 = vld [vmem:[#allocation2 + $0x68] sm:$0xff]
        %v1433 = vld [vmem:[#allocation2 + $0x70] sm:$0xff]
        %v1434 = vld [vmem:[#allocation2 + $0x78] sm:$0xff]
        %v1435 = vld [vmem:[#allocation2 + $0x80] sm:$0xff]
        %v1436 = vld [vmem:[#allocation2 + $0x88] sm:$0xf]
        %v1437 = vadd.f32 %v1419, %v1349
        %v1438 = vadd.f32 %v1420, %v1352
        %v1439 = vadd.f32 %v1421, %v1357
        %v1440 = vadd.f32 %v1422, %v1360
        %v1441 = vadd.f32 %v1423, %v1365
        %v1442 = vadd.f32 %v1424, %v1368
        %v1443 = vadd.f32 %v1425, %v1373
        %v1444 = vadd.f32 %v1426, %v1376
        %v1445 = vadd.f32 %v1427, %v1381
        %v1446 = vadd.f32 %v1428, %v1384
        %v1447 = vadd.f32 %v1429, %v1389
        %v1448 = vadd.f32 %v1430, %v1392
        %v1449 = vadd.f32 %v1431, %v1397
        %v1450 = vadd.f32 %v1432, %v1400
        %v1451 = vadd.f32 %v1433, %v1405
        %v1452 = vadd.f32 %v1434, %v1408
        %v1453 = vadd.f32 %v1435, %v1413
        %v1454 = vadd.f32 %v1436, %v1416
        %1455 = vst [vmem:[#allocation2] sm:$0xff] %v1437
        %1456 = vst [vmem:[#allocation2 + $0x8] sm:$0xff] %v1438
        %1457 = vst [vmem:[#allocation2 + $0x10] sm:$0xff] %v1439
        %1458 = vst [vmem:[#allocation2 + $0x18] sm:$0xff] %v1440
        %1459 = vst [vmem:[#allocation2 + $0x20] sm:$0xff] %v1441
        %1460 = vst [vmem:[#allocation2 + $0x28] sm:$0xff] %v1442
        %1461 = vst [vmem:[#allocation2 + $0x30] sm:$0xff] %v1443
        %1462 = vst [vmem:[#allocation2 + $0x38] sm:$0xff] %v1444
        %1463 = vst [vmem:[#allocation2 + $0x40] sm:$0xff] %v1445
        %1464 = vst [vmem:[#allocation2 + $0x48] sm:$0xff] %v1446
        %1465 = vst [vmem:[#allocation2 + $0x50] sm:$0xff] %v1447
        %1466 = vst [vmem:[#allocation2 + $0x58] sm:$0xff] %v1448
        %1467 = vst [vmem:[#allocation2 + $0x60] sm:$0xff] %v1449
        %1468 = vst [vmem:[#allocation2 + $0x68] sm:$0xff] %v1450
        %1469 = vst [vmem:[#allocation2 + $0x70] sm:$0xff] %v1451
        %1470 = vst [vmem:[#allocation2 + $0x78] sm:$0xff] %v1452
        %1471 = vst [vmem:[#allocation2 + $0x80] sm:$0xff] %v1453
        %1472 = vst [vmem:[#allocation2 + $0x88] sm:$0xf] %v1454
        %v1473 = vld [vmem:[%s210 + $0x4] sm:$0x8]
        %v1474 = vld [vmem:[%s210 + $0x8] sm:$0xf]
        %v1475 = vld [vmem:[%s210 + $0xc] sm:$0xf]
        %v1476 = vld [vmem:[%s210 + $0x10] sm:$0xf]
        %v1477 = vld [vmem:[%s210 + $0x14] sm:$0xf]
        %v1478 = vld [vmem:[%s210 + $0x18] sm:$0xf]
        %v1479 = vld [vmem:[%s210 + $0x1c] sm:$0xf]
        %v1480 = vld [vmem:[%s210 + $0x20] sm:$0xf]
        %v1481 = vld [vmem:[%s210 + $0x24] sm:$0xf]
        %v1482 = vld [vmem:[%s210 + $0x28] sm:$0xf]
        %v1483 = vld [vmem:[%s210 + $0x2c] sm:$0xf]
        %v1484 = vld [vmem:[%s210 + $0x30] sm:$0xf]
        %v1485 = vld [vmem:[%s210 + $0x34] sm:$0xf]
        %v1486 = vld [vmem:[%s210 + $0x38] sm:$0xf]
        %v1487 = vld [vmem:[%s210 + $0x3c] sm:$0xf]
        %v1488 = vld [vmem:[%s210 + $0x40] sm:$0xf]
        %v1489 = vld [vmem:[%s210 + $0x44] sm:$0xf]
        %v1490 = vld [vmem:[%s210 + $0x48] sm:$0xf]
        %v1491 = vld [vmem:[%s210 + $0x4c] sm:$0x3]
        %s1492 = scalar_lea.vmem [#allocation3], 256
        %v1493 = vld [vmem:[%s1492] sm:$0xf]
        %v1494 = vld [vmem:[%s1492 + $0x4] sm:$0xf]
        %v1495 = vld [vmem:[%s1492 + $0x8] sm:$0xf]
        %v1496 = vld [vmem:[%s1492 + $0xc] sm:$0xf]
        %v1497 = vld [vmem:[%s1492 + $0x10] sm:$0xf]
        %v1498 = vld [vmem:[%s1492 + $0x14] sm:$0xf]
        %v1499 = vld [vmem:[%s1492 + $0x18] sm:$0xf]
        %v1500 = vld [vmem:[%s1492 + $0x1c] sm:$0xf]
        %v1501 = vld [vmem:[%s1492 + $0x20] sm:$0xf]
        %v1502 = vld [vmem:[%s1492 + $0x24] sm:$0xf]
        %v1503 = vld [vmem:[%s1492 + $0x28] sm:$0xf]
        %v1504 = vld [vmem:[%s1492 + $0x2c] sm:$0xf]
        %v1505 = vld [vmem:[%s1492 + $0x30] sm:$0xf]
        %v1506 = vld [vmem:[%s1492 + $0x34] sm:$0xf]
        %v1507 = vld [vmem:[%s1492 + $0x38] sm:$0xf]
        %v1508 = vld [vmem:[%s1492 + $0x3c] sm:$0xf]
        %v1528 = vunpack.c.l.b16 %v1473
        %v1529 = vunpack.c.l.b16 %v1474
        %v1530 = vunpack.c.l.b16 %v1475
        %v1531 = vunpack.c.l.b16 %v1476
        %v1532 = vunpack.c.l.b16 %v1477
        %v1533 = vunpack.c.l.b16 %v1478
        %v1534 = vunpack.c.l.b16 %v1479
        %v1535 = vunpack.c.l.b16 %v1480
        %v1536 = vunpack.c.l.b16 %v1481
        %v1537 = vunpack.c.l.b16 %v1482
        %v1538 = vunpack.c.l.b16 %v1483
        %v1539 = vunpack.c.l.b16 %v1484
        %v1540 = vunpack.c.l.b16 %v1485
        %v1541 = vunpack.c.l.b16 %v1486
        %v1542 = vunpack.c.l.b16 %v1487
        %v1543 = vunpack.c.l.b16 %v1488
        %v1544 = vunpack.c.l.b16 %v1489
        %v1545 = vunpack.c.l.b16 %v1490
        %v1546 = vunpack.c.l.b16 %v1491
        %v1547 = vpack.c.b16 %v1529, %v1528
        %v1548 = vpack.c.b16 %v1531, %v1530
        %v1549 = vpack.c.b16 %v1533, %v1532
        %v1550 = vpack.c.b16 %v1535, %v1534
        %v1551 = vpack.c.b16 %v1537, %v1536
        %v1552 = vpack.c.b16 %v1539, %v1538
        %v1553 = vpack.c.b16 %v1541, %v1540
        %v1554 = vpack.c.b16 %v1543, %v1542
        %v1555 = vpack.c.b16 %v1545, %v1544
        %v1556 = vpack.c.b16 %v1546, %v1546
        %vm1557 = vsmask.f32 4352
        %v1559 = vshrl.u32 %v1547, 16
        %v1561 = vrot.slane %v1559, 3
        %v1562 = vshll.u32 %v1547, 16
        %v1564 = vrot.slane %v1562, 4
        %v1565 = vor.u32 %v1561, %v1564
        %v1567 = vshrl.u32 %v1548, 16
        %v1569 = vrot.slane %v1567, 3
        %v1570 = vshll.u32 %v1548, 16
        %v1572 = vrot.slane %v1570, 4
        %v1573 = vor.u32 %v1569, %v1572
        %v1574 = vsel %vm1557, %v1565, %v1573
        %v1576 = vshrl.u32 %v1549, 16
        %v1578 = vrot.slane %v1576, 3
        %v1579 = vshll.u32 %v1549, 16
        %v1581 = vrot.slane %v1579, 4
        %v1582 = vor.u32 %v1578, %v1581
        %v1583 = vsel %vm1557, %v1573, %v1582
        %v1585 = vshrl.u32 %v1550, 16
        %v1587 = vrot.slane %v1585, 3
        %v1588 = vshll.u32 %v1550, 16
        %v1590 = vrot.slane %v1588, 4
        %v1591 = vor.u32 %v1587, %v1590
        %v1592 = vsel %vm1557, %v1582, %v1591
        %v1594 = vshrl.u32 %v1551, 16
        %v1596 = vrot.slane %v1594, 3
        %v1597 = vshll.u32 %v1551, 16
        %v1599 = vrot.slane %v1597, 4
        %v1600 = vor.u32 %v1596, %v1599
        %v1601 = vsel %vm1557, %v1591, %v1600
        %v1603 = vshrl.u32 %v1552, 16
        %v1605 = vrot.slane %v1603, 3
        %v1606 = vshll.u32 %v1552, 16
        %v1608 = vrot.slane %v1606, 4
        %v1609 = vor.u32 %v1605, %v1608
        %v1610 = vsel %vm1557, %v1600, %v1609
        %v1612 = vshrl.u32 %v1553, 16
        %v1614 = vrot.slane %v1612, 3
        %v1615 = vshll.u32 %v1553, 16
        %v1617 = vrot.slane %v1615, 4
        %v1618 = vor.u32 %v1614, %v1617
        %v1619 = vsel %vm1557, %v1609, %v1618
        %v1621 = vshrl.u32 %v1554, 16
        %v1623 = vrot.slane %v1621, 3
        %v1624 = vshll.u32 %v1554, 16
        %v1626 = vrot.slane %v1624, 4
        %v1627 = vor.u32 %v1623, %v1626
        %v1628 = vsel %vm1557, %v1618, %v1627
        %v1630 = vshrl.u32 %v1555, 16
        %v1632 = vrot.slane %v1630, 3
        %v1633 = vshll.u32 %v1555, 16
        %v1635 = vrot.slane %v1633, 4
        %v1636 = vor.u32 %v1632, %v1635
        %v1637 = vsel %vm1557, %v1627, %v1636
        %v1639 = vshrl.u32 %v1556, 16
        %v1641 = vrot.slane %v1639, 3
        %v1642 = vshll.u32 %v1556, 16
        %v1644 = vrot.slane %v1642, 4
        %v1645 = vor.u32 %v1641, %v1644
        %v1646 = vsel %vm1557, %v1636, %v1645
        %v1672 = vunpack.c.l.b16 %v1493
        %v1673 = vunpack.c.l.b16 %v1494
        %v1674 = vunpack.c.l.b16 %v1495
        %v1675 = vunpack.c.l.b16 %v1496
        %v1676 = vunpack.c.l.b16 %v1497
        %v1677 = vunpack.c.l.b16 %v1498
        %v1678 = vunpack.c.l.b16 %v1499
        %v1679 = vunpack.c.l.b16 %v1500
        %v1680 = vunpack.c.l.b16 %v1501
        %v1681 = vunpack.c.l.b16 %v1502
        %v1682 = vunpack.c.l.b16 %v1503
        %v1683 = vunpack.c.l.b16 %v1504
        %v1684 = vunpack.c.l.b16 %v1505
        %v1685 = vunpack.c.l.b16 %v1506
        %v1686 = vunpack.c.l.b16 %v1507
        %v1687 = vunpack.c.l.b16 %v1508
        %v1688 = vpack.c.b16 %v1673, %v1672
        %v1689 = vpack.c.b16 %v1675, %v1674
        %v1690 = vpack.c.b16 %v1677, %v1676
        %v1691 = vpack.c.b16 %v1679, %v1678
        %v1692 = vpack.c.b16 %v1681, %v1680
        %v1693 = vpack.c.b16 %v1683, %v1682
        %v1694 = vpack.c.b16 %v1685, %v1684
        %v1695 = vpack.c.b16 %v1687, %v1686
        %1704 = vmatprep.subr.bf16.mxu0 0
        %1705 = vmatpush1.bf16.msra.mxu0 %v1688
        %1706 = vmatprep.subr.bf16.mxu0 0
        %1707 = vmatpush1.bf16.msra.mxu0 %v1689
        %1708 = vmatprep.subr.bf16.mxu0 0
        %1709 = vmatpush1.bf16.msra.mxu0 %v1690
        %1710 = vmatprep.subr.bf16.mxu0 0
        %1711 = vmatpush1.bf16.msra.mxu0 %v1691
        %1712 = vmatprep.subr.bf16.mxu0 0
        %1713 = vmatpush1.bf16.msra.mxu0 %v1692
        %1714 = vmatprep.subr.bf16.mxu0 0
        %1715 = vmatpush1.bf16.msra.mxu0 %v1693
        %1716 = vmatprep.subr.bf16.mxu0 0
        %1717 = vmatpush1.bf16.msra.mxu0 %v1694
        %1718 = vmatprep.subr.bf16.mxu0 0
        %1719 = vmatpush1.bf16.msra.mxu0 %v1695
        %1720 = vmatprep.subr.bf16.mxu0 0
        %1721 = vmatpush1.bf16.msra.mxu0 0
        %1722 = vmatprep.subr.bf16.mxu0 0
        %1723 = vmatpush1.bf16.msra.mxu0 0
        %1724 = vmatprep.subr.bf16.mxu0 0
        %1725 = vmatpush1.bf16.msra.mxu0 0
        %1726 = vmatprep.subr.bf16.mxu0 0
        %1727 = vmatpush1.bf16.msra.mxu0 0
        %1728 = vmatprep.subr.bf16.mxu0 0
        %1729 = vmatpush1.bf16.msra.mxu0 0
        %1730 = vmatprep.subr.bf16.mxu0 0
        %1731 = vmatpush1.bf16.msra.mxu0 0
        %1732 = vmatprep.subr.bf16.mxu0 0
        %1733 = vmatpush1.bf16.msra.mxu0 0
        %1734 = vmatprep.subr.bf16.mxu0 0
        %1735 = vmatpush1.bf16.msra.mxu0 0
        %1736 = vmatprep.mubr.bf16.mxu0 0
        %1737 = vmatmul.mubr.bf16.gmra.mrb[0].mxu0 %v1574
        %v1738 = vpop.f32.mrb[0].mxu0
        %v1739 = vadd.f32 0.0, %v1738
        %v1740 = vpop.f32.mrb[0].mxu0
        %v1741 = vpop.f32.mrb[0].mxu0
        %v1742 = vadd.f32 0.0, %v1741
        %v1743 = vpop.f32.mrb[0].mxu0
        %1744 = vmatprep.mubr.bf16.mxu0 0
        %1745 = vmatmul.mubr.bf16.gmra.mrb[0].mxu0 %v1583
        %v1746 = vpop.f32.mrb[0].mxu0
        %v1747 = vadd.f32 0.0, %v1746
        %v1748 = vpop.f32.mrb[0].mxu0
        %v1749 = vpop.f32.mrb[0].mxu0
        %v1750 = vadd.f32 0.0, %v1749
        %v1751 = vpop.f32.mrb[0].mxu0
        %1752 = vmatprep.mubr.bf16.mxu0 0
        %1753 = vmatmul.mubr.bf16.gmra.mrb[0].mxu0 %v1592
        %v1754 = vpop.f32.mrb[0].mxu0
        %v1755 = vadd.f32 0.0, %v1754
        %v1756 = vpop.f32.mrb[0].mxu0
        %v1757 = vpop.f32.mrb[0].mxu0
        %v1758 = vadd.f32 0.0, %v1757
        %v1759 = vpop.f32.mrb[0].mxu0
        %1760 = vmatprep.mubr.bf16.mxu0 0
        %1761 = vmatmul.mubr.bf16.gmra.mrb[0].mxu0 %v1601
        %v1762 = vpop.f32.mrb[0].mxu0
        %v1763 = vadd.f32 0.0, %v1762
        %v1764 = vpop.f32.mrb[0].mxu0
        %v1765 = vpop.f32.mrb[0].mxu0
        %v1766 = vadd.f32 0.0, %v1765
        %v1767 = vpop.f32.mrb[0].mxu0
        %1768 = vmatprep.mubr.bf16.mxu0 0
        %1769 = vmatmul.mubr.bf16.gmra.mrb[0].mxu0 %v1610
        %v1770 = vpop.f32.mrb[0].mxu0
        %v1771 = vadd.f32 0.0, %v1770
        %v1772 = vpop.f32.mrb[0].mxu0
        %v1773 = vpop.f32.mrb[0].mxu0
        %v1774 = vadd.f32 0.0, %v1773
        %v1775 = vpop.f32.mrb[0].mxu0
        %1776 = vmatprep.mubr.bf16.mxu0 0
        %1777 = vmatmul.mubr.bf16.gmra.mrb[0].mxu0 %v1619
        %v1778 = vpop.f32.mrb[0].mxu0
        %v1779 = vadd.f32 0.0, %v1778
        %v1780 = vpop.f32.mrb[0].mxu0
        %v1781 = vpop.f32.mrb[0].mxu0
        %v1782 = vadd.f32 0.0, %v1781
        %v1783 = vpop.f32.mrb[0].mxu0
        %1784 = vmatprep.mubr.bf16.mxu0 0
        %1785 = vmatmul.mubr.bf16.gmra.mrb[0].mxu0 %v1628
        %v1786 = vpop.f32.mrb[0].mxu0
        %v1787 = vadd.f32 0.0, %v1786
        %v1788 = vpop.f32.mrb[0].mxu0
        %v1789 = vpop.f32.mrb[0].mxu0
        %v1790 = vadd.f32 0.0, %v1789
        %v1791 = vpop.f32.mrb[0].mxu0
        %1792 = vmatprep.mubr.bf16.mxu0 0
        %1793 = vmatmul.mubr.bf16.gmra.mrb[0].mxu0 %v1637
        %v1794 = vpop.f32.mrb[0].mxu0
        %v1795 = vadd.f32 0.0, %v1794
        %v1796 = vpop.f32.mrb[0].mxu0
        %v1797 = vpop.f32.mrb[0].mxu0
        %v1798 = vadd.f32 0.0, %v1797
        %v1799 = vpop.f32.mrb[0].mxu0
        %1800 = vmatprep.mubr.bf16.mxu0 0
        %1801 = vmatmul.mubr.bf16.gmra.mrb[0].mxu0 %v1646
        %v1802 = vpop.f32.mrb[0].mxu0
        %v1803 = vadd.f32 0.0, %v1802
        %v1804 = vpop.f32.mrb[0].mxu0
        %v1805 = vpop.f32.mrb[0].mxu0
        %v1806 = vadd.f32 0.0, %v1805
        %v1807 = vpop.f32.mrb[0].mxu0
        %1808 = vdwg.mxu0
        %v1809 = vld [vmem:[#allocation2] sm:$0xff]
        %v1810 = vld [vmem:[#allocation2 + $0x8] sm:$0xff]
        %v1811 = vld [vmem:[#allocation2 + $0x10] sm:$0xff]
        %v1812 = vld [vmem:[#allocation2 + $0x18] sm:$0xff]
        %v1813 = vld [vmem:[#allocation2 + $0x20] sm:$0xff]
        %v1814 = vld [vmem:[#allocation2 + $0x28] sm:$0xff]
        %v1815 = vld [vmem:[#allocation2 + $0x30] sm:$0xff]
        %v1816 = vld [vmem:[#allocation2 + $0x38] sm:$0xff]
        %v1817 = vld [vmem:[#allocation2 + $0x40] sm:$0xff]
        %v1818 = vld [vmem:[#allocation2 + $0x48] sm:$0xff]
        %v1819 = vld [vmem:[#allocation2 + $0x50] sm:$0xff]
        %v1820 = vld [vmem:[#allocation2 + $0x58] sm:$0xff]
        %v1821 = vld [vmem:[#allocation2 + $0x60] sm:$0xff]
        %v1822 = vld [vmem:[#allocation2 + $0x68] sm:$0xff]
        %v1823 = vld [vmem:[#allocation2 + $0x70] sm:$0xff]
        %v1824 = vld [vmem:[#allocation2 + $0x78] sm:$0xff]
        %v1825 = vld [vmem:[#allocation2 + $0x80] sm:$0xff]
        %v1826 = vld [vmem:[#allocation2 + $0x88] sm:$0xf]
        %v1827 = vadd.f32 %v1809, %v1739
        %v1828 = vadd.f32 %v1810, %v1742
        %v1829 = vadd.f32 %v1811, %v1747
        %v1830 = vadd.f32 %v1812, %v1750
        %v1831 = vadd.f32 %v1813, %v1755
        %v1832 = vadd.f32 %v1814, %v1758
        %v1833 = vadd.f32 %v1815, %v1763
        %v1834 = vadd.f32 %v1816, %v1766
        %v1835 = vadd.f32 %v1817, %v1771
        %v1836 = vadd.f32 %v1818, %v1774
        %v1837 = vadd.f32 %v1819, %v1779
        %v1838 = vadd.f32 %v1820, %v1782
        %v1839 = vadd.f32 %v1821, %v1787
        %v1840 = vadd.f32 %v1822, %v1790
        %v1841 = vadd.f32 %v1823, %v1795
        %v1842 = vadd.f32 %v1824, %v1798
        %v1843 = vadd.f32 %v1825, %v1803
        %v1844 = vadd.f32 %v1826, %v1806
        %1845 = vst [vmem:[#allocation2] sm:$0xff] %v1827
        %1846 = vst [vmem:[#allocation2 + $0x8] sm:$0xff] %v1828
        %1847 = vst [vmem:[#allocation2 + $0x10] sm:$0xff] %v1829
        %1848 = vst [vmem:[#allocation2 + $0x18] sm:$0xff] %v1830
        %1849 = vst [vmem:[#allocation2 + $0x20] sm:$0xff] %v1831
        %1850 = vst [vmem:[#allocation2 + $0x28] sm:$0xff] %v1832
        %1851 = vst [vmem:[#allocation2 + $0x30] sm:$0xff] %v1833
        %1852 = vst [vmem:[#allocation2 + $0x38] sm:$0xff] %v1834
        %1853 = vst [vmem:[#allocation2 + $0x40] sm:$0xff] %v1835
        %1854 = vst [vmem:[#allocation2 + $0x48] sm:$0xff] %v1836
        %1855 = vst [vmem:[#allocation2 + $0x50] sm:$0xff] %v1837
        %1856 = vst [vmem:[#allocation2 + $0x58] sm:$0xff] %v1838
        %1857 = vst [vmem:[#allocation2 + $0x60] sm:$0xff] %v1839
        %1858 = vst [vmem:[#allocation2 + $0x68] sm:$0xff] %v1840
        %1859 = vst [vmem:[#allocation2 + $0x70] sm:$0xff] %v1841
        %1860 = vst [vmem:[#allocation2 + $0x78] sm:$0xff] %v1842
        %1861 = vst [vmem:[#allocation2 + $0x80] sm:$0xff] %v1843
        %1862 = vst [vmem:[#allocation2 + $0x88] sm:$0xf] %v1844
        %v1863 = vld [vmem:[%s210 + $0x8] sm:$0xf]
        %v1864 = vld [vmem:[%s210 + $0xc] sm:$0xf]
        %v1865 = vld [vmem:[%s210 + $0x10] sm:$0xf]
        %v1866 = vld [vmem:[%s210 + $0x14] sm:$0xf]
        %v1867 = vld [vmem:[%s210 + $0x18] sm:$0xf]
        %v1868 = vld [vmem:[%s210 + $0x1c] sm:$0xf]
        %v1869 = vld [vmem:[%s210 + $0x20] sm:$0xf]
        %v1870 = vld [vmem:[%s210 + $0x24] sm:$0xf]
        %v1871 = vld [vmem:[%s210 + $0x28] sm:$0xf]
        %v1872 = vld [vmem:[%s210 + $0x2c] sm:$0xf]
        %v1873 = vld [vmem:[%s210 + $0x30] sm:$0xf]
        %v1874 = vld [vmem:[%s210 + $0x34] sm:$0xf]
        %v1875 = vld [vmem:[%s210 + $0x38] sm:$0xf]
        %v1876 = vld [vmem:[%s210 + $0x3c] sm:$0xf]
        %v1877 = vld [vmem:[%s210 + $0x40] sm:$0xf]
        %v1878 = vld [vmem:[%s210 + $0x44] sm:$0xf]
        %v1879 = vld [vmem:[%s210 + $0x48] sm:$0xf]
        %v1880 = vld [vmem:[%s210 + $0x4c] sm:$0x3]
        %s1881 = scalar_lea.vmem [#allocation3], 320
        %v1882 = vld [vmem:[%s1881] sm:$0xf]
        %v1883 = vld [vmem:[%s1881 + $0x4] sm:$0xf]
        %v1884 = vld [vmem:[%s1881 + $0x8] sm:$0xf]
        %v1885 = vld [vmem:[%s1881 + $0xc] sm:$0xf]
        %v1886 = vld [vmem:[%s1881 + $0x10] sm:$0xf]
        %v1887 = vld [vmem:[%s1881 + $0x14] sm:$0xf]
        %v1888 = vld [vmem:[%s1881 + $0x18] sm:$0xf]
        %v1889 = vld [vmem:[%s1881 + $0x1c] sm:$0xf]
        %v1890 = vld [vmem:[%s1881 + $0x20] sm:$0xf]
        %v1891 = vld [vmem:[%s1881 + $0x24] sm:$0xf]
        %v1892 = vld [vmem:[%s1881 + $0x28] sm:$0xf]
        %v1893 = vld [vmem:[%s1881 + $0x2c] sm:$0xf]
        %v1894 = vld [vmem:[%s1881 + $0x30] sm:$0xf]
        %v1895 = vld [vmem:[%s1881 + $0x34] sm:$0xf]
        %v1896 = vld [vmem:[%s1881 + $0x38] sm:$0xf]
        %v1897 = vld [vmem:[%s1881 + $0x3c] sm:$0xf]
        %v1916 = vunpack.c.l.b16 %v1863
        %v1917 = vunpack.c.l.b16 %v1864
        %v1918 = vunpack.c.l.b16 %v1865
        %v1919 = vunpack.c.l.b16 %v1866
        %v1920 = vunpack.c.l.b16 %v1867
        %v1921 = vunpack.c.l.b16 %v1868
        %v1922 = vunpack.c.l.b16 %v1869
        %v1923 = vunpack.c.l.b16 %v1870
        %v1924 = vunpack.c.l.b16 %v1871
        %v1925 = vunpack.c.l.b16 %v1872
        %v1926 = vunpack.c.l.b16 %v1873
        %v1927 = vunpack.c.l.b16 %v1874
        %v1928 = vunpack.c.l.b16 %v1875
        %v1929 = vunpack.c.l.b16 %v1876
        %v1930 = vunpack.c.l.b16 %v1877
        %v1931 = vunpack.c.l.b16 %v1878
        %v1932 = vunpack.c.l.b16 %v1879
        %v1933 = vunpack.c.l.b16 %v1880
        %v1934 = vpack.c.b16 %v1917, %v1916
        %v1935 = vpack.c.b16 %v1919, %v1918
        %v1936 = vpack.c.b16 %v1921, %v1920
        %v1937 = vpack.c.b16 %v1923, %v1922
        %v1938 = vpack.c.b16 %v1925, %v1924
        %v1939 = vpack.c.b16 %v1927, %v1926
        %v1940 = vpack.c.b16 %v1929, %v1928
        %v1941 = vpack.c.b16 %v1931, %v1930
        %v1942 = vpack.c.b16 %v1933, %v1932
        %v1968 = vunpack.c.l.b16 %v1882
        %v1969 = vunpack.c.l.b16 %v1883
        %v1970 = vunpack.c.l.b16 %v1884
        %v1971 = vunpack.c.l.b16 %v1885
        %v1972 = vunpack.c.l.b16 %v1886
        %v1973 = vunpack.c.l.b16 %v1887
        %v1974 = vunpack.c.l.b16 %v1888
        %v1975 = vunpack.c.l.b16 %v1889
        %v1976 = vunpack.c.l.b16 %v1890
        %v1977 = vunpack.c.l.b16 %v1891
        %v1978 = vunpack.c.l.b16 %v1892
        %v1979 = vunpack.c.l.b16 %v1893
        %v1980 = vunpack.c.l.b16 %v1894
        %v1981 = vunpack.c.l.b16 %v1895
        %v1982 = vunpack.c.l.b16 %v1896
        %v1983 = vunpack.c.l.b16 %v1897
        %v1984 = vpack.c.b16 %v1969, %v1968
        %v1985 = vpack.c.b16 %v1971, %v1970
        %v1986 = vpack.c.b16 %v1973, %v1972
        %v1987 = vpack.c.b16 %v1975, %v1974
        %v1988 = vpack.c.b16 %v1977, %v1976
        %v1989 = vpack.c.b16 %v1979, %v1978
        %v1990 = vpack.c.b16 %v1981, %v1980
        %v1991 = vpack.c.b16 %v1983, %v1982
        %2000 = vmatprep.subr.bf16.mxu0 0
        %2001 = vmatpush1.bf16.msra.mxu0 %v1984
        %2002 = vmatprep.subr.bf16.mxu0 0
        %2003 = vmatpush1.bf16.msra.mxu0 %v1985
        %2004 = vmatprep.subr.bf16.mxu0 0
        %2005 = vmatpush1.bf16.msra.mxu0 %v1986
        %2006 = vmatprep.subr.bf16.mxu0 0
        %2007 = vmatpush1.bf16.msra.mxu0 %v1987
        %2008 = vmatprep.subr.bf16.mxu0 0
        %2009 = vmatpush1.bf16.msra.mxu0 %v1988
        %2010 = vmatprep.subr.bf16.mxu0 0
        %2011 = vmatpush1.bf16.msra.mxu0 %v1989
        %2012 = vmatprep.subr.bf16.mxu0 0
        %2013 = vmatpush1.bf16.msra.mxu0 %v1990
        %2014 = vmatprep.subr.bf16.mxu0 0
        %2015 = vmatpush1.bf16.msra.mxu0 %v1991
        %2016 = vmatprep.subr.bf16.mxu0 0
        %2017 = vmatpush1.bf16.msra.mxu0 0
        %2018 = vmatprep.subr.bf16.mxu0 0
        %2019 = vmatpush1.bf16.msra.mxu0 0
        %2020 = vmatprep.subr.bf16.mxu0 0
        %2021 = vmatpush1.bf16.msra.mxu0 0
        %2022 = vmatprep.subr.bf16.mxu0 0
        %2023 = vmatpush1.bf16.msra.mxu0 0
        %2024 = vmatprep.subr.bf16.mxu0 0
        %2025 = vmatpush1.bf16.msra.mxu0 0
        %2026 = vmatprep.subr.bf16.mxu0 0
        %2027 = vmatpush1.bf16.msra.mxu0 0
        %2028 = vmatprep.subr.bf16.mxu0 0
        %2029 = vmatpush1.bf16.msra.mxu0 0
        %2030 = vmatprep.subr.bf16.mxu0 0
        %2031 = vmatpush1.bf16.msra.mxu0 0
        %2032 = vmatprep.mubr.bf16.mxu0 0
        %2033 = vmatmul.mubr.bf16.gmra.mrb[0].mxu0 %v1934
        %v2034 = vpop.f32.mrb[0].mxu0
        %v2035 = vadd.f32 0.0, %v2034
        %v2036 = vpop.f32.mrb[0].mxu0
        %v2037 = vpop.f32.mrb[0].mxu0
        %v2038 = vadd.f32 0.0, %v2037
        %v2039 = vpop.f32.mrb[0].mxu0
        %2040 = vmatprep.mubr.bf16.mxu0 0
        %2041 = vmatmul.mubr.bf16.gmra.mrb[0].mxu0 %v1935
        %v2042 = vpop.f32.mrb[0].mxu0
        %v2043 = vadd.f32 0.0, %v2042
        %v2044 = vpop.f32.mrb[0].mxu0
        %v2045 = vpop.f32.mrb[0].mxu0
        %v2046 = vadd.f32 0.0, %v2045
        %v2047 = vpop.f32.mrb[0].mxu0
        %2048 = vmatprep.mubr.bf16.mxu0 0
        %2049 = vmatmul.mubr.bf16.gmra.mrb[0].mxu0 %v1936
        %v2050 = vpop.f32.mrb[0].mxu0
        %v2051 = vadd.f32 0.0, %v2050
        %v2052 = vpop.f32.mrb[0].mxu0
        %v2053 = vpop.f32.mrb[0].mxu0
        %v2054 = vadd.f32 0.0, %v2053
        %v2055 = vpop.f32.mrb[0].mxu0
        %2056 = vmatprep.mubr.bf16.mxu0 0
        %2057 = vmatmul.mubr.bf16.gmra.mrb[0].mxu0 %v1937
        %v2058 = vpop.f32.mrb[0].mxu0
        %v2059 = vadd.f32 0.0, %v2058
        %v2060 = vpop.f32.mrb[0].mxu0
        %v2061 = vpop.f32.mrb[0].mxu0
        %v2062 = vadd.f32 0.0, %v2061
        %v2063 = vpop.f32.mrb[0].mxu0
        %2064 = vmatprep.mubr.bf16.mxu0 0
        %2065 = vmatmul.mubr.bf16.gmra.mrb[0].mxu0 %v1938
        %v2066 = vpop.f32.mrb[0].mxu0
        %v2067 = vadd.f32 0.0, %v2066
        %v2068 = vpop.f32.mrb[0].mxu0
        %v2069 = vpop.f32.mrb[0].mxu0
        %v2070 = vadd.f32 0.0, %v2069
        %v2071 = vpop.f32.mrb[0].mxu0
        %2072 = vmatprep.mubr.bf16.mxu0 0
        %2073 = vmatmul.mubr.bf16.gmra.mrb[0].mxu0 %v1939
        %v2074 = vpop.f32.mrb[0].mxu0
        %v2075 = vadd.f32 0.0, %v2074
        %v2076 = vpop.f32.mrb[0].mxu0
        %v2077 = vpop.f32.mrb[0].mxu0
        %v2078 = vadd.f32 0.0, %v2077
        %v2079 = vpop.f32.mrb[0].mxu0
        %2080 = vmatprep.mubr.bf16.mxu0 0
        %2081 = vmatmul.mubr.bf16.gmra.mrb[0].mxu0 %v1940
        %v2082 = vpop.f32.mrb[0].mxu0
        %v2083 = vadd.f32 0.0, %v2082
        %v2084 = vpop.f32.mrb[0].mxu0
        %v2085 = vpop.f32.mrb[0].mxu0
        %v2086 = vadd.f32 0.0, %v2085
        %v2087 = vpop.f32.mrb[0].mxu0
        %2088 = vmatprep.mubr.bf16.mxu0 0
        %2089 = vmatmul.mubr.bf16.gmra.mrb[0].mxu0 %v1941
        %v2090 = vpop.f32.mrb[0].mxu0
        %v2091 = vadd.f32 0.0, %v2090
        %v2092 = vpop.f32.mrb[0].mxu0
        %v2093 = vpop.f32.mrb[0].mxu0
        %v2094 = vadd.f32 0.0, %v2093
        %v2095 = vpop.f32.mrb[0].mxu0
        %2096 = vmatprep.mubr.bf16.mxu0 0
        %2097 = vmatmul.mubr.bf16.gmra.mrb[0].mxu0 %v1942
        %v2098 = vpop.f32.mrb[0].mxu0
        %v2099 = vadd.f32 0.0, %v2098
        %v2100 = vpop.f32.mrb[0].mxu0
        %v2101 = vpop.f32.mrb[0].mxu0
        %v2102 = vadd.f32 0.0, %v2101
        %v2103 = vpop.f32.mrb[0].mxu0
        %2104 = vdwg.mxu0
        %v2105 = vld [vmem:[#allocation2] sm:$0xff]
        %v2106 = vld [vmem:[#allocation2 + $0x8] sm:$0xff]
        %v2107 = vld [vmem:[#allocation2 + $0x10] sm:$0xff]
        %v2108 = vld [vmem:[#allocation2 + $0x18] sm:$0xff]
        %v2109 = vld [vmem:[#allocation2 + $0x20] sm:$0xff]
        %v2110 = vld [vmem:[#allocation2 + $0x28] sm:$0xff]
        %v2111 = vld [vmem:[#allocation2 + $0x30] sm:$0xff]
        %v2112 = vld [vmem:[#allocation2 + $0x38] sm:$0xff]
        %v2113 = vld [vmem:[#allocation2 + $0x40] sm:$0xff]
        %v2114 = vld [vmem:[#allocation2 + $0x48] sm:$0xff]
        %v2115 = vld [vmem:[#allocation2 + $0x50] sm:$0xff]
        %v2116 = vld [vmem:[#allocation2 + $0x58] sm:$0xff]
        %v2117 = vld [vmem:[#allocation2 + $0x60] sm:$0xff]
        %v2118 = vld [vmem:[#allocation2 + $0x68] sm:$0xff]
        %v2119 = vld [vmem:[#allocation2 + $0x70] sm:$0xff]
        %v2120 = vld [vmem:[#allocation2 + $0x78] sm:$0xff]
        %v2121 = vld [vmem:[#allocation2 + $0x80] sm:$0xff]
        %v2122 = vld [vmem:[#allocation2 + $0x88] sm:$0xf]
        %v2123 = vadd.f32 %v2105, %v2035
        %v2124 = vadd.f32 %v2106, %v2038
        %v2125 = vadd.f32 %v2107, %v2043
        %v2126 = vadd.f32 %v2108, %v2046
        %v2127 = vadd.f32 %v2109, %v2051
        %v2128 = vadd.f32 %v2110, %v2054
        %v2129 = vadd.f32 %v2111, %v2059
        %v2130 = vadd.f32 %v2112, %v2062
        %v2131 = vadd.f32 %v2113, %v2067
        %v2132 = vadd.f32 %v2114, %v2070
        %v2133 = vadd.f32 %v2115, %v2075
        %v2134 = vadd.f32 %v2116, %v2078
        %v2135 = vadd.f32 %v2117, %v2083
        %v2136 = vadd.f32 %v2118, %v2086
        %v2137 = vadd.f32 %v2119, %v2091
        %v2138 = vadd.f32 %v2120, %v2094
        %v2139 = vadd.f32 %v2121, %v2099
        %v2140 = vadd.f32 %v2122, %v2102
        %2141 = vst [vmem:[#allocation2] sm:$0xff] %v2123
        %2142 = vst [vmem:[#allocation2 + $0x8] sm:$0xff] %v2124
        %2143 = vst [vmem:[#allocation2 + $0x10] sm:$0xff] %v2125
        %2144 = vst [vmem:[#allocation2 + $0x18] sm:$0xff] %v2126
        %2145 = vst [vmem:[#allocation2 + $0x20] sm:$0xff] %v2127
        %2146 = vst [vmem:[#allocation2 + $0x28] sm:$0xff] %v2128
        %2147 = vst [vmem:[#allocation2 + $0x30] sm:$0xff] %v2129
        %2148 = vst [vmem:[#allocation2 + $0x38] sm:$0xff] %v2130
        %2149 = vst [vmem:[#allocation2 + $0x40] sm:$0xff] %v2131
        %2150 = vst [vmem:[#allocation2 + $0x48] sm:$0xff] %v2132
        %2151 = vst [vmem:[#allocation2 + $0x50] sm:$0xff] %v2133
        %2152 = vst [vmem:[#allocation2 + $0x58] sm:$0xff] %v2134
        %2153 = vst [vmem:[#allocation2 + $0x60] sm:$0xff] %v2135
        %2154 = vst [vmem:[#allocation2 + $0x68] sm:$0xff] %v2136
        %2155 = vst [vmem:[#allocation2 + $0x70] sm:$0xff] %v2137
        %2156 = vst [vmem:[#allocation2 + $0x78] sm:$0xff] %v2138
        %2157 = vst [vmem:[#allocation2 + $0x80] sm:$0xff] %v2139
        %2158 = vst [vmem:[#allocation2 + $0x88] sm:$0xf] %v2140
        %v2159 = vld [vmem:[%s210 + $0xc] sm:$0xc]
        %v2160 = vld [vmem:[%s210 + $0x10] sm:$0xf]
        %v2161 = vld [vmem:[%s210 + $0x14] sm:$0xf]
        %v2162 = vld [vmem:[%s210 + $0x18] sm:$0xf]
        %v2163 = vld [vmem:[%s210 + $0x1c] sm:$0xf]
        %v2164 = vld [vmem:[%s210 + $0x20] sm:$0xf]
        %v2165 = vld [vmem:[%s210 + $0x24] sm:$0xf]
        %v2166 = vld [vmem:[%s210 + $0x28] sm:$0xf]
        %v2167 = vld [vmem:[%s210 + $0x2c] sm:$0xf]
        %v2168 = vld [vmem:[%s210 + $0x30] sm:$0xf]
        %v2169 = vld [vmem:[%s210 + $0x34] sm:$0xf]
        %v2170 = vld [vmem:[%s210 + $0x38] sm:$0xf]
        %v2171 = vld [vmem:[%s210 + $0x3c] sm:$0xf]
        %v2172 = vld [vmem:[%s210 + $0x40] sm:$0xf]
        %v2173 = vld [vmem:[%s210 + $0x44] sm:$0xf]
        %v2174 = vld [vmem:[%s210 + $0x48] sm:$0xf]
        %v2175 = vld [vmem:[%s210 + $0x4c] sm:$0xf]
        %v2176 = vld [vmem:[%s210 + $0x50] sm:$0xf]
        %s2177 = scalar_lea.vmem [#allocation3], 384
        %v2178 = vld [vmem:[%s2177] sm:$0xf]
        %v2179 = vld [vmem:[%s2177 + $0x4] sm:$0xf]
        %v2180 = vld [vmem:[%s2177 + $0x8] sm:$0xf]
        %v2181 = vld [vmem:[%s2177 + $0xc] sm:$0xf]
        %v2182 = vld [vmem:[%s2177 + $0x10] sm:$0xf]
        %v2183 = vld [vmem:[%s2177 + $0x14] sm:$0xf]
        %v2184 = vld [vmem:[%s2177 + $0x18] sm:$0xf]
        %v2185 = vld [vmem:[%s2177 + $0x1c] sm:$0xf]
        %v2186 = vld [vmem:[%s2177 + $0x20] sm:$0xf]
        %v2187 = vld [vmem:[%s2177 + $0x24] sm:$0xf]
        %v2188 = vld [vmem:[%s2177 + $0x28] sm:$0xf]
        %v2189 = vld [vmem:[%s2177 + $0x2c] sm:$0xf]
        %v2190 = vld [vmem:[%s2177 + $0x30] sm:$0xf]
        %v2191 = vld [vmem:[%s2177 + $0x34] sm:$0xf]
        %v2192 = vld [vmem:[%s2177 + $0x38] sm:$0xf]
        %v2193 = vld [vmem:[%s2177 + $0x3c] sm:$0xf]
        %v2212 = vunpack.c.l.b16 %v2159
        %v2213 = vunpack.c.l.b16 %v2160
        %v2214 = vunpack.c.l.b16 %v2161
        %v2215 = vunpack.c.l.b16 %v2162
        %v2216 = vunpack.c.l.b16 %v2163
        %v2217 = vunpack.c.l.b16 %v2164
        %v2218 = vunpack.c.l.b16 %v2165
        %v2219 = vunpack.c.l.b16 %v2166
        %v2220 = vunpack.c.l.b16 %v2167
        %v2221 = vunpack.c.l.b16 %v2168
        %v2222 = vunpack.c.l.b16 %v2169
        %v2223 = vunpack.c.l.b16 %v2170
        %v2224 = vunpack.c.l.b16 %v2171
        %v2225 = vunpack.c.l.b16 %v2172
        %v2226 = vunpack.c.l.b16 %v2173
        %v2227 = vunpack.c.l.b16 %v2174
        %v2228 = vunpack.c.l.b16 %v2175
        %v2229 = vunpack.c.l.b16 %v2176
        %v2230 = vpack.c.b16 %v2213, %v2212
        %v2231 = vpack.c.b16 %v2215, %v2214
        %v2232 = vpack.c.b16 %v2217, %v2216
        %v2233 = vpack.c.b16 %v2219, %v2218
        %v2234 = vpack.c.b16 %v2221, %v2220
        %v2235 = vpack.c.b16 %v2223, %v2222
        %v2236 = vpack.c.b16 %v2225, %v2224
        %v2237 = vpack.c.b16 %v2227, %v2226
        %v2238 = vpack.c.b16 %v2229, %v2228
        %vm2239 = vcmask 1045504
        %v2240 = vrot.slane %v2230, 2
        %v2241 = vrot.slane %v2231, 2
        %v2242 = vsel %vm2239, %v2240, %v2241
        %v2243 = vrot.slane %v2232, 2
        %v2244 = vsel %vm2239, %v2241, %v2243
        %v2245 = vrot.slane %v2233, 2
        %v2246 = vsel %vm2239, %v2243, %v2245
        %v2247 = vrot.slane %v2234, 2
        %v2248 = vsel %vm2239, %v2245, %v2247
        %v2249 = vrot.slane %v2235, 2
        %v2250 = vsel %vm2239, %v2247, %v2249
        %v2251 = vrot.slane %v2236, 2
        %v2252 = vsel %vm2239, %v2249, %v2251
        %v2253 = vrot.slane %v2237, 2
        %v2254 = vsel %vm2239, %v2251, %v2253
        %v2255 = vrot.slane %v2238, 2
        %v2256 = vsel %vm2239, %v2253, %v2255
        %v2282 = vunpack.c.l.b16 %v2178
        %v2283 = vunpack.c.l.b16 %v2179
        %v2284 = vunpack.c.l.b16 %v2180
        %v2285 = vunpack.c.l.b16 %v2181
        %v2286 = vunpack.c.l.b16 %v2182
        %v2287 = vunpack.c.l.b16 %v2183
        %v2288 = vunpack.c.l.b16 %v2184
        %v2289 = vunpack.c.l.b16 %v2185
        %v2290 = vunpack.c.l.b16 %v2186
        %v2291 = vunpack.c.l.b16 %v2187
        %v2292 = vunpack.c.l.b16 %v2188
        %v2293 = vunpack.c.l.b16 %v2189
        %v2294 = vunpack.c.l.b16 %v2190
        %v2295 = vunpack.c.l.b16 %v2191
        %v2296 = vunpack.c.l.b16 %v2192
        %v2297 = vunpack.c.l.b16 %v2193
        %v2298 = vpack.c.b16 %v2283, %v2282
        %v2299 = vpack.c.b16 %v2285, %v2284
        %v2300 = vpack.c.b16 %v2287, %v2286
        %v2301 = vpack.c.b16 %v2289, %v2288
        %v2302 = vpack.c.b16 %v2291, %v2290
        %v2303 = vpack.c.b16 %v2293, %v2292
        %v2304 = vpack.c.b16 %v2295, %v2294
        %v2305 = vpack.c.b16 %v2297, %v2296
        %2314 = vmatprep.subr.bf16.mxu0 0
        %2315 = vmatpush1.bf16.msra.mxu0 %v2298
        %2316 = vmatprep.subr.bf16.mxu0 0
        %2317 = vmatpush1.bf16.msra.mxu0 %v2299
        %2318 = vmatprep.subr.bf16.mxu0 0
        %2319 = vmatpush1.bf16.msra.mxu0 %v2300
        %2320 = vmatprep.subr.bf16.mxu0 0
        %2321 = vmatpush1.bf16.msra.mxu0 %v2301
        %2322 = vmatprep.subr.bf16.mxu0 0
        %2323 = vmatpush1.bf16.msra.mxu0 %v2302
        %2324 = vmatprep.subr.bf16.mxu0 0
        %2325 = vmatpush1.bf16.msra.mxu0 %v2303
        %2326 = vmatprep.subr.bf16.mxu0 0
        %2327 = vmatpush1.bf16.msra.mxu0 %v2304
        %2328 = vmatprep.subr.bf16.mxu0 0
        %2329 = vmatpush1.bf16.msra.mxu0 %v2305
        %2330 = vmatprep.subr.bf16.mxu0 0
        %2331 = vmatpush1.bf16.msra.mxu0 0
        %2332 = vmatprep.subr.bf16.mxu0 0
        %2333 = vmatpush1.bf16.msra.mxu0 0
        %2334 = vmatprep.subr.bf16.mxu0 0
        %2335 = vmatpush1.bf16.msra.mxu0 0
        %2336 = vmatprep.subr.bf16.mxu0 0
        %2337 = vmatpush1.bf16.msra.mxu0 0
        %2338 = vmatprep.subr.bf16.mxu0 0
        %2339 = vmatpush1.bf16.msra.mxu0 0
        %2340 = vmatprep.subr.bf16.mxu0 0
        %2341 = vmatpush1.bf16.msra.mxu0 0
        %2342 = vmatprep.subr.bf16.mxu0 0
        %2343 = vmatpush1.bf16.msra.mxu0 0
        %2344 = vmatprep.subr.bf16.mxu0 0
        %2345 = vmatpush1.bf16.msra.mxu0 0
        %2346 = vmatprep.mubr.bf16.mxu0 0
        %2347 = vmatmul.mubr.bf16.gmra.mrb[0].mxu0 %v2242
        %v2348 = vpop.f32.mrb[0].mxu0
        %v2349 = vadd.f32 0.0, %v2348
        %v2350 = vpop.f32.mrb[0].mxu0
        %v2351 = vpop.f32.mrb[0].mxu0
        %v2352 = vadd.f32 0.0, %v2351
        %v2353 = vpop.f32.mrb[0].mxu0
        %2354 = vmatprep.mubr.bf16.mxu0 0
        %2355 = vmatmul.mubr.bf16.gmra.mrb[0].mxu0 %v2244
        %v2356 = vpop.f32.mrb[0].mxu0
        %v2357 = vadd.f32 0.0, %v2356
        %v2358 = vpop.f32.mrb[0].mxu0
        %v2359 = vpop.f32.mrb[0].mxu0
        %v2360 = vadd.f32 0.0, %v2359
        %v2361 = vpop.f32.mrb[0].mxu0
        %2362 = vmatprep.mubr.bf16.mxu0 0
        %2363 = vmatmul.mubr.bf16.gmra.mrb[0].mxu0 %v2246
        %v2364 = vpop.f32.mrb[0].mxu0
        %v2365 = vadd.f32 0.0, %v2364
        %v2366 = vpop.f32.mrb[0].mxu0
        %v2367 = vpop.f32.mrb[0].mxu0
        %v2368 = vadd.f32 0.0, %v2367
        %v2369 = vpop.f32.mrb[0].mxu0
        %2370 = vmatprep.mubr.bf16.mxu0 0
        %2371 = vmatmul.mubr.bf16.gmra.mrb[0].mxu0 %v2248
        %v2372 = vpop.f32.mrb[0].mxu0
        %v2373 = vadd.f32 0.0, %v2372
        %v2374 = vpop.f32.mrb[0].mxu0
        %v2375 = vpop.f32.mrb[0].mxu0
        %v2376 = vadd.f32 0.0, %v2375
        %v2377 = vpop.f32.mrb[0].mxu0
        %2378 = vmatprep.mubr.bf16.mxu0 0
        %2379 = vmatmul.mubr.bf16.gmra.mrb[0].mxu0 %v2250
        %v2380 = vpop.f32.mrb[0].mxu0
        %v2381 = vadd.f32 0.0, %v2380
        %v2382 = vpop.f32.mrb[0].mxu0
        %v2383 = vpop.f32.mrb[0].mxu0
        %v2384 = vadd.f32 0.0, %v2383
        %v2385 = vpop.f32.mrb[0].mxu0
        %2386 = vmatprep.mubr.bf16.mxu0 0
        %2387 = vmatmul.mubr.bf16.gmra.mrb[0].mxu0 %v2252
        %v2388 = vpop.f32.mrb[0].mxu0
        %v2389 = vadd.f32 0.0, %v2388
        %v2390 = vpop.f32.mrb[0].mxu0
        %v2391 = vpop.f32.mrb[0].mxu0
        %v2392 = vadd.f32 0.0, %v2391
        %v2393 = vpop.f32.mrb[0].mxu0
        %2394 = vmatprep.mubr.bf16.mxu0 0
        %2395 = vmatmul.mubr.bf16.gmra.mrb[0].mxu0 %v2254
        %v2396 = vpop.f32.mrb[0].mxu0
        %v2397 = vadd.f32 0.0, %v2396
        %v2398 = vpop.f32.mrb[0].mxu0
        %v2399 = vpop.f32.mrb[0].mxu0
        %v2400 = vadd.f32 0.0, %v2399
        %v2401 = vpop.f32.mrb[0].mxu0
        %2402 = vmatprep.mubr.bf16.mxu0 0
        %2403 = vmatmul.mubr.bf16.gmra.mrb[0].mxu0 %v2256
        %v2404 = vpop.f32.mrb[0].mxu0
        %v2405 = vadd.f32 0.0, %v2404
        %v2406 = vpop.f32.mrb[0].mxu0
        %v2407 = vpop.f32.mrb[0].mxu0
        %v2408 = vadd.f32 0.0, %v2407
        %v2409 = vpop.f32.mrb[0].mxu0
        %2410 = vmatprep.mubr.bf16.mxu0 0
        %2411 = vmatmul.mubr.bf16.gmra.mrb[0].mxu0 %v2255
        %v2412 = vpop.f32.mrb[0].mxu0
        %v2413 = vadd.f32 0.0, %v2412
        %v2414 = vpop.f32.mrb[0].mxu0
        %v2415 = vpop.f32.mrb[0].mxu0
        %v2416 = vadd.f32 0.0, %v2415
        %v2417 = vpop.f32.mrb[0].mxu0
        %2418 = vdwg.mxu0
        %v2419 = vld [vmem:[#allocation2] sm:$0xff]
        %v2420 = vld [vmem:[#allocation2 + $0x8] sm:$0xff]
        %v2421 = vld [vmem:[#allocation2 + $0x10] sm:$0xff]
        %v2422 = vld [vmem:[#allocation2 + $0x18] sm:$0xff]
        %v2423 = vld [vmem:[#allocation2 + $0x20] sm:$0xff]
        %v2424 = vld [vmem:[#allocation2 + $0x28] sm:$0xff]
        %v2425 = vld [vmem:[#allocation2 + $0x30] sm:$0xff]
        %v2426 = vld [vmem:[#allocation2 + $0x38] sm:$0xff]
        %v2427 = vld [vmem:[#allocation2 + $0x40] sm:$0xff]
        %v2428 = vld [vmem:[#allocation2 + $0x48] sm:$0xff]
        %v2429 = vld [vmem:[#allocation2 + $0x50] sm:$0xff]
        %v2430 = vld [vmem:[#allocation2 + $0x58] sm:$0xff]
        %v2431 = vld [vmem:[#allocation2 + $0x60] sm:$0xff]
        %v2432 = vld [vmem:[#allocation2 + $0x68] sm:$0xff]
        %v2433 = vld [vmem:[#allocation2 + $0x70] sm:$0xff]
        %v2434 = vld [vmem:[#allocation2 + $0x78] sm:$0xff]
        %v2435 = vld [vmem:[#allocation2 + $0x80] sm:$0xff]
        %v2436 = vld [vmem:[#allocation2 + $0x88] sm:$0xf]
        %v2437 = vadd.f32 %v2419, %v2349
        %v2438 = vadd.f32 %v2420, %v2352
        %v2439 = vadd.f32 %v2421, %v2357
        %v2440 = vadd.f32 %v2422, %v2360
        %v2441 = vadd.f32 %v2423, %v2365
        %v2442 = vadd.f32 %v2424, %v2368
        %v2443 = vadd.f32 %v2425, %v2373
        %v2444 = vadd.f32 %v2426, %v2376
        %v2445 = vadd.f32 %v2427, %v2381
        %v2446 = vadd.f32 %v2428, %v2384
        %v2447 = vadd.f32 %v2429, %v2389
        %v2448 = vadd.f32 %v2430, %v2392
        %v2449 = vadd.f32 %v2431, %v2397
        %v2450 = vadd.f32 %v2432, %v2400
        %v2451 = vadd.f32 %v2433, %v2405
        %v2452 = vadd.f32 %v2434, %v2408
        %v2453 = vadd.f32 %v2435, %v2413
        %v2454 = vadd.f32 %v2436, %v2416
        %2455 = vst [vmem:[#allocation2] sm:$0xff] %v2437
        %2456 = vst [vmem:[#allocation2 + $0x8] sm:$0xff] %v2438
        %2457 = vst [vmem:[#allocation2 + $0x10] sm:$0xff] %v2439
        %2458 = vst [vmem:[#allocation2 + $0x18] sm:$0xff] %v2440
        %2459 = vst [vmem:[#allocation2 + $0x20] sm:$0xff] %v2441
        %2460 = vst [vmem:[#allocation2 + $0x28] sm:$0xff] %v2442
        %2461 = vst [vmem:[#allocation2 + $0x30] sm:$0xff] %v2443
        %2462 = vst [vmem:[#allocation2 + $0x38] sm:$0xff] %v2444
        %2463 = vst [vmem:[#allocation2 + $0x40] sm:$0xff] %v2445
        %2464 = vst [vmem:[#allocation2 + $0x48] sm:$0xff] %v2446
        %2465 = vst [vmem:[#allocation2 + $0x50] sm:$0xff] %v2447
        %2466 = vst [vmem:[#allocation2 + $0x58] sm:$0xff] %v2448
        %2467 = vst [vmem:[#allocation2 + $0x60] sm:$0xff] %v2449
        %2468 = vst [vmem:[#allocation2 + $0x68] sm:$0xff] %v2450
        %2469 = vst [vmem:[#allocation2 + $0x70] sm:$0xff] %v2451
        %2470 = vst [vmem:[#allocation2 + $0x78] sm:$0xff] %v2452
        %2471 = vst [vmem:[#allocation2 + $0x80] sm:$0xff] %v2453
        %2472 = vst [vmem:[#allocation2 + $0x88] sm:$0xf] %v2454
        %v2473 = vld [vmem:[%s210 + $0xc] sm:$0xc]
        %v2474 = vld [vmem:[%s210 + $0x10] sm:$0xf]
        %v2475 = vld [vmem:[%s210 + $0x14] sm:$0xf]
        %v2476 = vld [vmem:[%s210 + $0x18] sm:$0xf]
        %v2477 = vld [vmem:[%s210 + $0x1c] sm:$0xf]
        %v2478 = vld [vmem:[%s210 + $0x20] sm:$0xf]
        %v2479 = vld [vmem:[%s210 + $0x24] sm:$0xf]
        %v2480 = vld [vmem:[%s210 + $0x28] sm:$0xf]
        %v2481 = vld [vmem:[%s210 + $0x2c] sm:$0xf]
        %v2482 = vld [vmem:[%s210 + $0x30] sm:$0xf]
        %v2483 = vld [vmem:[%s210 + $0x34] sm:$0xf]
        %v2484 = vld [vmem:[%s210 + $0x38] sm:$0xf]
        %v2485 = vld [vmem:[%s210 + $0x3c] sm:$0xf]
        %v2486 = vld [vmem:[%s210 + $0x40] sm:$0xf]
        %v2487 = vld [vmem:[%s210 + $0x44] sm:$0xf]
        %v2488 = vld [vmem:[%s210 + $0x48] sm:$0xf]
        %v2489 = vld [vmem:[%s210 + $0x4c] sm:$0xf]
        %v2490 = vld [vmem:[%s210 + $0x50] sm:$0xf]
        %v2491 = vld [vmem:[%s210 + $0x54] sm:$0x1]
        %s2492 = scalar_lea.vmem [#allocation3], 448
        %v2493 = vld [vmem:[%s2492] sm:$0xf]
        %v2494 = vld [vmem:[%s2492 + $0x4] sm:$0xf]
        %v2495 = vld [vmem:[%s2492 + $0x8] sm:$0xf]
        %v2496 = vld [vmem:[%s2492 + $0xc] sm:$0xf]
        %v2497 = vld [vmem:[%s2492 + $0x10] sm:$0xf]
        %v2498 = vld [vmem:[%s2492 + $0x14] sm:$0xf]
        %v2499 = vld [vmem:[%s2492 + $0x18] sm:$0xf]
        %v2500 = vld [vmem:[%s2492 + $0x1c] sm:$0xf]
        %v2501 = vld [vmem:[%s2492 + $0x20] sm:$0xf]
        %v2502 = vld [vmem:[%s2492 + $0x24] sm:$0xf]
        %v2503 = vld [vmem:[%s2492 + $0x28] sm:$0xf]
        %v2504 = vld [vmem:[%s2492 + $0x2c] sm:$0xf]
        %v2505 = vld [vmem:[%s2492 + $0x30] sm:$0xf]
        %v2506 = vld [vmem:[%s2492 + $0x34] sm:$0xf]
        %v2507 = vld [vmem:[%s2492 + $0x38] sm:$0xf]
        %v2508 = vld [vmem:[%s2492 + $0x3c] sm:$0xf]
        %v2528 = vunpack.c.l.b16 %v2473
        %v2529 = vunpack.c.l.b16 %v2474
        %v2530 = vunpack.c.l.b16 %v2475
        %v2531 = vunpack.c.l.b16 %v2476
        %v2532 = vunpack.c.l.b16 %v2477
        %v2533 = vunpack.c.l.b16 %v2478
        %v2534 = vunpack.c.l.b16 %v2479
        %v2535 = vunpack.c.l.b16 %v2480
        %v2536 = vunpack.c.l.b16 %v2481
        %v2537 = vunpack.c.l.b16 %v2482
        %v2538 = vunpack.c.l.b16 %v2483
        %v2539 = vunpack.c.l.b16 %v2484
        %v2540 = vunpack.c.l.b16 %v2485
        %v2541 = vunpack.c.l.b16 %v2486
        %v2542 = vunpack.c.l.b16 %v2487
        %v2543 = vunpack.c.l.b16 %v2488
        %v2544 = vunpack.c.l.b16 %v2489
        %v2545 = vunpack.c.l.b16 %v2490
        %v2546 = vunpack.c.l.b16 %v2491
        %v2547 = vpack.c.b16 %v2529, %v2528
        %v2548 = vpack.c.b16 %v2531, %v2530
        %v2549 = vpack.c.b16 %v2533, %v2532
        %v2550 = vpack.c.b16 %v2535, %v2534
        %v2551 = vpack.c.b16 %v2537, %v2536
        %v2552 = vpack.c.b16 %v2539, %v2538
        %v2553 = vpack.c.b16 %v2541, %v2540
        %v2554 = vpack.c.b16 %v2543, %v2542
        %v2555 = vpack.c.b16 %v2545, %v2544
        %v2556 = vpack.c.b16 %v2546, %v2546
        %vm2557 = vsmask.f32 5376
        %v2559 = vshrl.u32 %v2547, 16
        %v2561 = vrot.slane %v2559, 2
        %v2562 = vshll.u32 %v2547, 16
        %v2564 = vrot.slane %v2562, 3
        %v2565 = vor.u32 %v2561, %v2564
        %v2567 = vshrl.u32 %v2548, 16
        %v2569 = vrot.slane %v2567, 2
        %v2570 = vshll.u32 %v2548, 16
        %v2572 = vrot.slane %v2570, 3
        %v2573 = vor.u32 %v2569, %v2572
        %v2574 = vsel %vm2557, %v2565, %v2573
        %v2576 = vshrl.u32 %v2549, 16
        %v2578 = vrot.slane %v2576, 2
        %v2579 = vshll.u32 %v2549, 16
        %v2581 = vrot.slane %v2579, 3
        %v2582 = vor.u32 %v2578, %v2581
        %v2583 = vsel %vm2557, %v2573, %v2582
        %v2585 = vshrl.u32 %v2550, 16
        %v2587 = vrot.slane %v2585, 2
        %v2588 = vshll.u32 %v2550, 16
        %v2590 = vrot.slane %v2588, 3
        %v2591 = vor.u32 %v2587, %v2590
        %v2592 = vsel %vm2557, %v2582, %v2591
        %v2594 = vshrl.u32 %v2551, 16
        %v2596 = vrot.slane %v2594, 2
        %v2597 = vshll.u32 %v2551, 16
        %v2599 = vrot.slane %v2597, 3
        %v2600 = vor.u32 %v2596, %v2599
        %v2601 = vsel %vm2557, %v2591, %v2600
        %v2603 = vshrl.u32 %v2552, 16
        %v2605 = vrot.slane %v2603, 2
        %v2606 = vshll.u32 %v2552, 16
        %v2608 = vrot.slane %v2606, 3
        %v2609 = vor.u32 %v2605, %v2608
        %v2610 = vsel %vm2557, %v2600, %v2609
        %v2612 = vshrl.u32 %v2553, 16
        %v2614 = vrot.slane %v2612, 2
        %v2615 = vshll.u32 %v2553, 16
        %v2617 = vrot.slane %v2615, 3
        %v2618 = vor.u32 %v2614, %v2617
        %v2619 = vsel %vm2557, %v2609, %v2618
        %v2621 = vshrl.u32 %v2554, 16
        %v2623 = vrot.slane %v2621, 2
        %v2624 = vshll.u32 %v2554, 16
        %v2626 = vrot.slane %v2624, 3
        %v2627 = vor.u32 %v2623, %v2626
        %v2628 = vsel %vm2557, %v2618, %v2627
        %v2630 = vshrl.u32 %v2555, 16
        %v2632 = vrot.slane %v2630, 2
        %v2633 = vshll.u32 %v2555, 16
        %v2635 = vrot.slane %v2633, 3
        %v2636 = vor.u32 %v2632, %v2635
        %v2637 = vsel %vm2557, %v2627, %v2636
        %v2639 = vshll.u32 %v2556, 16
        %v2641 = vrot.slane %v2639, 3
        %v2642 = vsel %vm2557, %v2636, %v2641
        %v2668 = vunpack.c.l.b16 %v2493
        %v2669 = vunpack.c.l.b16 %v2494
        %v2670 = vunpack.c.l.b16 %v2495
        %v2671 = vunpack.c.l.b16 %v2496
        %v2672 = vunpack.c.l.b16 %v2497
        %v2673 = vunpack.c.l.b16 %v2498
        %v2674 = vunpack.c.l.b16 %v2499
        %v2675 = vunpack.c.l.b16 %v2500
        %v2676 = vunpack.c.l.b16 %v2501
        %v2677 = vunpack.c.l.b16 %v2502
        %v2678 = vunpack.c.l.b16 %v2503
        %v2679 = vunpack.c.l.b16 %v2504
        %v2680 = vunpack.c.l.b16 %v2505
        %v2681 = vunpack.c.l.b16 %v2506
        %v2682 = vunpack.c.l.b16 %v2507
        %v2683 = vunpack.c.l.b16 %v2508
        %v2684 = vpack.c.b16 %v2669, %v2668
        %v2685 = vpack.c.b16 %v2671, %v2670
        %v2686 = vpack.c.b16 %v2673, %v2672
        %v2687 = vpack.c.b16 %v2675, %v2674
        %v2688 = vpack.c.b16 %v2677, %v2676
        %v2689 = vpack.c.b16 %v2679, %v2678
        %v2690 = vpack.c.b16 %v2681, %v2680
        %v2691 = vpack.c.b16 %v2683, %v2682
        %2700 = vmatprep.subr.bf16.mxu0 0
        %2701 = vmatpush1.bf16.msra.mxu0 %v2684
        %2702 = vmatprep.subr.bf16.mxu0 0
        %2703 = vmatpush1.bf16.msra.mxu0 %v2685
        %2704 = vmatprep.subr.bf16.mxu0 0
        %2705 = vmatpush1.bf16.msra.mxu0 %v2686
        %2706 = vmatprep.subr.bf16.mxu0 0
        %2707 = vmatpush1.bf16.msra.mxu0 %v2687
        %2708 = vmatprep.subr.bf16.mxu0 0
        %2709 = vmatpush1.bf16.msra.mxu0 %v2688
        %2710 = vmatprep.subr.bf16.mxu0 0
        %2711 = vmatpush1.bf16.msra.mxu0 %v2689
        %2712 = vmatprep.subr.bf16.mxu0 0
        %2713 = vmatpush1.bf16.msra.mxu0 %v2690
        %2714 = vmatprep.subr.bf16.mxu0 0
        %2715 = vmatpush1.bf16.msra.mxu0 %v2691
        %2716 = vmatprep.subr.bf16.mxu0 0
        %2717 = vmatpush1.bf16.msra.mxu0 0
        %2718 = vmatprep.subr.bf16.mxu0 0
        %2719 = vmatpush1.bf16.msra.mxu0 0
        %2720 = vmatprep.subr.bf16.mxu0 0
        %2721 = vmatpush1.bf16.msra.mxu0 0
        %2722 = vmatprep.subr.bf16.mxu0 0
        %2723 = vmatpush1.bf16.msra.mxu0 0
        %2724 = vmatprep.subr.bf16.mxu0 0
        %2725 = vmatpush1.bf16.msra.mxu0 0
        %2726 = vmatprep.subr.bf16.mxu0 0
        %2727 = vmatpush1.bf16.msra.mxu0 0
        %2728 = vmatprep.subr.bf16.mxu0 0
        %2729 = vmatpush1.bf16.msra.mxu0 0
        %2730 = vmatprep.subr.bf16.mxu0 0
        %2731 = vmatpush1.bf16.msra.mxu0 0
        %2732 = vmatprep.mubr.bf16.mxu0 0
        %2733 = vmatmul.mubr.bf16.gmra.mrb[0].mxu0 %v2574
        %v2734 = vpop.f32.mrb[0].mxu0
        %v2735 = vadd.f32 0.0, %v2734
        %v2736 = vpop.f32.mrb[0].mxu0
        %v2737 = vpop.f32.mrb[0].mxu0
        %v2738 = vadd.f32 0.0, %v2737
        %v2739 = vpop.f32.mrb[0].mxu0
        %2740 = vmatprep.mubr.bf16.mxu0 0
        %2741 = vmatmul.mubr.bf16.gmra.mrb[0].mxu0 %v2583
        %v2742 = vpop.f32.mrb[0].mxu0
        %v2743 = vadd.f32 0.0, %v2742
        %v2744 = vpop.f32.mrb[0].mxu0
        %v2745 = vpop.f32.mrb[0].mxu0
        %v2746 = vadd.f32 0.0, %v2745
        %v2747 = vpop.f32.mrb[0].mxu0
        %2748 = vmatprep.mubr.bf16.mxu0 0
        %2749 = vmatmul.mubr.bf16.gmra.mrb[0].mxu0 %v2592
        %v2750 = vpop.f32.mrb[0].mxu0
        %v2751 = vadd.f32 0.0, %v2750
        %v2752 = vpop.f32.mrb[0].mxu0
        %v2753 = vpop.f32.mrb[0].mxu0
        %v2754 = vadd.f32 0.0, %v2753
        %v2755 = vpop.f32.mrb[0].mxu0
        %2756 = vmatprep.mubr.bf16.mxu0 0
        %2757 = vmatmul.mubr.bf16.gmra.mrb[0].mxu0 %v2601
        %v2758 = vpop.f32.mrb[0].mxu0
        %v2759 = vadd.f32 0.0, %v2758
        %v2760 = vpop.f32.mrb[0].mxu0
        %v2761 = vpop.f32.mrb[0].mxu0
        %v2762 = vadd.f32 0.0, %v2761
        %v2763 = vpop.f32.mrb[0].mxu0
        %2764 = vmatprep.mubr.bf16.mxu0 0
        %2765 = vmatmul.mubr.bf16.gmra.mrb[0].mxu0 %v2610
        %v2766 = vpop.f32.mrb[0].mxu0
        %v2767 = vadd.f32 0.0, %v2766
        %v2768 = vpop.f32.mrb[0].mxu0
        %v2769 = vpop.f32.mrb[0].mxu0
        %v2770 = vadd.f32 0.0, %v2769
        %v2771 = vpop.f32.mrb[0].mxu0
        %2772 = vmatprep.mubr.bf16.mxu0 0
        %2773 = vmatmul.mubr.bf16.gmra.mrb[0].mxu0 %v2619
        %v2774 = vpop.f32.mrb[0].mxu0
        %v2775 = vadd.f32 0.0, %v2774
        %v2776 = vpop.f32.mrb[0].mxu0
        %v2777 = vpop.f32.mrb[0].mxu0
        %v2778 = vadd.f32 0.0, %v2777
        %v2779 = vpop.f32.mrb[0].mxu0
        %2780 = vmatprep.mubr.bf16.mxu0 0
        %2781 = vmatmul.mubr.bf16.gmra.mrb[0].mxu0 %v2628
        %v2782 = vpop.f32.mrb[0].mxu0
        %v2783 = vadd.f32 0.0, %v2782
        %v2784 = vpop.f32.mrb[0].mxu0
        %v2785 = vpop.f32.mrb[0].mxu0
        %v2786 = vadd.f32 0.0, %v2785
        %v2787 = vpop.f32.mrb[0].mxu0
        %2788 = vmatprep.mubr.bf16.mxu0 0
        %2789 = vmatmul.mubr.bf16.gmra.mrb[0].mxu0 %v2637
        %v2790 = vpop.f32.mrb[0].mxu0
        %v2791 = vadd.f32 0.0, %v2790
        %v2792 = vpop.f32.mrb[0].mxu0
        %v2793 = vpop.f32.mrb[0].mxu0
        %v2794 = vadd.f32 0.0, %v2793
        %v2795 = vpop.f32.mrb[0].mxu0
        %2796 = vmatprep.mubr.bf16.mxu0 0
        %2797 = vmatmul.mubr.bf16.gmra.mrb[0].mxu0 %v2642
        %v2798 = vpop.f32.mrb[0].mxu0
        %v2799 = vadd.f32 0.0, %v2798
        %v2800 = vpop.f32.mrb[0].mxu0
        %v2801 = vpop.f32.mrb[0].mxu0
        %v2802 = vadd.f32 0.0, %v2801
        %v2803 = vpop.f32.mrb[0].mxu0
        %2804 = vdwg.mxu0
        %v2805 = vld [vmem:[#allocation2] sm:$0xff]
        %v2806 = vld [vmem:[#allocation2 + $0x8] sm:$0xff]
        %v2807 = vld [vmem:[#allocation2 + $0x10] sm:$0xff]
        %v2808 = vld [vmem:[#allocation2 + $0x18] sm:$0xff]
        %v2809 = vld [vmem:[#allocation2 + $0x20] sm:$0xff]
        %v2810 = vld [vmem:[#allocation2 + $0x28] sm:$0xff]
        %v2811 = vld [vmem:[#allocation2 + $0x30] sm:$0xff]
        %v2812 = vld [vmem:[#allocation2 + $0x38] sm:$0xff]
        %v2813 = vld [vmem:[#allocation2 + $0x40] sm:$0xff]
        %v2814 = vld [vmem:[#allocation2 + $0x48] sm:$0xff]
        %v2815 = vld [vmem:[#allocation2 + $0x50] sm:$0xff]
        %v2816 = vld [vmem:[#allocation2 + $0x58] sm:$0xff]
        %v2817 = vld [vmem:[#allocation2 + $0x60] sm:$0xff]
        %v2818 = vld [vmem:[#allocation2 + $0x68] sm:$0xff]
        %v2819 = vld [vmem:[#allocation2 + $0x70] sm:$0xff]
        %v2820 = vld [vmem:[#allocation2 + $0x78] sm:$0xff]
        %v2821 = vld [vmem:[#allocation2 + $0x80] sm:$0xff]
        %v2822 = vld [vmem:[#allocation2 + $0x88] sm:$0xf]
        %v2823 = vadd.f32 %v2805, %v2735
        %v2824 = vadd.f32 %v2806, %v2738
        %v2825 = vadd.f32 %v2807, %v2743
        %v2826 = vadd.f32 %v2808, %v2746
        %v2827 = vadd.f32 %v2809, %v2751
        %v2828 = vadd.f32 %v2810, %v2754
        %v2829 = vadd.f32 %v2811, %v2759
        %v2830 = vadd.f32 %v2812, %v2762
        %v2831 = vadd.f32 %v2813, %v2767
        %v2832 = vadd.f32 %v2814, %v2770
        %v2833 = vadd.f32 %v2815, %v2775
        %v2834 = vadd.f32 %v2816, %v2778
        %v2835 = vadd.f32 %v2817, %v2783
        %v2836 = vadd.f32 %v2818, %v2786
        %v2837 = vadd.f32 %v2819, %v2791
        %v2838 = vadd.f32 %v2820, %v2794
        %v2839 = vadd.f32 %v2821, %v2799
        %v2840 = vadd.f32 %v2822, %v2802
        %2841 = vst [vmem:[#allocation2] sm:$0xff] %v2823
        %2842 = vst [vmem:[#allocation2 + $0x8] sm:$0xff] %v2824
        %2843 = vst [vmem:[#allocation2 + $0x10] sm:$0xff] %v2825
        %2844 = vst [vmem:[#allocation2 + $0x18] sm:$0xff] %v2826
        %2845 = vst [vmem:[#allocation2 + $0x20] sm:$0xff] %v2827
        %2846 = vst [vmem:[#allocation2 + $0x28] sm:$0xff] %v2828
        %2847 = vst [vmem:[#allocation2 + $0x30] sm:$0xff] %v2829
        %2848 = vst [vmem:[#allocation2 + $0x38] sm:$0xff] %v2830
        %2849 = vst [vmem:[#allocation2 + $0x40] sm:$0xff] %v2831
        %2850 = vst [vmem:[#allocation2 + $0x48] sm:$0xff] %v2832
        %2851 = vst [vmem:[#allocation2 + $0x50] sm:$0xff] %v2833
        %2852 = vst [vmem:[#allocation2 + $0x58] sm:$0xff] %v2834
        %2853 = vst [vmem:[#allocation2 + $0x60] sm:$0xff] %v2835
        %2854 = vst [vmem:[#allocation2 + $0x68] sm:$0xff] %v2836
        %2855 = vst [vmem:[#allocation2 + $0x70] sm:$0xff] %v2837
        %2856 = vst [vmem:[#allocation2 + $0x78] sm:$0xff] %v2838
        %2857 = vst [vmem:[#allocation2 + $0x80] sm:$0xff] %v2839
        %2858 = vst [vmem:[#allocation2 + $0x88] sm:$0xf] %v2840
        %v2859 = vld [vmem:[%s210 + $0xc] sm:$0x8]
        %v2860 = vld [vmem:[%s210 + $0x10] sm:$0xf]
        %v2861 = vld [vmem:[%s210 + $0x14] sm:$0xf]
        %v2862 = vld [vmem:[%s210 + $0x18] sm:$0xf]
        %v2863 = vld [vmem:[%s210 + $0x1c] sm:$0xf]
        %v2864 = vld [vmem:[%s210 + $0x20] sm:$0xf]
        %v2865 = vld [vmem:[%s210 + $0x24] sm:$0xf]
        %v2866 = vld [vmem:[%s210 + $0x28] sm:$0xf]
        %v2867 = vld [vmem:[%s210 + $0x2c] sm:$0xf]
        %v2868 = vld [vmem:[%s210 + $0x30] sm:$0xf]
        %v2869 = vld [vmem:[%s210 + $0x34] sm:$0xf]
        %v2870 = vld [vmem:[%s210 + $0x38] sm:$0xf]
        %v2871 = vld [vmem:[%s210 + $0x3c] sm:$0xf]
        %v2872 = vld [vmem:[%s210 + $0x40] sm:$0xf]
        %v2873 = vld [vmem:[%s210 + $0x44] sm:$0xf]
        %v2874 = vld [vmem:[%s210 + $0x48] sm:$0xf]
        %v2875 = vld [vmem:[%s210 + $0x4c] sm:$0xf]
        %v2876 = vld [vmem:[%s210 + $0x50] sm:$0xf]
        %v2877 = vld [vmem:[%s210 + $0x54] sm:$0x1]
        %s2878 = scalar_lea.vmem [#allocation3], 512
        %v2879 = vld [vmem:[%s2878] sm:$0xf]
        %v2880 = vld [vmem:[%s2878 + $0x4] sm:$0xf]
        %v2881 = vld [vmem:[%s2878 + $0x8] sm:$0xf]
        %v2882 = vld [vmem:[%s2878 + $0xc] sm:$0xf]
        %v2883 = vld [vmem:[%s2878 + $0x10] sm:$0xf]
        %v2884 = vld [vmem:[%s2878 + $0x14] sm:$0xf]
        %v2885 = vld [vmem:[%s2878 + $0x18] sm:$0xf]
        %v2886 = vld [vmem:[%s2878 + $0x1c] sm:$0xf]
        %v2887 = vld [vmem:[%s2878 + $0x20] sm:$0xf]
        %v2888 = vld [vmem:[%s2878 + $0x24] sm:$0xf]
        %v2889 = vld [vmem:[%s2878 + $0x28] sm:$0xf]
        %v2890 = vld [vmem:[%s2878 + $0x2c] sm:$0xf]
        %v2891 = vld [vmem:[%s2878 + $0x30] sm:$0xf]
        %v2892 = vld [vmem:[%s2878 + $0x34] sm:$0xf]
        %v2893 = vld [vmem:[%s2878 + $0x38] sm:$0xf]
        %v2894 = vld [vmem:[%s2878 + $0x3c] sm:$0xf]
        %v2914 = vunpack.c.l.b16 %v2859
        %v2915 = vunpack.c.l.b16 %v2860
        %v2916 = vunpack.c.l.b16 %v2861
        %v2917 = vunpack.c.l.b16 %v2862
        %v2918 = vunpack.c.l.b16 %v2863
        %v2919 = vunpack.c.l.b16 %v2864
        %v2920 = vunpack.c.l.b16 %v2865
        %v2921 = vunpack.c.l.b16 %v2866
        %v2922 = vunpack.c.l.b16 %v2867
        %v2923 = vunpack.c.l.b16 %v2868
        %v2924 = vunpack.c.l.b16 %v2869
        %v2925 = vunpack.c.l.b16 %v2870
        %v2926 = vunpack.c.l.b16 %v2871
        %v2927 = vunpack.c.l.b16 %v2872
        %v2928 = vunpack.c.l.b16 %v2873
        %v2929 = vunpack.c.l.b16 %v2874
        %v2930 = vunpack.c.l.b16 %v2875
        %v2931 = vunpack.c.l.b16 %v2876
        %v2932 = vunpack.c.l.b16 %v2877
        %v2933 = vpack.c.b16 %v2915, %v2914
        %v2934 = vpack.c.b16 %v2917, %v2916
        %v2935 = vpack.c.b16 %v2919, %v2918
        %v2936 = vpack.c.b16 %v2921, %v2920
        %v2937 = vpack.c.b16 %v2923, %v2922
        %v2938 = vpack.c.b16 %v2925, %v2924
        %v2939 = vpack.c.b16 %v2927, %v2926
        %v2940 = vpack.c.b16 %v2929, %v2928
        %v2941 = vpack.c.b16 %v2931, %v2930
        %v2942 = vpack.c.b16 %v2932, %v2932
        %v2943 = vrot.slane %v2933, 3
        %v2944 = vrot.slane %v2934, 3
        %v2945 = vsel %vm1237, %v2943, %v2944
        %v2946 = vrot.slane %v2935, 3
        %v2947 = vsel %vm1237, %v2944, %v2946
        %v2948 = vrot.slane %v2936, 3
        %v2949 = vsel %vm1237, %v2946, %v2948
        %v2950 = vrot.slane %v2937, 3
        %v2951 = vsel %vm1237, %v2948, %v2950
        %v2952 = vrot.slane %v2938, 3
        %v2953 = vsel %vm1237, %v2950, %v2952
        %v2954 = vrot.slane %v2939, 3
        %v2955 = vsel %vm1237, %v2952, %v2954
        %v2956 = vrot.slane %v2940, 3
        %v2957 = vsel %vm1237, %v2954, %v2956
        %v2958 = vrot.slane %v2941, 3
        %v2959 = vsel %vm1237, %v2956, %v2958
        %v2960 = vrot.slane %v2942, 3
        %v2961 = vsel %vm1237, %v2958, %v2960
        %v2987 = vunpack.c.l.b16 %v2879
        %v2988 = vunpack.c.l.b16 %v2880
        %v2989 = vunpack.c.l.b16 %v2881
        %v2990 = vunpack.c.l.b16 %v2882
        %v2991 = vunpack.c.l.b16 %v2883
        %v2992 = vunpack.c.l.b16 %v2884
        %v2993 = vunpack.c.l.b16 %v2885
        %v2994 = vunpack.c.l.b16 %v2886
        %v2995 = vunpack.c.l.b16 %v2887
        %v2996 = vunpack.c.l.b16 %v2888
        %v2997 = vunpack.c.l.b16 %v2889
        %v2998 = vunpack.c.l.b16 %v2890
        %v2999 = vunpack.c.l.b16 %v2891
        %v3000 = vunpack.c.l.b16 %v2892
        %v3001 = vunpack.c.l.b16 %v2893
        %v3002 = vunpack.c.l.b16 %v2894
        %v3003 = vpack.c.b16 %v2988, %v2987
        %v3004 = vpack.c.b16 %v2990, %v2989
        %v3005 = vpack.c.b16 %v2992, %v2991
        %v3006 = vpack.c.b16 %v2994, %v2993
        %v3007 = vpack.c.b16 %v2996, %v2995
        %v3008 = vpack.c.b16 %v2998, %v2997
        %v3009 = vpack.c.b16 %v3000, %v2999
        %v3010 = vpack.c.b16 %v3002, %v3001
        %3019 = vmatprep.subr.bf16.mxu0 0
        %3020 = vmatpush1.bf16.msra.mxu0 %v3003
        %3021 = vmatprep.subr.bf16.mxu0 0
        %3022 = vmatpush1.bf16.msra.mxu0 %v3004
        %3023 = vmatprep.subr.bf16.mxu0 0
        %3024 = vmatpush1.bf16.msra.mxu0 %v3005
        %3025 = vmatprep.subr.bf16.mxu0 0
        %3026 = vmatpush1.bf16.msra.mxu0 %v3006
        %3027 = vmatprep.subr.bf16.mxu0 0
        %3028 = vmatpush1.bf16.msra.mxu0 %v3007
        %3029 = vmatprep.subr.bf16.mxu0 0
        %3030 = vmatpush1.bf16.msra.mxu0 %v3008
        %3031 = vmatprep.subr.bf16.mxu0 0
        %3032 = vmatpush1.bf16.msra.mxu0 %v3009
        %3033 = vmatprep.subr.bf16.mxu0 0
        %3034 = vmatpush1.bf16.msra.mxu0 %v3010
        %3035 = vmatprep.subr.bf16.mxu0 0
        %3036 = vmatpush1.bf16.msra.mxu0 0
        %3037 = vmatprep.subr.bf16.mxu0 0
        %3038 = vmatpush1.bf16.msra.mxu0 0
        %3039 = vmatprep.subr.bf16.mxu0 0
        %3040 = vmatpush1.bf16.msra.mxu0 0
        %3041 = vmatprep.subr.bf16.mxu0 0
        %3042 = vmatpush1.bf16.msra.mxu0 0
        %3043 = vmatprep.subr.bf16.mxu0 0
        %3044 = vmatpush1.bf16.msra.mxu0 0
        %3045 = vmatprep.subr.bf16.mxu0 0
        %3046 = vmatpush1.bf16.msra.mxu0 0
        %3047 = vmatprep.subr.bf16.mxu0 0
        %3048 = vmatpush1.bf16.msra.mxu0 0
        %3049 = vmatprep.subr.bf16.mxu0 0
        %3050 = vmatpush1.bf16.msra.mxu0 0
        %3051 = vmatprep.mubr.bf16.mxu0 0
        %3052 = vmatmul.mubr.bf16.gmra.mrb[0].mxu0 %v2945
        %v3053 = vpop.f32.mrb[0].mxu0
        %v3054 = vadd.f32 0.0, %v3053
        %v3055 = vpop.f32.mrb[0].mxu0
        %v3056 = vpop.f32.mrb[0].mxu0
        %v3057 = vadd.f32 0.0, %v3056
        %v3058 = vpop.f32.mrb[0].mxu0
        %3059 = vmatprep.mubr.bf16.mxu0 0
        %3060 = vmatmul.mubr.bf16.gmra.mrb[0].mxu0 %v2947
        %v3061 = vpop.f32.mrb[0].mxu0
        %v3062 = vadd.f32 0.0, %v3061
        %v3063 = vpop.f32.mrb[0].mxu0
        %v3064 = vpop.f32.mrb[0].mxu0
        %v3065 = vadd.f32 0.0, %v3064
        %v3066 = vpop.f32.mrb[0].mxu0
        %3067 = vmatprep.mubr.bf16.mxu0 0
        %3068 = vmatmul.mubr.bf16.gmra.mrb[0].mxu0 %v2949
        %v3069 = vpop.f32.mrb[0].mxu0
        %v3070 = vadd.f32 0.0, %v3069
        %v3071 = vpop.f32.mrb[0].mxu0
        %v3072 = vpop.f32.mrb[0].mxu0
        %v3073 = vadd.f32 0.0, %v3072
        %v3074 = vpop.f32.mrb[0].mxu0
        %3075 = vmatprep.mubr.bf16.mxu0 0
        %3076 = vmatmul.mubr.bf16.gmra.mrb[0].mxu0 %v2951
        %v3077 = vpop.f32.mrb[0].mxu0
        %v3078 = vadd.f32 0.0, %v3077
        %v3079 = vpop.f32.mrb[0].mxu0
        %v3080 = vpop.f32.mrb[0].mxu0
        %v3081 = vadd.f32 0.0, %v3080
        %v3082 = vpop.f32.mrb[0].mxu0
        %3083 = vmatprep.mubr.bf16.mxu0 0
        %3084 = vmatmul.mubr.bf16.gmra.mrb[0].mxu0 %v2953
        %v3085 = vpop.f32.mrb[0].mxu0
        %v3086 = vadd.f32 0.0, %v3085
        %v3087 = vpop.f32.mrb[0].mxu0
        %v3088 = vpop.f32.mrb[0].mxu0
        %v3089 = vadd.f32 0.0, %v3088
        %v3090 = vpop.f32.mrb[0].mxu0
        %3091 = vmatprep.mubr.bf16.mxu0 0
        %3092 = vmatmul.mubr.bf16.gmra.mrb[0].mxu0 %v2955
        %v3093 = vpop.f32.mrb[0].mxu0
        %v3094 = vadd.f32 0.0, %v3093
        %v3095 = vpop.f32.mrb[0].mxu0
        %v3096 = vpop.f32.mrb[0].mxu0
        %v3097 = vadd.f32 0.0, %v3096
        %v3098 = vpop.f32.mrb[0].mxu0
        %3099 = vmatprep.mubr.bf16.mxu0 0
        %3100 = vmatmul.mubr.bf16.gmra.mrb[0].mxu0 %v2957
        %v3101 = vpop.f32.mrb[0].mxu0
        %v3102 = vadd.f32 0.0, %v3101
        %v3103 = vpop.f32.mrb[0].mxu0
        %v3104 = vpop.f32.mrb[0].mxu0
        %v3105 = vadd.f32 0.0, %v3104
        %v3106 = vpop.f32.mrb[0].mxu0
        %3107 = vmatprep.mubr.bf16.mxu0 0
        %3108 = vmatmul.mubr.bf16.gmra.mrb[0].mxu0 %v2959
        %v3109 = vpop.f32.mrb[0].mxu0
        %v3110 = vadd.f32 0.0, %v3109
        %v3111 = vpop.f32.mrb[0].mxu0
        %v3112 = vpop.f32.mrb[0].mxu0
        %v3113 = vadd.f32 0.0, %v3112
        %v3114 = vpop.f32.mrb[0].mxu0
        %3115 = vmatprep.mubr.bf16.mxu0 0
        %3116 = vmatmul.mubr.bf16.gmra.mrb[0].mxu0 %v2961
        %v3117 = vpop.f32.mrb[0].mxu0
        %v3118 = vadd.f32 0.0, %v3117
        %v3119 = vpop.f32.mrb[0].mxu0
        %v3120 = vpop.f32.mrb[0].mxu0
        %v3121 = vadd.f32 0.0, %v3120
        %v3122 = vpop.f32.mrb[0].mxu0
        %3123 = vdwg.mxu0
        %v3124 = vld [vmem:[#allocation2] sm:$0xff]
        %v3125 = vld [vmem:[#allocation2 + $0x8] sm:$0xff]
        %v3126 = vld [vmem:[#allocation2 + $0x10] sm:$0xff]
        %v3127 = vld [vmem:[#allocation2 + $0x18] sm:$0xff]
        %v3128 = vld [vmem:[#allocation2 + $0x20] sm:$0xff]
        %v3129 = vld [vmem:[#allocation2 + $0x28] sm:$0xff]
        %v3130 = vld [vmem:[#allocation2 + $0x30] sm:$0xff]
        %v3131 = vld [vmem:[#allocation2 + $0x38] sm:$0xff]
        %v3132 = vld [vmem:[#allocation2 + $0x40] sm:$0xff]
        %v3133 = vld [vmem:[#allocation2 + $0x48] sm:$0xff]
        %v3134 = vld [vmem:[#allocation2 + $0x50] sm:$0xff]
        %v3135 = vld [vmem:[#allocation2 + $0x58] sm:$0xff]
        %v3136 = vld [vmem:[#allocation2 + $0x60] sm:$0xff]
        %v3137 = vld [vmem:[#allocation2 + $0x68] sm:$0xff]
        %v3138 = vld [vmem:[#allocation2 + $0x70] sm:$0xff]
        %v3139 = vld [vmem:[#allocation2 + $0x78] sm:$0xff]
        %v3140 = vld [vmem:[#allocation2 + $0x80] sm:$0xff]
        %v3141 = vld [vmem:[#allocation2 + $0x88] sm:$0xf]
        %v3142 = vadd.f32 %v3124, %v3054
        %v3143 = vadd.f32 %v3125, %v3057
        %v3144 = vadd.f32 %v3126, %v3062
        %v3145 = vadd.f32 %v3127, %v3065
        %v3146 = vadd.f32 %v3128, %v3070
        %v3147 = vadd.f32 %v3129, %v3073
        %v3148 = vadd.f32 %v3130, %v3078
        %v3149 = vadd.f32 %v3131, %v3081
        %v3150 = vadd.f32 %v3132, %v3086
        %v3151 = vadd.f32 %v3133, %v3089
        %v3152 = vadd.f32 %v3134, %v3094
        %v3153 = vadd.f32 %v3135, %v3097
        %v3154 = vadd.f32 %v3136, %v3102
        %v3155 = vadd.f32 %v3137, %v3105
        %v3156 = vadd.f32 %v3138, %v3110
        %v3157 = vadd.f32 %v3139, %v3113
        %v3158 = vadd.f32 %v3140, %v3118
        %v3159 = vadd.f32 %v3141, %v3121
        %3160 = vst [vmem:[#allocation2] sm:$0xff] %v3142
        %3161 = vst [vmem:[#allocation2 + $0x8] sm:$0xff] %v3143
        %3162 = vst [vmem:[#allocation2 + $0x10] sm:$0xff] %v3144
        %3163 = vst [vmem:[#allocation2 + $0x18] sm:$0xff] %v3145
        %3164 = vst [vmem:[#allocation2 + $0x20] sm:$0xff] %v3146
        %3165 = vst [vmem:[#allocation2 + $0x28] sm:$0xff] %v3147
        %3166 = vst [vmem:[#allocation2 + $0x30] sm:$0xff] %v3148
        %3167 = vst [vmem:[#allocation2 + $0x38] sm:$0xff] %v3149
        %3168 = vst [vmem:[#allocation2 + $0x40] sm:$0xff] %v3150
        %3169 = vst [vmem:[#allocation2 + $0x48] sm:$0xff] %v3151
        %3170 = vst [vmem:[#allocation2 + $0x50] sm:$0xff] %v3152
        %3171 = vst [vmem:[#allocation2 + $0x58] sm:$0xff] %v3153
        %3172 = vst [vmem:[#allocation2 + $0x60] sm:$0xff] %v3154
        %3173 = vst [vmem:[#allocation2 + $0x68] sm:$0xff] %v3155
        %3174 = vst [vmem:[#allocation2 + $0x70] sm:$0xff] %v3156
        %3175 = vst [vmem:[#allocation2 + $0x78] sm:$0xff] %v3157
        %3176 = vst [vmem:[#allocation2 + $0x80] sm:$0xff] %v3158
        %3177 = vst [vmem:[#allocation2 + $0x88] sm:$0xf] %v3159
        %v3178 = vld [vmem:[#allocation2] sm:$0xff]
        %v3179 = vld [vmem:[#allocation2 + $0x8] sm:$0xff]
        %v3180 = vld [vmem:[#allocation2 + $0x10] sm:$0xff]
        %v3181 = vld [vmem:[#allocation2 + $0x18] sm:$0xff]
        %v3182 = vld [vmem:[#allocation2 + $0x20] sm:$0xff]
        %v3183 = vld [vmem:[#allocation2 + $0x28] sm:$0xff]
        %v3184 = vld [vmem:[#allocation2 + $0x30] sm:$0xff]
        %v3185 = vld [vmem:[#allocation2 + $0x38] sm:$0xff]
        %v3186 = vld [vmem:[#allocation2 + $0x40] sm:$0xff]
        %v3187 = vld [vmem:[#allocation2 + $0x48] sm:$0xff]
        %v3188 = vld [vmem:[#allocation2 + $0x50] sm:$0xff]
        %v3189 = vld [vmem:[#allocation2 + $0x58] sm:$0xff]
        %v3190 = vld [vmem:[#allocation2 + $0x60] sm:$0xff]
        %v3191 = vld [vmem:[#allocation2 + $0x68] sm:$0xff]
        %v3192 = vld [vmem:[#allocation2 + $0x70] sm:$0xff]
        %v3193 = vld [vmem:[#allocation2 + $0x78] sm:$0xff]
        %v3194 = vld [vmem:[#allocation2 + $0x80] sm:$0xff]
        %v3195 = vld [vmem:[#allocation2 + $0x88] sm:$0xf]
        %v3196 = vld [vmem:[%s2] sm:$0x1]
        %v3198 = vlaneseq
        %v3199 = vshrl.u32 %v3198, 7
        %v3200 = vsub.s32 0, %v3199
        %v3201 = vrot.slane %v3196, %v3200
        %v3203 = vadd.f32 %v3178, %v3201
        %v3204 = vadd.f32 %v3179, %v3201
        %v3205 = vadd.f32 %v3180, %v3201
        %v3206 = vadd.f32 %v3181, %v3201
        %v3207 = vadd.f32 %v3182, %v3201
        %v3208 = vadd.f32 %v3183, %v3201
        %v3209 = vadd.f32 %v3184, %v3201
        %v3210 = vadd.f32 %v3185, %v3201
        %v3211 = vadd.f32 %v3186, %v3201
        %v3212 = vadd.f32 %v3187, %v3201
        %v3213 = vadd.f32 %v3188, %v3201
        %v3214 = vadd.f32 %v3189, %v3201
        %v3215 = vadd.f32 %v3190, %v3201
        %v3216 = vadd.f32 %v3191, %v3201
        %v3217 = vadd.f32 %v3192, %v3201
        %v3218 = vadd.f32 %v3193, %v3201
        %v3219 = vadd.f32 %v3194, %v3201
        %v3220 = vadd.f32 %v3195, %v3201
        %v3221 = vxor.u32 %v3203, 2147483648
        %v3222 = vxor.u32 %v3204, 2147483648
        %v3223 = vxor.u32 %v3205, 2147483648
        %v3224 = vxor.u32 %v3206, 2147483648
        %v3225 = vxor.u32 %v3207, 2147483648
        %v3226 = vxor.u32 %v3208, 2147483648
        %v3227 = vxor.u32 %v3209, 2147483648
        %v3228 = vxor.u32 %v3210, 2147483648
        %v3229 = vxor.u32 %v3211, 2147483648
        %v3230 = vxor.u32 %v3212, 2147483648
        %v3231 = vxor.u32 %v3213, 2147483648
        %v3232 = vxor.u32 %v3214, 2147483648
        %v3233 = vxor.u32 %v3215, 2147483648
        %v3234 = vxor.u32 %v3216, 2147483648
        %v3235 = vxor.u32 %v3217, 2147483648
        %v3236 = vxor.u32 %v3218, 2147483648
        %v3237 = vxor.u32 %v3219, 2147483648
        %v3238 = vxor.u32 %v3220, 2147483648
        %v3239 = vmul.f32 %v3221, 1.442695
        %v3240 = vpow.pop %v3239
        %v3241 = vmul.f32 %v3222, 1.442695
        %v3242 = vpow.pop %v3241
        %v3243 = vmul.f32 %v3223, 1.442695
        %v3244 = vpow.pop %v3243
        %v3245 = vmul.f32 %v3224, 1.442695
        %v3246 = vpow.pop %v3245
        %v3247 = vmul.f32 %v3225, 1.442695
        %v3248 = vpow.pop %v3247
        %v3249 = vmul.f32 %v3226, 1.442695
        %v3250 = vpow.pop %v3249
        %v3251 = vmul.f32 %v3227, 1.442695
        %v3252 = vpow.pop %v3251
        %v3253 = vmul.f32 %v3228, 1.442695
        %v3254 = vpow.pop %v3253
        %v3255 = vmul.f32 %v3229, 1.442695
        %v3256 = vpow.pop %v3255
        %v3257 = vmul.f32 %v3230, 1.442695
        %v3258 = vpow.pop %v3257
        %v3259 = vmul.f32 %v3231, 1.442695
        %v3260 = vpow.pop %v3259
        %v3261 = vmul.f32 %v3232, 1.442695
        %v3262 = vpow.pop %v3261
        %v3263 = vmul.f32 %v3233, 1.442695
        %v3264 = vpow.pop %v3263
        %v3265 = vmul.f32 %v3234, 1.442695
        %v3266 = vpow.pop %v3265
        %v3267 = vmul.f32 %v3235, 1.442695
        %v3268 = vpow.pop %v3267
        %v3269 = vmul.f32 %v3236, 1.442695
        %v3270 = vpow.pop %v3269
        %v3271 = vmul.f32 %v3237, 1.442695
        %v3272 = vpow.pop %v3271
        %v3273 = vmul.f32 %v3238, 1.442695
        %v3274 = vpow.pop %v3273
        %v3275 = vadd.f32 %v3240, 1.0
        %v3276 = vadd.f32 %v3242, 1.0
        %v3277 = vadd.f32 %v3244, 1.0
        %v3278 = vadd.f32 %v3246, 1.0
        %v3279 = vadd.f32 %v3248, 1.0
        %v3280 = vadd.f32 %v3250, 1.0
        %v3281 = vadd.f32 %v3252, 1.0
        %v3282 = vadd.f32 %v3254, 1.0
        %v3283 = vadd.f32 %v3256, 1.0
        %v3284 = vadd.f32 %v3258, 1.0
        %v3285 = vadd.f32 %v3260, 1.0
        %v3286 = vadd.f32 %v3262, 1.0
        %v3287 = vadd.f32 %v3264, 1.0
        %v3288 = vadd.f32 %v3266, 1.0
        %v3289 = vadd.f32 %v3268, 1.0
        %v3290 = vadd.f32 %v3270, 1.0
        %v3291 = vadd.f32 %v3272, 1.0
        %v3292 = vadd.f32 %v3274, 1.0
        %v3293 = vrcp.pop %v3275
        %v3294 = vmul.f32 1.0, %v3293
        %v3295 = vrcp.pop %v3276
        %v3296 = vmul.f32 1.0, %v3295
        %v3297 = vrcp.pop %v3277
        %v3298 = vmul.f32 1.0, %v3297
        %v3299 = vrcp.pop %v3278
        %v3300 = vmul.f32 1.0, %v3299
        %v3301 = vrcp.pop %v3279
        %v3302 = vmul.f32 1.0, %v3301
        %v3303 = vrcp.pop %v3280
        %v3304 = vmul.f32 1.0, %v3303
        %v3305 = vrcp.pop %v3281
        %v3306 = vmul.f32 1.0, %v3305
        %v3307 = vrcp.pop %v3282
        %v3308 = vmul.f32 1.0, %v3307
        %v3309 = vrcp.pop %v3283
        %v3310 = vmul.f32 1.0, %v3309
        %v3311 = vrcp.pop %v3284
        %v3312 = vmul.f32 1.0, %v3311
        %v3313 = vrcp.pop %v3285
        %v3314 = vmul.f32 1.0, %v3313
        %v3315 = vrcp.pop %v3286
        %v3316 = vmul.f32 1.0, %v3315
        %v3317 = vrcp.pop %v3287
        %v3318 = vmul.f32 1.0, %v3317
        %v3319 = vrcp.pop %v3288
        %v3320 = vmul.f32 1.0, %v3319
        %v3321 = vrcp.pop %v3289
        %v3322 = vmul.f32 1.0, %v3321
        %v3323 = vrcp.pop %v3290
        %v3324 = vmul.f32 1.0, %v3323
        %v3325 = vrcp.pop %v3291
        %v3326 = vmul.f32 1.0, %v3325
        %v3327 = vrcp.pop %v3292
        %v3328 = vmul.f32 1.0, %v3327
        %v3329 = vmul.f32 %v3203, %v3294
        %v3330 = vmul.f32 %v3204, %v3296
        %v3331 = vmul.f32 %v3205, %v3298
        %v3332 = vmul.f32 %v3206, %v3300
        %v3333 = vmul.f32 %v3207, %v3302
        %v3334 = vmul.f32 %v3208, %v3304
        %v3335 = vmul.f32 %v3209, %v3306
        %v3336 = vmul.f32 %v3210, %v3308
        %v3337 = vmul.f32 %v3211, %v3310
        %v3338 = vmul.f32 %v3212, %v3312
        %v3339 = vmul.f32 %v3213, %v3314
        %v3340 = vmul.f32 %v3214, %v3316
        %v3341 = vmul.f32 %v3215, %v3318
        %v3342 = vmul.f32 %v3216, %v3320
        %v3343 = vmul.f32 %v3217, %v3322
        %v3344 = vmul.f32 %v3218, %v3324
        %v3345 = vmul.f32 %v3219, %v3326
        %v3346 = vmul.f32 %v3220, %v3328
        %v3347 = vld [vmem:[%s3] sm:$0xff]
        %v3348 = vld [vmem:[%s3 + $0x8] sm:$0xff]
        %v3349 = vld [vmem:[%s3 + $0x10] sm:$0xff]
        %v3350 = vld [vmem:[%s3 + $0x18] sm:$0xff]
        %v3351 = vld [vmem:[%s3 + $0x20] sm:$0xff]
        %v3352 = vld [vmem:[%s3 + $0x28] sm:$0xff]
        %v3353 = vld [vmem:[%s3 + $0x30] sm:$0xff]
        %v3354 = vld [vmem:[%s3 + $0x38] sm:$0xff]
        %v3355 = vld [vmem:[%s3 + $0x40] sm:$0xff]
        %v3356 = vld [vmem:[%s3 + $0x48] sm:$0xff]
        %v3357 = vld [vmem:[%s3 + $0x50] sm:$0xff]
        %v3358 = vld [vmem:[%s3 + $0x58] sm:$0xff]
        %v3359 = vld [vmem:[%s3 + $0x60] sm:$0xff]
        %v3360 = vld [vmem:[%s3 + $0x68] sm:$0xff]
        %v3361 = vld [vmem:[%s3 + $0x70] sm:$0xff]
        %v3362 = vunpack.c.l.bf16 %v3347
        %v3363 = vunpack.c.h.bf16 %v3347
        %v3364 = vunpack.c.l.bf16 %v3348
        %v3365 = vunpack.c.h.bf16 %v3348
        %v3366 = vunpack.c.l.bf16 %v3349
        %v3367 = vunpack.c.h.bf16 %v3349
        %v3368 = vunpack.c.l.bf16 %v3350
        %v3369 = vunpack.c.h.bf16 %v3350
        %v3370 = vunpack.c.l.bf16 %v3351
        %v3371 = vunpack.c.h.bf16 %v3351
        %v3372 = vunpack.c.l.bf16 %v3352
        %v3373 = vunpack.c.h.bf16 %v3352
        %v3374 = vunpack.c.l.bf16 %v3353
        %v3375 = vunpack.c.h.bf16 %v3353
        %v3376 = vunpack.c.l.bf16 %v3354
        %v3377 = vunpack.c.h.bf16 %v3354
        %v3378 = vunpack.c.l.bf16 %v3355
        %v3379 = vunpack.c.h.bf16 %v3355
        %v3380 = vunpack.c.l.bf16 %v3356
        %v3381 = vunpack.c.h.bf16 %v3356
        %v3382 = vunpack.c.l.bf16 %v3357
        %v3383 = vunpack.c.h.bf16 %v3357
        %v3384 = vunpack.c.l.bf16 %v3358
        %v3385 = vunpack.c.h.bf16 %v3358
        %v3386 = vunpack.c.l.bf16 %v3359
        %v3387 = vunpack.c.h.bf16 %v3359
        %v3388 = vunpack.c.l.bf16 %v3360
        %v3389 = vunpack.c.h.bf16 %v3360
        %v3390 = vunpack.c.l.bf16 %v3361
        %v3391 = vunpack.c.h.bf16 %v3361
        %vm3392 = vcmask 97280
        %v3394 = vsel %vm3392, %v3363, 0
        %v3397 = vsel %vm3392, %v3365, 0
        %v3400 = vsel %vm3392, %v3367, 0
        %v3403 = vsel %vm3392, %v3369, 0
        %v3406 = vsel %vm3392, %v3371, 0
        %v3409 = vsel %vm3392, %v3373, 0
        %v3412 = vsel %vm3392, %v3375, 0
        %v3415 = vsel %vm3392, %v3377, 0
        %v3418 = vsel %vm3392, %v3379, 0
        %v3421 = vsel %vm3392, %v3381, 0
        %v3424 = vsel %vm3392, %v3383, 0
        %v3427 = vsel %vm3392, %v3385, 0
        %v3430 = vsel %vm3392, %v3387, 0
        %v3433 = vsel %vm3392, %v3389, 0
        %v3436 = vsel %vm3392, %v3391, 0
        %vm3438 = vcmask 1043456
        %v3440 = vsel %vm3438, %v3346, 0
        %3442 = vmatprep.subr.mxu0 0.0
        %3443 = vmatpush1.msra.mxu0 %v3329
        %3444 = vmatprep.subr.mxu0 0.0
        %3445 = vmatpush1.msra.mxu0 %v3330
        %3446 = vmatprep.subr.mxu0 0.0
        %3447 = vmatpush1.msra.mxu0 %v3331
        %3448 = vmatprep.subr.mxu0 0.0
        %3449 = vmatpush1.msra.mxu0 %v3332
        %3450 = vmatprep.subr.mxu0 0.0
        %3451 = vmatpush1.msra.mxu0 %v3333
        %3452 = vmatprep.subr.mxu0 0.0
        %3453 = vmatpush1.msra.mxu0 %v3334
        %3454 = vmatprep.subr.mxu0 0.0
        %3455 = vmatpush1.msra.mxu0 %v3335
        %3456 = vmatprep.subr.mxu0 0.0
        %3457 = vmatpush1.msra.mxu0 %v3336
        %3458 = vmatprep.subr.mxu0 0.0
        %3459 = vmatpush1.msra.mxu0 %v3337
        %3460 = vmatprep.subr.mxu0 0.0
        %3461 = vmatpush1.msra.mxu0 %v3338
        %3462 = vmatprep.subr.mxu0 0.0
        %3463 = vmatpush1.msra.mxu0 %v3339
        %3464 = vmatprep.subr.mxu0 0.0
        %3465 = vmatpush1.msra.mxu0 %v3340
        %3466 = vmatprep.subr.mxu0 0.0
        %3467 = vmatpush1.msra.mxu0 %v3341
        %3468 = vmatprep.subr.mxu0 0.0
        %3469 = vmatpush1.msra.mxu0 %v3342
        %3470 = vmatprep.subr.mxu0 0.0
        %3471 = vmatpush1.msra.mxu0 %v3343
        %3472 = vmatprep.subr.mxu0 0.0
        %3473 = vmatpush1.msra.mxu0 %v3344
        %3474 = vmatprep.subr.mxu0 0.0
        %3475 = vmatpush1.msra.mxu0 %v3345
        %3476 = vmatprep.subr.mxu0 0.0
        %3477 = vmatpush1.msra.mxu0 %v3440
        %3478 = vmatprep.subr.mxu0 0.0
        %3479 = vmatpush1.msra.mxu0 0.0
        %3480 = vmatprep.subr.mxu0 0.0
        %3481 = vmatpush1.msra.mxu0 0.0
        %3482 = vmatprep.subr.mxu0 0.0
        %3483 = vmatpush1.msra.mxu0 0.0
        %3484 = vmatprep.subr.mxu0 0.0
        %3485 = vmatpush1.msra.mxu0 0.0
        %3486 = vmatprep.subr.mxu0 0.0
        %3487 = vmatpush1.msra.mxu0 0.0
        %3488 = vmatprep.subr.mxu0 0.0
        %3489 = vmatpush1.msra.mxu0 0.0
        %3490 = vmatprep.subr.mxu0 0.0
        %3491 = vmatpush1.msra.mxu0 0.0
        %3492 = vmatprep.subr.mxu0 0.0
        %3493 = vmatpush1.msra.mxu0 0.0
        %3494 = vmatprep.subr.mxu0 0.0
        %3495 = vmatpush1.msra.mxu0 0.0
        %3496 = vmatprep.subr.mxu0 0.0
        %3497 = vmatpush1.msra.mxu0 0.0
        %3498 = vmatprep.subr.mxu0 0.0
        %3499 = vmatpush1.msra.mxu0 0.0
        %3500 = vmatprep.subr.mxu0 0.0
        %3501 = vmatpush1.msra.mxu0 0.0
        %3502 = vmatprep.subr.mxu0 0.0
        %3503 = vmatpush1.msra.mxu0 0.0
        %3504 = vmatprep.subr.mxu0 0.0
        %3505 = vmatpush1.msra.mxu0 0.0
        %3506 = vmatprep.mubr.f32.mxu0 %v3394
        %3507 = vmatmul.mubr.f32.gmra.mrb[0].mxu0 %v3362
        %v3508 = vpop.f32.mrb[0].mxu0
        %v3509 = vadd.f32 0.0, %v3508
        %v3510 = vpop.f32.mrb[0].mxu0
        %3511 = vmatprep.mubr.f32.mxu0 %v3397
        %3512 = vmatmul.mubr.f32.gmra.mrb[0].mxu0 %v3364
        %v3513 = vpop.f32.mrb[0].mxu0
        %v3514 = vadd.f32 0.0, %v3513
        %v3515 = vpop.f32.mrb[0].mxu0
        %3516 = vmatprep.mubr.f32.mxu0 %v3400
        %3517 = vmatmul.mubr.f32.gmra.mrb[0].mxu0 %v3366
        %v3518 = vpop.f32.mrb[0].mxu0
        %v3519 = vadd.f32 0.0, %v3518
        %v3520 = vpop.f32.mrb[0].mxu0
        %3521 = vmatprep.mubr.f32.mxu0 %v3403
        %3522 = vmatmul.mubr.f32.gmra.mrb[0].mxu0 %v3368
        %v3523 = vpop.f32.mrb[0].mxu0
        %v3524 = vadd.f32 0.0, %v3523
        %v3525 = vpop.f32.mrb[0].mxu0
        %3526 = vmatprep.mubr.f32.mxu0 %v3406
        %3527 = vmatmul.mubr.f32.gmra.mrb[0].mxu0 %v3370
        %v3528 = vpop.f32.mrb[0].mxu0
        %v3529 = vadd.f32 0.0, %v3528
        %v3530 = vpop.f32.mrb[0].mxu0
        %3531 = vmatprep.mubr.f32.mxu0 %v3409
        %3532 = vmatmul.mubr.f32.gmra.mrb[0].mxu0 %v3372
        %v3533 = vpop.f32.mrb[0].mxu0
        %v3534 = vadd.f32 0.0, %v3533
        %v3535 = vpop.f32.mrb[0].mxu0
        %3536 = vmatprep.mubr.f32.mxu0 %v3412
        %3537 = vmatmul.mubr.f32.gmra.mrb[0].mxu0 %v3374
        %v3538 = vpop.f32.mrb[0].mxu0
        %v3539 = vadd.f32 0.0, %v3538
        %v3540 = vpop.f32.mrb[0].mxu0
        %3541 = vmatprep.mubr.f32.mxu0 %v3415
        %3542 = vmatmul.mubr.f32.gmra.mrb[0].mxu0 %v3376
        %v3543 = vpop.f32.mrb[0].mxu0
        %v3544 = vadd.f32 0.0, %v3543
        %v3545 = vpop.f32.mrb[0].mxu0
        %3546 = vmatprep.mubr.f32.mxu0 %v3418
        %3547 = vmatmul.mubr.f32.gmra.mrb[0].mxu0 %v3378
        %v3548 = vpop.f32.mrb[0].mxu0
        %v3549 = vadd.f32 0.0, %v3548
        %v3550 = vpop.f32.mrb[0].mxu0
        %3551 = vmatprep.mubr.f32.mxu0 %v3421
        %3552 = vmatmul.mubr.f32.gmra.mrb[0].mxu0 %v3380
        %v3553 = vpop.f32.mrb[0].mxu0
        %v3554 = vadd.f32 0.0, %v3553
        %v3555 = vpop.f32.mrb[0].mxu0
        %3556 = vmatprep.mubr.f32.mxu0 %v3424
        %3557 = vmatmul.mubr.f32.gmra.mrb[0].mxu0 %v3382
        %v3558 = vpop.f32.mrb[0].mxu0
        %v3559 = vadd.f32 0.0, %v3558
        %v3560 = vpop.f32.mrb[0].mxu0
        %3561 = vmatprep.mubr.f32.mxu0 %v3427
        %3562 = vmatmul.mubr.f32.gmra.mrb[0].mxu0 %v3384
        %v3563 = vpop.f32.mrb[0].mxu0
        %v3564 = vadd.f32 0.0, %v3563
        %v3565 = vpop.f32.mrb[0].mxu0
        %3566 = vmatprep.mubr.f32.mxu0 %v3430
        %3567 = vmatmul.mubr.f32.gmra.mrb[0].mxu0 %v3386
        %v3568 = vpop.f32.mrb[0].mxu0
        %v3569 = vadd.f32 0.0, %v3568
        %v3570 = vpop.f32.mrb[0].mxu0
        %3571 = vmatprep.mubr.f32.mxu0 %v3433
        %3572 = vmatmul.mubr.f32.gmra.mrb[0].mxu0 %v3388
        %v3573 = vpop.f32.mrb[0].mxu0
        %v3574 = vadd.f32 0.0, %v3573
        %v3575 = vpop.f32.mrb[0].mxu0
        %3576 = vmatprep.mubr.f32.mxu0 %v3436
        %3577 = vmatmul.mubr.f32.gmra.mrb[0].mxu0 %v3390
        %v3578 = vpop.f32.mrb[0].mxu0
        %v3579 = vadd.f32 0.0, %v3578
        %v3580 = vpop.f32.mrb[0].mxu0
        %3581 = vdwg.mxu0
        %3582 = vst [vmem:[%s205] sm:$0xff] %v3509
        %3583 = vst [vmem:[%s205 + $0x8] sm:$0xff] %v3514
        %3584 = vst [vmem:[%s205 + $0x10] sm:$0xff] %v3519
        %3585 = vst [vmem:[%s205 + $0x18] sm:$0xff] %v3524
        %3586 = vst [vmem:[%s205 + $0x20] sm:$0xff] %v3529
        %3587 = vst [vmem:[%s205 + $0x28] sm:$0xff] %v3534
        %3588 = vst [vmem:[%s205 + $0x30] sm:$0xff] %v3539
        %3589 = vst [vmem:[%s205 + $0x38] sm:$0xff] %v3544
        %3590 = vst [vmem:[%s205 + $0x40] sm:$0xff] %v3549
        %3591 = vst [vmem:[%s205 + $0x48] sm:$0xff] %v3554
        %3592 = vst [vmem:[%s205 + $0x50] sm:$0xff] %v3559
        %3593 = vst [vmem:[%s205 + $0x58] sm:$0xff] %v3564
        %3594 = vst [vmem:[%s205 + $0x60] sm:$0xff] %v3569
        %3595 = vst [vmem:[%s205 + $0x68] sm:$0xff] %v3574
        %3596 = vst [vmem:[%s205 + $0x70] sm:$0xff] %v3579
        %s3597 = sand.u32 %s116, 1
        %s3598 = scalar_lea.sflag [#allocation5], %s3597
        %s3599 = sand.u32 %s116, 1
        %s3600 = smul.addr %s3599, 120
        %s3601 = scalar_lea.vmem [#allocation6], %s3600
        // Predicated region
        $region41: #{tpu_custom_call.1} parent=35 // pred_check
          %p3602 = pneg %p126
        $region42: #{tpu_custom_call.1} parent=35 // pred_check_branch
          %3604 = sbr.rel (%p3602) target = $region44
        $region43: #{tpu_custom_call.1} parent=35 // pred_region
          %s3606 = ssub.s32 1920, 1920
          %3607 = vsyncadd %s3598, %s3606
          %s3608 = smul.addr %s19, 15
          %s3609 = smul.addr %s3608, 128
          %s3610 = scalar_lea.hbm %s4, %s3609
          %s3611 = sshll.u32 %s3601, 4
          %s3612 = int_to_ptr.vmem [resolvable:$true] %s3611
          %3617 = dma.vmem_to_hbm [thread:$0]  %s3612, 1920, %s3610, %s3598, 128, 128, 8
        $region44: #{tpu_custom_call.1} parent=35 // pred_fallthru
          _
      $region36: #{tpu_custom_call.1} parent=5 // pred_fallthru
        _
      %p3618 = scmp.le.s32.totalorder 2, %s14
      // Predicated region
      $region45: #{tpu_custom_call.1} parent=5 // pred_check
        %p3619 = pneg %p3618
      $region46: #{tpu_custom_call.1} parent=5 // pred_check_branch
        %3621 = sbr.rel (%p3619) target = $region48
      $region47: #{tpu_custom_call.1} parent=5 // pred_region
        %s3622 = ssub.s32 %s14, 2
        // Predicated region
        $region49: #{tpu_custom_call.1} parent=47 // pred_check
          %p3623 = pneg %p132
        $region50: #{tpu_custom_call.1} parent=47 // pred_check_branch
          %3625 = sbr.rel (%p3623) target = $region52
        $region51: #{tpu_custom_call.1} parent=47 // pred_region
          %s3626 = sand.u32 %s117, 1
          %s3627 = scalar_lea.sflag [#allocation5], %s3626
          %s3628 = sand.u32 %s117, 1
          %s3629 = smul.addr %s3628, 120
          %s3630 = scalar_lea.vmem [#allocation6], %s3629
          %3631 = dma.done %s3627, 1920
        $region52: #{tpu_custom_call.1} parent=47 // pred_fallthru
          _
      $region48: #{tpu_custom_call.1} parent=5 // pred_fallthru
        _
    $region6: #{tpu_custom_call.1} parent=1 // loop_footer
      %s18 = sadd.s32 1, %s14
    $region7: #{tpu_custom_call.1} parent=1 // loop_footer_branch
      %13 = sbr.rel target = $region3
    $region8: #{tpu_custom_call.1} parent=1 // loop_exit
      _
    %3632 = vsyncpa [#allocation4], 1
    %s3633 = scalar_lea.sflag [#allocation4], 1
    %3634 = vsyncpa %s3633, 1
    %3635 = vsyncpa [#allocation5], 1
    %s3636 = scalar_lea.sflag [#allocation5], 1
    %3637 = vsyncpa %s3636, 1

</llo_original>
